<compile_context>
chip_gen: v7x
topology: tpu7x:2x2x1
jax: 0.10.0
libtpu: 0.0.40
codegen_flags: <defaults>
</compile_context>

<pallas_src>
import functools

import jax
import jax.numpy as jnp
from jax.experimental import pallas as pl
from jax.experimental.pallas import tpu as pltpu

BN_EPS = 1e-5
LANE = 128


# ----------------------------------------------------------------------------
# Kernel
# ----------------------------------------------------------------------------
def _fc_bn_tanh(h, wb_ref, g_ref, be_ref, eps_ref):
    """Linear (bias-free, unscaled int8-quantized weights already upcast to bf16)
    -> BatchNorm1d with batch stats (scale exactly cancelled, eps made exact via
    per-channel eps/s^2) -> tanh.  h is f32; LHS cast to bf16 at the dot."""
    z = jnp.dot(h.astype(jnp.bfloat16), wb_ref[...],
                preferred_element_type=jnp.float32)                # (B, C) f32
    mu = jnp.mean(z, axis=0, keepdims=True)                        # (1, C)
    # One-pass variance; fine here because |mean| << std for these statistics.
    var = jnp.maximum(jnp.mean(z * z, axis=0, keepdims=True) - mu * mu, 0.0)
    zn = (z - mu) * jax.lax.rsqrt(var + eps_ref[...])
    return jnp.tanh(zn * g_ref[...] + be_ref[...])                 # f32


def f2s_kernel(x_ref,
               w1_ref, g1_ref, b1_ref, e1_ref,
               w2_ref, g2_ref, b2_ref, e2_ref,
               w3_ref, g3_ref, b3_ref, e3_ref,
               o_ref,
               w1b, w2b, w3b):
    # Upcast the int8 weights to bf16 once (first grid step only); the bf16
    # copies live in VMEM scratch and are reused for every subsequent chunk.
    # (Grid axis is "arbitrary"/sequential, so step 0 always runs first.)
    @pl.when(pl.program_id(0) == 0)
    def _():
        w1b[...] = w1_ref[...].astype(jnp.bfloat16)
        w2b[...] = w2_ref[...].astype(jnp.bfloat16)
        w3b[...] = w3_ref[...].astype(jnp.bfloat16)

    h = x_ref[0]                                   # (B, F) f32 for this chunk
    h = _fc_bn_tanh(h, w1b, g1_ref, b1_ref, e1_ref)   # (B, 768)
    h = _fc_bn_tanh(h, w2b, g2_ref, b2_ref, e2_ref)   # (B, 512)
    h = _fc_bn_tanh(h, w3b, g3_ref, b3_ref, e3_ref)   # (B, 384)  (padded from 300)
    o_ref[0] = h.astype(o_ref.dtype)


# ----------------------------------------------------------------------------
# Parameter preparation (one time, outside jit)
# ----------------------------------------------------------------------------
def prepare_params(params):
    """One-time parameter preparation:
       - transpose Linear weights (out,in) -> (in,out),
       - drop Linear biases (exactly cancelled by BN mean subtraction),
       - per-output-channel symmetric int8 quantization (scale cancelled by BN),
       - per-channel eps/s^2 row so BN eps semantics stay exact,
       - BN gamma/beta as (1,C) f32 rows,
       - zero-pad layer-3 channels to a lane multiple (300 -> 384)."""
    out_dim = params["w3"].shape[0]
    padded = ((out_dim + LANE - 1) // LANE) * LANE
    pad = padded - out_dim
    prepped = {}
    for i in (1, 2, 3):
        w = params[f"w{i}"].T.astype(jnp.float32)            # (in, out)
        g = params[f"gamma{i}"].reshape(1, -1).astype(jnp.float32)
        b = params[f"beta{i}"].reshape(1, -1).astype(jnp.float32)
        if i == 3 and pad:
            w = jnp.pad(w, ((0, 0), (0, pad)))
            g = jnp.pad(g, ((0, 0), (0, pad)))
            b = jnp.pad(b, ((0, 0), (0, pad)))
        amax = jnp.max(jnp.abs(w), axis=0, keepdims=True)     # (1, out)
        s = jnp.where(amax > 0.0, amax / 127.0, 1.0)          # guard padded cols
        wq = jnp.clip(jnp.round(w / s), -127.0, 127.0).astype(jnp.int8)
        prepped[f"w{i}"] = wq                                  # int8, (in, out)
        prepped[f"gamma{i}"] = g
        prepped[f"beta{i}"] = b
        prepped[f"eps{i}"] = (BN_EPS / (s * s)).astype(jnp.float32)
    return prepped, out_dim


# ----------------------------------------------------------------------------
# pallas_call wrapper
# ----------------------------------------------------------------------------
def _vmem_limit_bytes(n_chunks, B, F, d1, d2, d3):
    wq = F * d1 + d1 * d2 + d2 * d3            # int8 weights (HBM->VMEM, x2 bufs)
    wb = 2 * wq                                # bf16 scratch copies
    par = 2 * 3 * 3 * (d1 + d2 + d3) * 4       # gamma/beta/eps, double-buffered
    io = 2 * B * F * 4 + 2 * B * d3 * 4        # double-buffered x / out blocks
    act = 3 * B * max(F, d1) * 4               # rough in-kernel temp slab
    est = 2 * (2 * wq + wb + par + io + act)   # 2x headroom for compiler temps
    return int(min(64 * 1024 * 1024, max(8 * 1024 * 1024, est)))


def _f2s_pallas(x3d, prepped):
    """x3d: (N, B, F) f32 -- N independent micro-batches, each with its own BN
    stats (identical to N separate forward calls).  Returns (N, B, 384) f32."""
    N, B, F = x3d.shape
    d1 = prepped["w1"].shape[1]
    d2 = prepped["w2"].shape[1]
    d3 = prepped["w3"].shape[1]

    args = [x3d]
    in_specs = [pl.BlockSpec((1, B, F), lambda i: (i, 0, 0))]
    for k in (1, 2, 3):
        for name in ("w", "gamma", "beta", "eps"):
            a = prepped[f"{name}{k}"]
            # Constant block index => DMA'd into VMEM once, resident across chunks.
            in_specs.append(pl.BlockSpec(a.shape, lambda i: (0, 0)))
            args.append(a)

    out_specs = pl.BlockSpec((1, B, d3), lambda i: (i, 0, 0))
    scratch_shapes = [
        pltpu.VMEM((F, d1), jnp.bfloat16),
        pltpu.VMEM((d1, d2), jnp.bfloat16),
        pltpu.VMEM((d2, d3), jnp.bfloat16),
    ]

    return pl.pallas_call(
        f2s_kernel,
        out_shape=jax.ShapeDtypeStruct((N, B, d3), jnp.float32),
        grid_spec=pltpu.PrefetchScalarGridSpec(
            num_scalar_prefetch=0,
            grid=(N,),
            in_specs=in_specs,
            out_specs=out_specs,
            scratch_shapes=scratch_shapes,
        ),
        compiler_params=pltpu.CompilerParams(
            # "arbitrary": keep the chunk loop sequential so (a) the step-0 weight
            # upcast is valid and (b) weights are not duplicated into both cores.
            dimension_semantics=("arbitrary",),
            vmem_limit_bytes=_vmem_limit_bytes(N, B, F, d1, d2, d3),
        ),
    )(*args)


@functools.partial(jax.jit, static_argnames=("out_dim", "return_padded"))
def f2s_forward(x, prepped, out_dim, return_padded=False):
    """Single forward call: x (B, feature_dim) f32 -> (B, out_dim) f32."""
    out = _f2s_pallas(x[None], prepped)[0]
    return out if return_padded else out[:, :out_dim]


@functools.partial(jax.jit, static_argnames=("out_dim", "return_padded"))
def f2s_forward_stacked(x, prepped, out_dim, return_padded=False):
    """Stacked micro-batches: x (N, B, feature_dim).  Each chunk gets its own BN
    stats (== N independent forward calls); weights are DMA'd into VMEM once and
    amortized across all N chunks."""
    out = _f2s_pallas(x, prepped)
    return out if return_padded else out[:, :, :out_dim]


# ----------------------------------------------------------------------------
# Reference implementations & init
# ----------------------------------------------------------------------------
def init_params(key, feature_dim=1024):
    """Deterministic PyTorch-style init (uniform(-1/sqrt(fan_in), 1/sqrt(fan_in)))."""
    dims = [(feature_dim, 768), (768, 512), (512, 300)]
    params = {}
    for i, (fan_in, fan_out) in enumerate(dims, start=1):
        key, kw, kb = jax.random.split(key, 3)
        bound = 1.0 / jnp.sqrt(float(fan_in))
        params[f"w{i}"] = jax.random.uniform(
            kw, (fan_out, fan_in), jnp.float32, -bound, bound)   # PyTorch layout (out, in)
        params[f"b{i}"] = jax.random.uniform(
            kb, (fan_out,), jnp.float32, -bound, bound)
        params[f"gamma{i}"] = jnp.ones((fan_out,), jnp.float32)
        params[f"beta{i}"] = jnp.zeros((fan_out,), jnp.float32)
    return params


def f2s_reference(x, params):
    """Pure-JAX f32 reference of the PyTorch forward (training-mode BatchNorm1d)."""
    h = x
    for i in (1, 2, 3):
        z = jnp.dot(h, params[f"w{i}"].T, precision="highest") + params[f"b{i}"]
        mu = jnp.mean(z, axis=0)
        var = jnp.mean((z - mu) ** 2, axis=0)
        zn = (z - mu) / jnp.sqrt(var + BN_EPS)
        h = jnp.tanh(zn * params[f"gamma{i}"] + params[f"beta{i}"])
    return h


def f2s_reference_matched(x, prepped, out_dim):
    """Pure-JAX replica of the exact kernel numerics (unscaled int8 weights upcast
    to bf16, no bias, per-channel eps/s^2)."""
    h = x
    for i in (1, 2, 3):
        w = prepped[f"w{i}"].astype(jnp.bfloat16)
        z = jnp.dot(h.astype(jnp.bfloat16), w, preferred_element_type=jnp.float32)
        mu = jnp.mean(z, axis=0, keepdims=True)
        var = jnp.maximum(jnp.mean(z * z, axis=0, keepdims=True) - mu * mu, 0.0)
        zn = (z - mu) * jax.lax.rsqrt(var + prepped[f"eps{i}"])
        h = jnp.tanh(zn * prepped[f"gamma{i}"] + prepped[f"beta{i}"])
    return h[:, :out_dim]


# ----------------------------------------------------------------------------
# Demo / checks
# ----------------------------------------------------------------------------
if __name__ == "__main__":
    key = jax.random.PRNGKey(0)
    k_params, k_x = jax.random.split(key)

    feature_dim = 1024
    batch = 8
    n_chunks = 4

    params = init_params(k_params, feature_dim)
    xs = jax.random.normal(k_x, (n_chunks, batch, feature_dim), jnp.float32)
    prepped, out_dim = prepare_params(params)

    # --- single-chunk forward (one PyTorch F2S forward call) -----------------
    x0 = xs[0]
    out0 = jax.block_until_ready(f2s_forward(x0, prepped, out_dim))
    assert out0.shape == (batch, out_dim), out0.shape

    # Tight check against a pure-JAX replica of the kernel's own numerics.
    ref_matched = f2s_reference_matched(x0, prepped, out_dim)
    err_matched = float(jnp.max(jnp.abs(out0 - ref_matched)))
    assert err_matched < 2e-3, err_matched

    # Loose check against the full-f32 PyTorch-semantics forward.  The difference
    # is dominated by int8 weight quantization + bf16 activation streaming
    # (expected max-abs error a few 1e-2 at these shapes).
    ref = f2s_reference(x0, params)
    err = float(jnp.max(jnp.abs(out0 - ref)))
    assert err < 0.25, err

    # --- stacked micro-batches: weights DMA'd once, BN stats per chunk -------
    outs = jax.block_until_ready(f2s_forward_stacked(xs, prepped, out_dim))
    assert outs.shape == (n_chunks, batch, out_dim), outs.shape
    # Chunk 0 of the stacked run must match the standalone call on the same data.
    err_stack = float(jnp.max(jnp.abs(outs[0] - out0)))
    assert err_stack < 1e-5, err_stack

    print("KERNEL_OK")
</pallas_src>

<mosaic_0001>
module attributes {stable_mosaic.version = 11 : i64} {
  func.func @f2s_kernel(%arg0: i32, %arg1: memref<1x8x1024xf32, #tpu.memory_space<vmem>>, %arg2: memref<1024x768xi8, #tpu.memory_space<vmem>>, %arg3: memref<1x768xf32, #tpu.memory_space<vmem>>, %arg4: memref<1x768xf32, #tpu.memory_space<vmem>>, %arg5: memref<1x768xf32, #tpu.memory_space<vmem>>, %arg6: memref<768x512xi8, #tpu.memory_space<vmem>>, %arg7: memref<1x512xf32, #tpu.memory_space<vmem>>, %arg8: memref<1x512xf32, #tpu.memory_space<vmem>>, %arg9: memref<1x512xf32, #tpu.memory_space<vmem>>, %arg10: memref<512x384xi8, #tpu.memory_space<vmem>>, %arg11: memref<1x384xf32, #tpu.memory_space<vmem>>, %arg12: memref<1x384xf32, #tpu.memory_space<vmem>>, %arg13: memref<1x384xf32, #tpu.memory_space<vmem>>, %arg14: memref<1x8x384xf32, #tpu.memory_space<vmem>>, %arg15: memref<1024x768xbf16, #tpu.memory_space<vmem>>, %arg16: memref<768x512xbf16, #tpu.memory_space<vmem>>, %arg17: memref<512x384xbf16, #tpu.memory_space<vmem>>) attributes {dimension_semantics = [#tpu.dimension_semantics<arbitrary>], iteration_bounds = array<i64: 1>, scalar_prefetch = 0 : i64, scratch_operands = 3 : i64, tpu.core_type = #tpu.core_type<tc>, window_params = [{transform_indices = @transform_0, window_bounds = array<i64: 1, 8, 1024>}, {pipeline_mode = #tpu.pipeline_mode<synchronous>, transform_indices = @transform_1, window_bounds = array<i64: 1024, 768>}, {pipeline_mode = #tpu.pipeline_mode<synchronous>, transform_indices = @transform_2, window_bounds = array<i64: 1, 768>}, {pipeline_mode = #tpu.pipeline_mode<synchronous>, transform_indices = @transform_3, window_bounds = array<i64: 1, 768>}, {pipeline_mode = #tpu.pipeline_mode<synchronous>, transform_indices = @transform_4, window_bounds = array<i64: 1, 768>}, {pipeline_mode = #tpu.pipeline_mode<synchronous>, transform_indices = @transform_5, window_bounds = array<i64: 768, 512>}, {pipeline_mode = #tpu.pipeline_mode<synchronous>, transform_indices = @transform_6, window_bounds = array<i64: 1, 512>}, {pipeline_mode = #tpu.pipeline_mode<synchronous>, transform_indices = @transform_7, window_bounds = array<i64: 1, 512>}, {pipeline_mode = #tpu.pipeline_mode<synchronous>, transform_indices = @transform_8, window_bounds = array<i64: 1, 512>}, {pipeline_mode = #tpu.pipeline_mode<synchronous>, transform_indices = @transform_9, window_bounds = array<i64: 512, 384>}, {pipeline_mode = #tpu.pipeline_mode<synchronous>, transform_indices = @transform_10, window_bounds = array<i64: 1, 384>}, {pipeline_mode = #tpu.pipeline_mode<synchronous>, transform_indices = @transform_11, window_bounds = array<i64: 1, 384>}, {pipeline_mode = #tpu.pipeline_mode<synchronous>, transform_indices = @transform_12, window_bounds = array<i64: 1, 384>}, {transform_indices = @transform_13, window_bounds = array<i64: 1, 8, 384>}]} {
    %c0_i32 = arith.constant 0 : i32
    %0 = arith.cmpi eq, %arg0, %c0_i32 : i32
    %1 = arith.extui %0 : i1 to i32
    %c0_i32_0 = arith.constant 0 : i32
    %2 = arith.cmpi ne, %1, %c0_i32_0 : i32
    scf.if %2 {
      %c0_47 = arith.constant 0 : index
      %c0_48 = arith.constant 0 : index
      %98 = vector.load %arg2[%c0_47, %c0_48] : memref<1024x768xi8, #tpu.memory_space<vmem>>, vector<1024x768xi8>
      %99 = arith.sitofp %98 : vector<1024x768xi8> to vector<1024x768xbf16>
      %c0_49 = arith.constant 0 : index
      %c0_50 = arith.constant 0 : index
      %100 = vector.load %arg15[%c0_49, %c0_50] : memref<1024x768xbf16, #tpu.memory_space<vmem>>, vector<1024x768xbf16>
      tpu.vector_store %arg15[%c0_49, %c0_50], %99 {strides = array<i32>} : memref<1024x768xbf16, #tpu.memory_space<vmem>>, vector<1024x768xbf16>,
      %c0_51 = arith.constant 0 : index
      %c0_52 = arith.constant 0 : index
      %101 = vector.load %arg6[%c0_51, %c0_52] : memref<768x512xi8, #tpu.memory_space<vmem>>, vector<768x512xi8>
      %102 = arith.sitofp %101 : vector<768x512xi8> to vector<768x512xbf16>
      %c0_53 = arith.constant 0 : index
      %c0_54 = arith.constant 0 : index
      %103 = vector.load %arg16[%c0_53, %c0_54] : memref<768x512xbf16, #tpu.memory_space<vmem>>, vector<768x512xbf16>
      tpu.vector_store %arg16[%c0_53, %c0_54], %102 {strides = array<i32>} : memref<768x512xbf16, #tpu.memory_space<vmem>>, vector<768x512xbf16>,
      %c0_55 = arith.constant 0 : index
      %c0_56 = arith.constant 0 : index
      %104 = vector.load %arg10[%c0_55, %c0_56] : memref<512x384xi8, #tpu.memory_space<vmem>>, vector<512x384xi8>
      %105 = arith.sitofp %104 : vector<512x384xi8> to vector<512x384xbf16>
      %c0_57 = arith.constant 0 : index
      %c0_58 = arith.constant 0 : index
      %106 = vector.load %arg17[%c0_57, %c0_58] : memref<512x384xbf16, #tpu.memory_space<vmem>>, vector<512x384xbf16>
      tpu.vector_store %arg17[%c0_57, %c0_58], %105 {strides = array<i32>} : memref<512x384xbf16, #tpu.memory_space<vmem>>, vector<512x384xbf16>,
    } else {
    }
    %c0 = arith.constant 0 : index
    %c0_1 = arith.constant 0 : index
    %c0_2 = arith.constant 0 : index
    %3 = vector.load %arg1[%c0, %c0_1, %c0_2] : memref<1x8x1024xf32, #tpu.memory_space<vmem>>, vector<1x8x1024xf32>
    %4 = vector.shape_cast %3 : vector<1x8x1024xf32> to vector<8x1024xf32>
    %5 = arith.truncf %4 : vector<8x1024xf32> to vector<8x1024xbf16>
    %c0_3 = arith.constant 0 : index
    %c0_4 = arith.constant 0 : index
    %6 = vector.load %arg15[%c0_3, %c0_4] : memref<1024x768xbf16, #tpu.memory_space<vmem>>, vector<1024x768xbf16>
    %cst = arith.constant dense<0.000000e+00> : vector<8x768xf32>
    %7 = tpu.matmul %5, %6, %cst {dimension_numbers = #tpu.dot_dimension_numbers<[1], [0], [0], [1], [0, 0, 1, 1], [], []>} : vector<8x1024xbf16>, vector<1024x768xbf16>, vector<8x768xf32> -> vector<8x768xf32>
    %cst_5 = arith.constant dense<0.000000e+00> : vector<768xf32>
    %8 = vector.multi_reduction <add>, %7, %cst_5 [0] : vector<8x768xf32> to vector<768xf32>
    %9 = vector.shape_cast %8 : vector<768xf32> to vector<1x768xf32>
    %cst_6 = arith.constant 8.000000e+00 : f32
    %10 = vector.broadcast %cst_6 : f32 to vector<1x768xf32>
    %11 = arith.divf %9, %10 : vector<1x768xf32>
    %12 = arith.mulf %7, %7 : vector<8x768xf32>
    %cst_7 = arith.constant dense<0.000000e+00> : vector<768xf32>
    %13 = vector.multi_reduction <add>, %12, %cst_7 [0] : vector<8x768xf32> to vector<768xf32>
    %14 = vector.shape_cast %13 : vector<768xf32> to vector<1x768xf32>
    %cst_8 = arith.constant 8.000000e+00 : f32
    %15 = vector.broadcast %cst_8 : f32 to vector<1x768xf32>
    %16 = arith.divf %14, %15 : vector<1x768xf32>
    %17 = arith.mulf %11, %11 : vector<1x768xf32>
    %18 = arith.subf %16, %17 : vector<1x768xf32>
    %cst_9 = arith.constant 0.000000e+00 : f32
    %19 = vector.broadcast %cst_9 : f32 to vector<1x768xf32>
    %20 = arith.maximumf %18, %19 : vector<1x768xf32>
    %21 = vector.broadcast %11 : vector<1x768xf32> to vector<8x768xf32>
    %22 = arith.subf %7, %21 : vector<8x768xf32>
    %c0_10 = arith.constant 0 : index
    %c0_11 = arith.constant 0 : index
    %23 = vector.load %arg5[%c0_10, %c0_11] : memref<1x768xf32, #tpu.memory_space<vmem>>, vector<1x768xf32>
    %24 = arith.addf %20, %23 : vector<1x768xf32>
    %25 = math.rsqrt %24 : vector<1x768xf32>
    %26 = vector.broadcast %25 : vector<1x768xf32> to vector<8x768xf32>
    %27 = arith.mulf %22, %26 : vector<8x768xf32>
    %c0_12 = arith.constant 0 : index
    %c0_13 = arith.constant 0 : index
    %28 = vector.load %arg3[%c0_12, %c0_13] : memref<1x768xf32, #tpu.memory_space<vmem>>, vector<1x768xf32>
    %29 = vector.broadcast %28 : vector<1x768xf32> to vector<8x768xf32>
    %30 = arith.mulf %27, %29 : vector<8x768xf32>
    %c0_14 = arith.constant 0 : index
    %c0_15 = arith.constant 0 : index
    %31 = vector.load %arg4[%c0_14, %c0_15] : memref<1x768xf32, #tpu.memory_space<vmem>>, vector<1x768xf32>
    %32 = vector.broadcast %31 : vector<1x768xf32> to vector<8x768xf32>
    %33 = arith.addf %30, %32 : vector<8x768xf32>
    %34 = math.tanh %33 : vector<8x768xf32>
    %35 = arith.truncf %34 : vector<8x768xf32> to vector<8x768xbf16>
    %c0_16 = arith.constant 0 : index
    %c0_17 = arith.constant 0 : index
    %36 = vector.load %arg16[%c0_16, %c0_17] : memref<768x512xbf16, #tpu.memory_space<vmem>>, vector<768x512xbf16>
    %cst_18 = arith.constant dense<0.000000e+00> : vector<8x512xf32>
    %37 = tpu.matmul %35, %36, %cst_18 {dimension_numbers = #tpu.dot_dimension_numbers<[1], [0], [0], [1], [0, 0, 1, 1], [], []>} : vector<8x768xbf16>, vector<768x512xbf16>, vector<8x512xf32> -> vector<8x512xf32>
    %cst_19 = arith.constant dense<0.000000e+00> : vector<512xf32>
    %38 = vector.multi_reduction <add>, %37, %cst_19 [0] : vector<8x512xf32> to vector<512xf32>
    %39 = vector.shape_cast %38 : vector<512xf32> to vector<1x512xf32>
    %cst_20 = arith.constant 8.000000e+00 : f32
    %40 = vector.broadcast %cst_20 : f32 to vector<1x512xf32>
    %41 = arith.divf %39, %40 : vector<1x512xf32>
    %42 = arith.mulf %37, %37 : vector<8x512xf32>
    %cst_21 = arith.constant dense<0.000000e+00> : vector<512xf32>
    %43 = vector.multi_reduction <add>, %42, %cst_21 [0] : vector<8x512xf32> to vector<512xf32>
    %44 = vector.shape_cast %43 : vector<512xf32> to vector<1x512xf32>
    %cst_22 = arith.constant 8.000000e+00 : f32
    %45 = vector.broadcast %cst_22 : f32 to vector<1x512xf32>
    %46 = arith.divf %44, %45 : vector<1x512xf32>
    %47 = arith.mulf %41, %41 : vector<1x512xf32>
    %48 = arith.subf %46, %47 : vector<1x512xf32>
    %cst_23 = arith.constant 0.000000e+00 : f32
    %49 = vector.broadcast %cst_23 : f32 to vector<1x512xf32>
    %50 = arith.maximumf %48, %49 : vector<1x512xf32>
    %51 = vector.broadcast %41 : vector<1x512xf32> to vector<8x512xf32>
    %52 = arith.subf %37, %51 : vector<8x512xf32>
    %c0_24 = arith.constant 0 : index
    %c0_25 = arith.constant 0 : index
    %53 = vector.load %arg9[%c0_24, %c0_25] : memref<1x512xf32, #tpu.memory_space<vmem>>, vector<1x512xf32>
    %54 = arith.addf %50, %53 : vector<1x512xf32>
    %55 = math.rsqrt %54 : vector<1x512xf32>
    %56 = vector.broadcast %55 : vector<1x512xf32> to vector<8x512xf32>
    %57 = arith.mulf %52, %56 : vector<8x512xf32>
    %c0_26 = arith.constant 0 : index
    %c0_27 = arith.constant 0 : index
    %58 = vector.load %arg7[%c0_26, %c0_27] : memref<1x512xf32, #tpu.memory_space<vmem>>, vector<1x512xf32>
    %59 = vector.broadcast %58 : vector<1x512xf32> to vector<8x512xf32>
    %60 = arith.mulf %57, %59 : vector<8x512xf32>
    %c0_28 = arith.constant 0 : index
    %c0_29 = arith.constant 0 : index
    %61 = vector.load %arg8[%c0_28, %c0_29] : memref<1x512xf32, #tpu.memory_space<vmem>>, vector<1x512xf32>
    %62 = vector.broadcast %61 : vector<1x512xf32> to vector<8x512xf32>
    %63 = arith.addf %60, %62 : vector<8x512xf32>
    %64 = math.tanh %63 : vector<8x512xf32>
    %65 = arith.truncf %64 : vector<8x512xf32> to vector<8x512xbf16>
    %c0_30 = arith.constant 0 : index
    %c0_31 = arith.constant 0 : index
    %66 = vector.load %arg17[%c0_30, %c0_31] : memref<512x384xbf16, #tpu.memory_space<vmem>>, vector<512x384xbf16>
    %cst_32 = arith.constant dense<0.000000e+00> : vector<8x384xf32>
    %67 = tpu.matmul %65, %66, %cst_32 {dimension_numbers = #tpu.dot_dimension_numbers<[1], [0], [0], [1], [0, 0, 1, 1], [], []>} : vector<8x512xbf16>, vector<512x384xbf16>, vector<8x384xf32> -> vector<8x384xf32>
    %cst_33 = arith.constant dense<0.000000e+00> : vector<384xf32>
    %68 = vector.multi_reduction <add>, %67, %cst_33 [0] : vector<8x384xf32> to vector<384xf32>
    %69 = vector.shape_cast %68 : vector<384xf32> to vector<1x384xf32>
    %cst_34 = arith.constant 8.000000e+00 : f32
    %70 = vector.broadcast %cst_34 : f32 to vector<1x384xf32>
    %71 = arith.divf %69, %70 : vector<1x384xf32>
    %72 = arith.mulf %67, %67 : vector<8x384xf32>
    %cst_35 = arith.constant dense<0.000000e+00> : vector<384xf32>
    %73 = vector.multi_reduction <add>, %72, %cst_35 [0] : vector<8x384xf32> to vector<384xf32>
    %74 = vector.shape_cast %73 : vector<384xf32> to vector<1x384xf32>
    %cst_36 = arith.constant 8.000000e+00 : f32
    %75 = vector.broadcast %cst_36 : f32 to vector<1x384xf32>
    %76 = arith.divf %74, %75 : vector<1x384xf32>
    %77 = arith.mulf %71, %71 : vector<1x384xf32>
    %78 = arith.subf %76, %77 : vector<1x384xf32>
    %cst_37 = arith.constant 0.000000e+00 : f32
    %79 = vector.broadcast %cst_37 : f32 to vector<1x384xf32>
    %80 = arith.maximumf %78, %79 : vector<1x384xf32>
    %81 = vector.broadcast %71 : vector<1x384xf32> to vector<8x384xf32>
    %82 = arith.subf %67, %81 : vector<8x384xf32>
    %c0_38 = arith.constant 0 : index
    %c0_39 = arith.constant 0 : index
    %83 = vector.load %arg13[%c0_38, %c0_39] : memref<1x384xf32, #tpu.memory_space<vmem>>, vector<1x384xf32>
    %84 = arith.addf %80, %83 : vector<1x384xf32>
    %85 = math.rsqrt %84 : vector<1x384xf32>
    %86 = vector.broadcast %85 : vector<1x384xf32> to vector<8x384xf32>
    %87 = arith.mulf %82, %86 : vector<8x384xf32>
    %c0_40 = arith.constant 0 : index
    %c0_41 = arith.constant 0 : index
    %88 = vector.load %arg11[%c0_40, %c0_41] : memref<1x384xf32, #tpu.memory_space<vmem>>, vector<1x384xf32>
    %89 = vector.broadcast %88 : vector<1x384xf32> to vector<8x384xf32>
    %90 = arith.mulf %87, %89 : vector<8x384xf32>
    %c0_42 = arith.constant 0 : index
    %c0_43 = arith.constant 0 : index
    %91 = vector.load %arg12[%c0_42, %c0_43] : memref<1x384xf32, #tpu.memory_space<vmem>>, vector<1x384xf32>
    %92 = vector.broadcast %91 : vector<1x384xf32> to vector<8x384xf32>
    %93 = arith.addf %90, %92 : vector<8x384xf32>
    %94 = math.tanh %93 : vector<8x384xf32>
    %c0_44 = arith.constant 0 : index
    %c0_45 = arith.constant 0 : index
    %c0_46 = arith.constant 0 : index
    %95 = vector.load %arg14[%c0_44, %c0_45, %c0_46] : memref<1x8x384xf32, #tpu.memory_space<vmem>>, vector<1x8x384xf32>
    %96 = vector.shape_cast %95 : vector<1x8x384xf32> to vector<8x384xf32>
    %97 = vector.shape_cast %94 : vector<8x384xf32> to vector<1x8x384xf32>
    tpu.vector_store %arg14[%c0_44, %c0_45, %c0_46], %97 {strides = array<i32>} : memref<1x8x384xf32, #tpu.memory_space<vmem>>, vector<1x8x384xf32>,
    return
  }
  func.func @transform_0(%arg0: i32) -> (i32, i32, i32) {
    %c0_i32 = arith.constant 0 : i32
    %c0_i32_0 = arith.constant 0 : i32
    %c0_i32_1 = arith.constant 0 : i32
    return %arg0, %c0_i32, %c0_i32_0 : i32, i32, i32
  }
  func.func @transform_1(%arg0: i32) -> (i32, i32) {
    %c0_i32 = arith.constant 0 : i32
    %c0_i32_0 = arith.constant 0 : i32
    %c0_i32_1 = arith.constant 0 : i32
    return %c0_i32, %c0_i32_0 : i32, i32
  }
  func.func @transform_2(%arg0: i32) -> (i32, i32) {
    %c0_i32 = arith.constant 0 : i32
    %c0_i32_0 = arith.constant 0 : i32
    %c0_i32_1 = arith.constant 0 : i32
    return %c0_i32, %c0_i32_0 : i32, i32
  }
  func.func @transform_3(%arg0: i32) -> (i32, i32) {
    %c0_i32 = arith.constant 0 : i32
    %c0_i32_0 = arith.constant 0 : i32
    %c0_i32_1 = arith.constant 0 : i32
    return %c0_i32, %c0_i32_0 : i32, i32
  }
  func.func @transform_4(%arg0: i32) -> (i32, i32) {
    %c0_i32 = arith.constant 0 : i32
    %c0_i32_0 = arith.constant 0 : i32
    %c0_i32_1 = arith.constant 0 : i32
    return %c0_i32, %c0_i32_0 : i32, i32
  }
  func.func @transform_5(%arg0: i32) -> (i32, i32) {
    %c0_i32 = arith.constant 0 : i32
    %c0_i32_0 = arith.constant 0 : i32
    %c0_i32_1 = arith.constant 0 : i32
    return %c0_i32, %c0_i32_0 : i32, i32
  }
  func.func @transform_6(%arg0: i32) -> (i32, i32) {
    %c0_i32 = arith.constant 0 : i32
    %c0_i32_0 = arith.constant 0 : i32
    %c0_i32_1 = arith.constant 0 : i32
    return %c0_i32, %c0_i32_0 : i32, i32
  }
  func.func @transform_7(%arg0: i32) -> (i32, i32) {
    %c0_i32 = arith.constant 0 : i32
    %c0_i32_0 = arith.constant 0 : i32
    %c0_i32_1 = arith.constant 0 : i32
    return %c0_i32, %c0_i32_0 : i32, i32
  }
  func.func @transform_8(%arg0: i32) -> (i32, i32) {
    %c0_i32 = arith.constant 0 : i32
    %c0_i32_0 = arith.constant 0 : i32
    %c0_i32_1 = arith.constant 0 : i32
    return %c0_i32, %c0_i32_0 : i32, i32
  }
  func.func @transform_9(%arg0: i32) -> (i32, i32) {
    %c0_i32 = arith.constant 0 : i32
    %c0_i32_0 = arith.constant 0 : i32
    %c0_i32_1 = arith.constant 0 : i32
    return %c0_i32, %c0_i32_0 : i32, i32
  }
  func.func @transform_10(%arg0: i32) -> (i32, i32) {
    %c0_i32 = arith.constant 0 : i32
    %c0_i32_0 = arith.constant 0 : i32
    %c0_i32_1 = arith.constant 0 : i32
    return %c0_i32, %c0_i32_0 : i32, i32
  }
  func.func @transform_11(%arg0: i32) -> (i32, i32) {
    %c0_i32 = arith.constant 0 : i32
    %c0_i32_0 = arith.constant 0 : i32
    %c0_i32_1 = arith.constant 0 : i32
    return %c0_i32, %c0_i32_0 : i32, i32
  }
  func.func @transform_12(%arg0: i32) -> (i32, i32) {
    %c0_i32 = arith.constant 0 : i32
    %c0_i32_0 = arith.constant 0 : i32
    %c0_i32_1 = arith.constant 0 : i32
    return %c0_i32, %c0_i32_0 : i32, i32
  }
  func.func @transform_13(%arg0: i32) -> (i32, i32, i32) {
    %c0_i32 = arith.constant 0 : i32
    %c0_i32_0 = arith.constant 0 : i32
    %c0_i32_1 = arith.constant 0 : i32
    return %arg0, %c0_i32, %c0_i32_0 : i32, i32, i32
  }
}

</mosaic_0001>

<llo_original>
// kernel: f2s_forward.1
$region0: #{f2s_forward.1}
  #allocation0 [shape = 'u32[]', space=smem, size = 0x4, offset = 0x4, fixed_abs, tag = 'smem constant byte address 0x4 - core index']
  #allocation1 [shape = 'u32[144,128]{1,0:T(1,128)}', space=vmem, size = 0x12000, scoped, tag = 'internal scratch']
  #allocation2 [shape = 'bf16[1024,768]{1,0:T(16,128)(2,1)}', space=vmem, size = 0x180000, scoped, tag = 'scratch operand']
  #allocation3 [shape = 'bf16[768,512]{1,0:T(16,128)(2,1)}', space=vmem, size = 0xc0000, scoped, tag = 'scratch operand']
  #allocation4 [shape = 'bf16[512,384]{1,0:T(16,128)(2,1)}', space=vmem, size = 0x60000, scoped, tag = 'scratch operand']
  %s0 = inlined_call_operand.hbm [shape: f32[1,8,1024], index: 0, kind: input, shape index: {}]
  %s1 = inlined_call_operand.hbm [shape: s8[1024,768], index: 1, kind: input, shape index: {}]
  %s2 = inlined_call_operand.vmem [shape: f32[1,768], index: 2, kind: input, shape index: {}]
  %s3 = inlined_call_operand.hbm [shape: f32[1,768], index: 3, kind: input, shape index: {}]
  %s4 = inlined_call_operand.vmem [shape: f32[1,768], index: 4, kind: input, shape index: {}]
  %s5 = inlined_call_operand.hbm [shape: s8[768,512], index: 5, kind: input, shape index: {}]
  %s6 = inlined_call_operand.vmem [shape: f32[1,512], index: 6, kind: input, shape index: {}]
  %s7 = inlined_call_operand.hbm [shape: f32[1,512], index: 7, kind: input, shape index: {}]
  %s8 = inlined_call_operand.vmem [shape: f32[1,512], index: 8, kind: input, shape index: {}]
  %s9 = inlined_call_operand.hbm [shape: s8[512,384], index: 9, kind: input, shape index: {}]
  %s10 = inlined_call_operand.vmem [shape: f32[1,384], index: 10, kind: input, shape index: {}]
  %s11 = inlined_call_operand.hbm [shape: f32[1,384], index: 11, kind: input, shape index: {}]
  %s12 = inlined_call_operand.vmem [shape: f32[1,384], index: 12, kind: input, shape index: {}]
  %s13 = inlined_call_operand.hbm [shape: f32[1,8,384], index: 13, kind: output, shape index: {}]
  %s14 = sld [smem:[#allocation0]]
  $region94: #{f2s_forward.1} parent=0
    _
  %s16 = ssub.s32 1, %s14
  %s17 = scalar_select 0, %s16, %s14
  $region1: #{f2s_forward.1} parent=0
    #allocation5 [shape = 'u8[32768]{0}', space=vmem, size = 0x8000, scoped, tag = 'input window, operand 0, single buffered']
    #allocation6 [shape = 's32[1]{0}', space=sflag, size = 0x4, scoped, tag = 'scoped memory for f2s_forward.1']
    #allocation7 [shape = 's32[1]{0}', space=sflag, size = 0x4, scoped, tag = 'scoped memory for f2s_forward.1']
    #allocation8 [shape = 'u8[786432]{0}', space=vmem, size = 0xc0000, scoped, tag = 'input window, operand 1, single buffered']
    #allocation9 [shape = 's32[1]{0}', space=sflag, size = 0x4, scoped, tag = 'scoped memory for f2s_forward.1']
    #allocation10 [shape = 'u8[3072]{0}', space=vmem, size = 0xc00, scoped, tag = 'input window, operand 3, single buffered']
    #allocation11 [shape = 'u8[393216]{0}', space=vmem, size = 0x60000, scoped, tag = 'input window, operand 5, single buffered']
    #allocation12 [shape = 's32[1]{0}', space=sflag, size = 0x4, scoped, tag = 'scoped memory for f2s_forward.1']
    #allocation13 [shape = 'u8[2048]{0}', space=vmem, size = 0x800, scoped, tag = 'input window, operand 7, single buffered']
    #allocation14 [shape = 'u8[196608]{0}', space=vmem, size = 0x30000, scoped, tag = 'input window, operand 9, single buffered']
    #allocation15 [shape = 's32[1]{0}', space=sflag, size = 0x4, scoped, tag = 'scoped memory for f2s_forward.1']
    #allocation16 [shape = 'u8[1536]{0}', space=vmem, size = 0x800, scoped, tag = 'input window, operand 11, single buffered']
    #allocation17 [shape = 'u8[12288]{0}', space=vmem, size = 0x3000, scoped, tag = 'output window, operand 0, single buffered']
    %18 = vsyncpa [#allocation6], 0
    %19 = vsyncpa [#allocation9], 0
    %20 = vsyncpa [#allocation12], 0
    %21 = vsyncpa [#allocation15], 0
    %22 = vsyncpa [#allocation7], 0
    // Predicated region
    $region2: #{f2s_forward.1} parent=1 // pred_check
      _
    $region3: #{f2s_forward.1} parent=1 // pred_check_branch
      %24 = sbr.rel (0) target = $region5
    $region4: #{f2s_forward.1} parent=1 // pred_region
      %s26 = ssub.s32 1024, 1024
      %27 = vsyncadd [#allocation6], %s26
      %s29 = sshll.u32 [#allocation5], 4
      %s30 = int_to_ptr.vmem [resolvable:$true] %s29
      %32 = dma.hbm_to_vmem [thread:$0]  %s0, 1024, %s30, [#allocation6]
    $region5: #{f2s_forward.1} parent=1 // pred_fallthru
      _
    // Predicated region
    $region6: #{f2s_forward.1} parent=1 // pred_check
      _
    $region7: #{f2s_forward.1} parent=1 // pred_check_branch
      %34 = sbr.rel (0) target = $region9
    $region8: #{f2s_forward.1} parent=1 // pred_region
      %s36 = ssub.s32 24576, 24576
      %37 = vsyncadd [#allocation9], %s36
      %s38 = sshll.u32 [#allocation8], 4
      %s39 = int_to_ptr.vmem [resolvable:$true] %s38
      %44 = dma.hbm_to_vmem [thread:$0]  %s1, 24576, %s39, [#allocation9], 768, 768, 48
    $region9: #{f2s_forward.1} parent=1 // pred_fallthru
      _
    // Predicated region
    $region10: #{f2s_forward.1} parent=1 // pred_check
      _
    $region11: #{f2s_forward.1} parent=1 // pred_check_branch
      %46 = sbr.rel (0) target = $region13
    $region12: #{f2s_forward.1} parent=1 // pred_region
      _
    $region13: #{f2s_forward.1} parent=1 // pred_fallthru
      _
    // Predicated region
    $region14: #{f2s_forward.1} parent=1 // pred_check
      _
    $region15: #{f2s_forward.1} parent=1 // pred_check_branch
      %48 = sbr.rel (0) target = $region17
    $region16: #{f2s_forward.1} parent=1 // pred_region
      %s50 = ssub.s32 96, 96
      %51 = vsyncadd [#allocation9], %s50
      %s53 = sshll.u32 [#allocation10], 4
      %s54 = int_to_ptr.vmem [resolvable:$true] %s53
      %56 = dma.hbm_to_vmem [thread:$0]  %s3, 96, %s54, [#allocation9]
    $region17: #{f2s_forward.1} parent=1 // pred_fallthru
      _
    // Predicated region
    $region18: #{f2s_forward.1} parent=1 // pred_check
      _
    $region19: #{f2s_forward.1} parent=1 // pred_check_branch
      %58 = sbr.rel (0) target = $region21
    $region20: #{f2s_forward.1} parent=1 // pred_region
      _
    $region21: #{f2s_forward.1} parent=1 // pred_fallthru
      _
    // Predicated region
    $region22: #{f2s_forward.1} parent=1 // pred_check
      _
    $region23: #{f2s_forward.1} parent=1 // pred_check_branch
      %60 = sbr.rel (0) target = $region25
    $region24: #{f2s_forward.1} parent=1 // pred_region
      %s62 = ssub.s32 12288, 12288
      %63 = vsyncadd [#allocation12], %s62
      %s64 = sshll.u32 [#allocation11], 4
      %s65 = int_to_ptr.vmem [resolvable:$true] %s64
      %70 = dma.hbm_to_vmem [thread:$0]  %s5, 12288, %s65, [#allocation12], 512, 512, 32
    $region25: #{f2s_forward.1} parent=1 // pred_fallthru
      _
    // Predicated region
    $region26: #{f2s_forward.1} parent=1 // pred_check
      _
    $region27: #{f2s_forward.1} parent=1 // pred_check_branch
      %72 = sbr.rel (0) target = $region29
    $region28: #{f2s_forward.1} parent=1 // pred_region
      _
    $region29: #{f2s_forward.1} parent=1 // pred_fallthru
      _
    // Predicated region
    $region30: #{f2s_forward.1} parent=1 // pred_check
      _
    $region31: #{f2s_forward.1} parent=1 // pred_check_branch
      %74 = sbr.rel (0) target = $region33
    $region32: #{f2s_forward.1} parent=1 // pred_region
      %s76 = ssub.s32 64, 64
      %77 = vsyncadd [#allocation12], %s76
      %s79 = sshll.u32 [#allocation13], 4
      %s80 = int_to_ptr.vmem [resolvable:$true] %s79
      %82 = dma.hbm_to_vmem [thread:$0]  %s7, 64, %s80, [#allocation12]
    $region33: #{f2s_forward.1} parent=1 // pred_fallthru
      _
    // Predicated region
    $region34: #{f2s_forward.1} parent=1 // pred_check
      _
    $region35: #{f2s_forward.1} parent=1 // pred_check_branch
      %84 = sbr.rel (0) target = $region37
    $region36: #{f2s_forward.1} parent=1 // pred_region
      _
    $region37: #{f2s_forward.1} parent=1 // pred_fallthru
      _
    // Predicated region
    $region38: #{f2s_forward.1} parent=1 // pred_check
      _
    $region39: #{f2s_forward.1} parent=1 // pred_check_branch
      %86 = sbr.rel (0) target = $region41
    $region40: #{f2s_forward.1} parent=1 // pred_region
      %s88 = ssub.s32 6144, 6144
      %89 = vsyncadd [#allocation15], %s88
      %s90 = sshll.u32 [#allocation14], 4
      %s91 = int_to_ptr.vmem [resolvable:$true] %s90
      %96 = dma.hbm_to_vmem [thread:$0]  %s9, 6144, %s91, [#allocation15], 384, 384, 24
    $region41: #{f2s_forward.1} parent=1 // pred_fallthru
      _
    // Predicated region
    $region42: #{f2s_forward.1} parent=1 // pred_check
      _
    $region43: #{f2s_forward.1} parent=1 // pred_check_branch
      %98 = sbr.rel (0) target = $region45
    $region44: #{f2s_forward.1} parent=1 // pred_region
      _
    $region45: #{f2s_forward.1} parent=1 // pred_fallthru
      _
    // Predicated region
    $region46: #{f2s_forward.1} parent=1 // pred_check
      _
    $region47: #{f2s_forward.1} parent=1 // pred_check_branch
      %100 = sbr.rel (0) target = $region49
    $region48: #{f2s_forward.1} parent=1 // pred_region
      %s102 = ssub.s32 48, 48
      %103 = vsyncadd [#allocation15], %s102
      %s105 = sshll.u32 [#allocation16], 4
      %s106 = int_to_ptr.vmem [resolvable:$true] %s105
      %108 = dma.hbm_to_vmem [thread:$0]  %s11, 48, %s106, [#allocation15]
    $region49: #{f2s_forward.1} parent=1 // pred_fallthru
      _
    // Predicated region
    $region50: #{f2s_forward.1} parent=1 // pred_check
      _
    $region51: #{f2s_forward.1} parent=1 // pred_check_branch
      %110 = sbr.rel (0) target = $region53
    $region52: #{f2s_forward.1} parent=1 // pred_region
      _
    $region53: #{f2s_forward.1} parent=1 // pred_fallthru
      _
    // Predicated region
    $region54: #{f2s_forward.1} parent=1 // pred_check
      _
    $region55: #{f2s_forward.1} parent=1 // pred_check_branch
      %112 = sbr.rel (0) target = $region57
    $region56: #{f2s_forward.1} parent=1 // pred_region
      %113 = dma.done [#allocation6], 1024
    $region57: #{f2s_forward.1} parent=1 // pred_fallthru
      _
    // Predicated region
    $region58: #{f2s_forward.1} parent=1 // pred_check
      _
    $region59: #{f2s_forward.1} parent=1 // pred_check_branch
      %115 = sbr.rel (0) target = $region61
    $region60: #{f2s_forward.1} parent=1 // pred_region
      %116 = dma.done [#allocation9], 24576
    $region61: #{f2s_forward.1} parent=1 // pred_fallthru
      _
    // Predicated region
    $region62: #{f2s_forward.1} parent=1 // pred_check
      _
    $region63: #{f2s_forward.1} parent=1 // pred_check_branch
      %118 = sbr.rel (0) target = $region65
    $region64: #{f2s_forward.1} parent=1 // pred_region
      %119 = dma.done [#allocation9], 96
    $region65: #{f2s_forward.1} parent=1 // pred_fallthru
      _
    // Predicated region
    $region66: #{f2s_forward.1} parent=1 // pred_check
      _
    $region67: #{f2s_forward.1} parent=1 // pred_check_branch
      %121 = sbr.rel (0) target = $region69
    $region68: #{f2s_forward.1} parent=1 // pred_region
      %122 = dma.done [#allocation12], 12288
    $region69: #{f2s_forward.1} parent=1 // pred_fallthru
      _
    // Predicated region
    $region70: #{f2s_forward.1} parent=1 // pred_check
      _
    $region71: #{f2s_forward.1} parent=1 // pred_check_branch
      %124 = sbr.rel (0) target = $region73
    $region72: #{f2s_forward.1} parent=1 // pred_region
      %125 = dma.done [#allocation12], 64
    $region73: #{f2s_forward.1} parent=1 // pred_fallthru
      _
    // Predicated region
    $region74: #{f2s_forward.1} parent=1 // pred_check
      _
    $region75: #{f2s_forward.1} parent=1 // pred_check_branch
      %127 = sbr.rel (0) target = $region77
    $region76: #{f2s_forward.1} parent=1 // pred_region
      %128 = dma.done [#allocation15], 6144
    $region77: #{f2s_forward.1} parent=1 // pred_fallthru
      _
    // Predicated region
    $region78: #{f2s_forward.1} parent=1 // pred_check
      _
    $region79: #{f2s_forward.1} parent=1 // pred_check_branch
      %130 = sbr.rel (0) target = $region81
    $region80: #{f2s_forward.1} parent=1 // pred_region
      %131 = dma.done [#allocation15], 48
    $region81: #{f2s_forward.1} parent=1 // pred_fallthru
      _
    %p133 = scmp.eq.s32.totalorder 0, 0
    // Predicated region
    $region82: #{f2s_forward.1} parent=1 // pred_check
      %p134 = pneg %p133
    $region83: #{f2s_forward.1} parent=1 // pred_check_branch
      %136 = sbr.rel (%p134) target = $region85
    $region84: #{f2s_forward.1} parent=1 // pred_region
      %v137 = vld [vmem:[#allocation8] sm:$0xff]
      %v138 = vld [vmem:[#allocation8 + $0x8] sm:$0xff]
      %v139 = vld [vmem:[#allocation8 + $0x10] sm:$0xff]
      %v140 = vld [vmem:[#allocation8 + $0x18] sm:$0xff]
      %v141 = vld [vmem:[#allocation8 + $0x20] sm:$0xff]
      %v142 = vld [vmem:[#allocation8 + $0x28] sm:$0xff]
      %v143 = vld [vmem:[#allocation8 + $0x30] sm:$0xff]
      %v144 = vld [vmem:[#allocation8 + $0x38] sm:$0xff]
      %v145 = vld [vmem:[#allocation8 + $0x40] sm:$0xff]
      %v146 = vld [vmem:[#allocation8 + $0x48] sm:$0xff]
      %v147 = vld [vmem:[#allocation8 + $0x50] sm:$0xff]
      %v148 = vld [vmem:[#allocation8 + $0x58] sm:$0xff]
      %v149 = vld [vmem:[#allocation8 + $0x60] sm:$0xff]
      %v150 = vld [vmem:[#allocation8 + $0x68] sm:$0xff]
      %v151 = vld [vmem:[#allocation8 + $0x70] sm:$0xff]
      %v152 = vld [vmem:[#allocation8 + $0x78] sm:$0xff]
      %v153 = vld [vmem:[#allocation8 + $0x80] sm:$0xff]
      %v154 = vld [vmem:[#allocation8 + $0x88] sm:$0xff]
      %v155 = vld [vmem:[#allocation8 + $0x90] sm:$0xff]
      %v156 = vld [vmem:[#allocation8 + $0x98] sm:$0xff]
      %v157 = vld [vmem:[#allocation8 + $0xa0] sm:$0xff]
      %v158 = vld [vmem:[#allocation8 + $0xa8] sm:$0xff]
      %v159 = vld [vmem:[#allocation8 + $0xb0] sm:$0xff]
      %v160 = vld [vmem:[#allocation8 + $0xb8] sm:$0xff]
      %v161 = vld [vmem:[#allocation8 + $0xc0] sm:$0xff]
      %v162 = vld [vmem:[#allocation8 + $0xc8] sm:$0xff]
      %v163 = vld [vmem:[#allocation8 + $0xd0] sm:$0xff]
      %v164 = vld [vmem:[#allocation8 + $0xd8] sm:$0xff]
      %v165 = vld [vmem:[#allocation8 + $0xe0] sm:$0xff]
      %v166 = vld [vmem:[#allocation8 + $0xe8] sm:$0xff]
      %v167 = vld [vmem:[#allocation8 + $0xf0] sm:$0xff]
      %v168 = vld [vmem:[#allocation8 + $0xf8] sm:$0xff]
      %v169 = vld [vmem:[#allocation8 + $0x100] sm:$0xff]
      %v170 = vld [vmem:[#allocation8 + $0x108] sm:$0xff]
      %v171 = vld [vmem:[#allocation8 + $0x110] sm:$0xff]
      %v172 = vld [vmem:[#allocation8 + $0x118] sm:$0xff]
      %v173 = vld [vmem:[#allocation8 + $0x120] sm:$0xff]
      %v174 = vld [vmem:[#allocation8 + $0x128] sm:$0xff]
      %v175 = vld [vmem:[#allocation8 + $0x130] sm:$0xff]
      %v176 = vld [vmem:[#allocation8 + $0x138] sm:$0xff]
      %v177 = vld [vmem:[#allocation8 + $0x140] sm:$0xff]
      %v178 = vld [vmem:[#allocation8 + $0x148] sm:$0xff]
      %v179 = vld [vmem:[#allocation8 + $0x150] sm:$0xff]
      %v180 = vld [vmem:[#allocation8 + $0x158] sm:$0xff]
      %v181 = vld [vmem:[#allocation8 + $0x160] sm:$0xff]
      %v182 = vld [vmem:[#allocation8 + $0x168] sm:$0xff]
      %v183 = vld [vmem:[#allocation8 + $0x170] sm:$0xff]
      %v184 = vld [vmem:[#allocation8 + $0x178] sm:$0xff]
      %v185 = vld [vmem:[#allocation8 + $0x180] sm:$0xff]
      %v186 = vld [vmem:[#allocation8 + $0x188] sm:$0xff]
      %v187 = vld [vmem:[#allocation8 + $0x190] sm:$0xff]
      %v188 = vld [vmem:[#allocation8 + $0x198] sm:$0xff]
      %v189 = vld [vmem:[#allocation8 + $0x1a0] sm:$0xff]
      %v190 = vld [vmem:[#allocation8 + $0x1a8] sm:$0xff]
      %v191 = vld [vmem:[#allocation8 + $0x1b0] sm:$0xff]
      %v192 = vld [vmem:[#allocation8 + $0x1b8] sm:$0xff]
      %v193 = vld [vmem:[#allocation8 + $0x1c0] sm:$0xff]
      %v194 = vld [vmem:[#allocation8 + $0x1c8] sm:$0xff]
      %v195 = vld [vmem:[#allocation8 + $0x1d0] sm:$0xff]
      %v196 = vld [vmem:[#allocation8 + $0x1d8] sm:$0xff]
      %v197 = vld [vmem:[#allocation8 + $0x1e0] sm:$0xff]
      %v198 = vld [vmem:[#allocation8 + $0x1e8] sm:$0xff]
      %v199 = vld [vmem:[#allocation8 + $0x1f0] sm:$0xff]
      %v200 = vld [vmem:[#allocation8 + $0x1f8] sm:$0xff]
      %v201 = vld [vmem:[#allocation8 + $0x200] sm:$0xff]
      %v202 = vld [vmem:[#allocation8 + $0x208] sm:$0xff]
      %v203 = vld [vmem:[#allocation8 + $0x210] sm:$0xff]
      %v204 = vld [vmem:[#allocation8 + $0x218] sm:$0xff]
      %v205 = vld [vmem:[#allocation8 + $0x220] sm:$0xff]
      %v206 = vld [vmem:[#allocation8 + $0x228] sm:$0xff]
      %v207 = vld [vmem:[#allocation8 + $0x230] sm:$0xff]
      %v208 = vld [vmem:[#allocation8 + $0x238] sm:$0xff]
      %v209 = vld [vmem:[#allocation8 + $0x240] sm:$0xff]
      %v210 = vld [vmem:[#allocation8 + $0x248] sm:$0xff]
      %v211 = vld [vmem:[#allocation8 + $0x250] sm:$0xff]
      %v212 = vld [vmem:[#allocation8 + $0x258] sm:$0xff]
      %v213 = vld [vmem:[#allocation8 + $0x260] sm:$0xff]
      %v214 = vld [vmem:[#allocation8 + $0x268] sm:$0xff]
      %v215 = vld [vmem:[#allocation8 + $0x270] sm:$0xff]
      %v216 = vld [vmem:[#allocation8 + $0x278] sm:$0xff]
      %v217 = vld [vmem:[#allocation8 + $0x280] sm:$0xff]
      %v218 = vld [vmem:[#allocation8 + $0x288] sm:$0xff]
      %v219 = vld [vmem:[#allocation8 + $0x290] sm:$0xff]
      %v220 = vld [vmem:[#allocation8 + $0x298] sm:$0xff]
      %v221 = vld [vmem:[#allocation8 + $0x2a0] sm:$0xff]
      %v222 = vld [vmem:[#allocation8 + $0x2a8] sm:$0xff]
      %v223 = vld [vmem:[#allocation8 + $0x2b0] sm:$0xff]
      %v224 = vld [vmem:[#allocation8 + $0x2b8] sm:$0xff]
      %v225 = vld [vmem:[#allocation8 + $0x2c0] sm:$0xff]
      %v226 = vld [vmem:[#allocation8 + $0x2c8] sm:$0xff]
      %v227 = vld [vmem:[#allocation8 + $0x2d0] sm:$0xff]
      %v228 = vld [vmem:[#allocation8 + $0x2d8] sm:$0xff]
      %v229 = vld [vmem:[#allocation8 + $0x2e0] sm:$0xff]
      %v230 = vld [vmem:[#allocation8 + $0x2e8] sm:$0xff]
      %v231 = vld [vmem:[#allocation8 + $0x2f0] sm:$0xff]
      %v232 = vld [vmem:[#allocation8 + $0x2f8] sm:$0xff]
      %v233 = vld [vmem:[#allocation8 + $0x300] sm:$0xff]
      %v234 = vld [vmem:[#allocation8 + $0x308] sm:$0xff]
      %v235 = vld [vmem:[#allocation8 + $0x310] sm:$0xff]
      %v236 = vld [vmem:[#allocation8 + $0x318] sm:$0xff]
      %v237 = vld [vmem:[#allocation8 + $0x320] sm:$0xff]
      %v238 = vld [vmem:[#allocation8 + $0x328] sm:$0xff]
      %v239 = vld [vmem:[#allocation8 + $0x330] sm:$0xff]
      %v240 = vld [vmem:[#allocation8 + $0x338] sm:$0xff]
      %v241 = vld [vmem:[#allocation8 + $0x340] sm:$0xff]
      %v242 = vld [vmem:[#allocation8 + $0x348] sm:$0xff]
      %v243 = vld [vmem:[#allocation8 + $0x350] sm:$0xff]
      %v244 = vld [vmem:[#allocation8 + $0x358] sm:$0xff]
      %v245 = vld [vmem:[#allocation8 + $0x360] sm:$0xff]
      %v246 = vld [vmem:[#allocation8 + $0x368] sm:$0xff]
      %v247 = vld [vmem:[#allocation8 + $0x370] sm:$0xff]
      %v248 = vld [vmem:[#allocation8 + $0x378] sm:$0xff]
      %v249 = vld [vmem:[#allocation8 + $0x380] sm:$0xff]
      %v250 = vld [vmem:[#allocation8 + $0x388] sm:$0xff]
      %v251 = vld [vmem:[#allocation8 + $0x390] sm:$0xff]
      %v252 = vld [vmem:[#allocation8 + $0x398] sm:$0xff]
      %v253 = vld [vmem:[#allocation8 + $0x3a0] sm:$0xff]
      %v254 = vld [vmem:[#allocation8 + $0x3a8] sm:$0xff]
      %v255 = vld [vmem:[#allocation8 + $0x3b0] sm:$0xff]
      %v256 = vld [vmem:[#allocation8 + $0x3b8] sm:$0xff]
      %v257 = vld [vmem:[#allocation8 + $0x3c0] sm:$0xff]
      %v258 = vld [vmem:[#allocation8 + $0x3c8] sm:$0xff]
      %v259 = vld [vmem:[#allocation8 + $0x3d0] sm:$0xff]
      %v260 = vld [vmem:[#allocation8 + $0x3d8] sm:$0xff]
      %v261 = vld [vmem:[#allocation8 + $0x3e0] sm:$0xff]
      %v262 = vld [vmem:[#allocation8 + $0x3e8] sm:$0xff]
      %v263 = vld [vmem:[#allocation8 + $0x3f0] sm:$0xff]
      %v264 = vld [vmem:[#allocation8 + $0x3f8] sm:$0xff]
      %v265 = vld [vmem:[#allocation8 + $0x400] sm:$0xff]
      %v266 = vld [vmem:[#allocation8 + $0x408] sm:$0xff]
      %v267 = vld [vmem:[#allocation8 + $0x410] sm:$0xff]
      %v268 = vld [vmem:[#allocation8 + $0x418] sm:$0xff]
      %v269 = vld [vmem:[#allocation8 + $0x420] sm:$0xff]
      %v270 = vld [vmem:[#allocation8 + $0x428] sm:$0xff]
      %v271 = vld [vmem:[#allocation8 + $0x430] sm:$0xff]
      %v272 = vld [vmem:[#allocation8 + $0x438] sm:$0xff]
      %v273 = vld [vmem:[#allocation8 + $0x440] sm:$0xff]
      %v274 = vld [vmem:[#allocation8 + $0x448] sm:$0xff]
      %v275 = vld [vmem:[#allocation8 + $0x450] sm:$0xff]
      %v276 = vld [vmem:[#allocation8 + $0x458] sm:$0xff]
      %v277 = vld [vmem:[#allocation8 + $0x460] sm:$0xff]
      %v278 = vld [vmem:[#allocation8 + $0x468] sm:$0xff]
      %v279 = vld [vmem:[#allocation8 + $0x470] sm:$0xff]
      %v280 = vld [vmem:[#allocation8 + $0x478] sm:$0xff]
      %v281 = vld [vmem:[#allocation8 + $0x480] sm:$0xff]
      %v282 = vld [vmem:[#allocation8 + $0x488] sm:$0xff]
      %v283 = vld [vmem:[#allocation8 + $0x490] sm:$0xff]
      %v284 = vld [vmem:[#allocation8 + $0x498] sm:$0xff]
      %v285 = vld [vmem:[#allocation8 + $0x4a0] sm:$0xff]
      %v286 = vld [vmem:[#allocation8 + $0x4a8] sm:$0xff]
      %v287 = vld [vmem:[#allocation8 + $0x4b0] sm:$0xff]
      %v288 = vld [vmem:[#allocation8 + $0x4b8] sm:$0xff]
      %v289 = vld [vmem:[#allocation8 + $0x4c0] sm:$0xff]
      %v290 = vld [vmem:[#allocation8 + $0x4c8] sm:$0xff]
      %v291 = vld [vmem:[#allocation8 + $0x4d0] sm:$0xff]
      %v292 = vld [vmem:[#allocation8 + $0x4d8] sm:$0xff]
      %v293 = vld [vmem:[#allocation8 + $0x4e0] sm:$0xff]
      %v294 = vld [vmem:[#allocation8 + $0x4e8] sm:$0xff]
      %v295 = vld [vmem:[#allocation8 + $0x4f0] sm:$0xff]
      %v296 = vld [vmem:[#allocation8 + $0x4f8] sm:$0xff]
      %v297 = vld [vmem:[#allocation8 + $0x500] sm:$0xff]
      %v298 = vld [vmem:[#allocation8 + $0x508] sm:$0xff]
      %v299 = vld [vmem:[#allocation8 + $0x510] sm:$0xff]
      %v300 = vld [vmem:[#allocation8 + $0x518] sm:$0xff]
      %v301 = vld [vmem:[#allocation8 + $0x520] sm:$0xff]
      %v302 = vld [vmem:[#allocation8 + $0x528] sm:$0xff]
      %v303 = vld [vmem:[#allocation8 + $0x530] sm:$0xff]
      %v304 = vld [vmem:[#allocation8 + $0x538] sm:$0xff]
      %v305 = vld [vmem:[#allocation8 + $0x540] sm:$0xff]
      %v306 = vld [vmem:[#allocation8 + $0x548] sm:$0xff]
      %v307 = vld [vmem:[#allocation8 + $0x550] sm:$0xff]
      %v308 = vld [vmem:[#allocation8 + $0x558] sm:$0xff]
      %v309 = vld [vmem:[#allocation8 + $0x560] sm:$0xff]
      %v310 = vld [vmem:[#allocation8 + $0x568] sm:$0xff]
      %v311 = vld [vmem:[#allocation8 + $0x570] sm:$0xff]
      %v312 = vld [vmem:[#allocation8 + $0x578] sm:$0xff]
      %v313 = vld [vmem:[#allocation8 + $0x580] sm:$0xff]
      %v314 = vld [vmem:[#allocation8 + $0x588] sm:$0xff]
      %v315 = vld [vmem:[#allocation8 + $0x590] sm:$0xff]
      %v316 = vld [vmem:[#allocation8 + $0x598] sm:$0xff]
      %v317 = vld [vmem:[#allocation8 + $0x5a0] sm:$0xff]
      %v318 = vld [vmem:[#allocation8 + $0x5a8] sm:$0xff]
      %v319 = vld [vmem:[#allocation8 + $0x5b0] sm:$0xff]
      %v320 = vld [vmem:[#allocation8 + $0x5b8] sm:$0xff]
      %v321 = vld [vmem:[#allocation8 + $0x5c0] sm:$0xff]
      %v322 = vld [vmem:[#allocation8 + $0x5c8] sm:$0xff]
      %v323 = vld [vmem:[#allocation8 + $0x5d0] sm:$0xff]
      %v324 = vld [vmem:[#allocation8 + $0x5d8] sm:$0xff]
      %v325 = vld [vmem:[#allocation8 + $0x5e0] sm:$0xff]
      %v326 = vld [vmem:[#allocation8 + $0x5e8] sm:$0xff]
      %v327 = vld [vmem:[#allocation8 + $0x5f0] sm:$0xff]
      %v328 = vld [vmem:[#allocation8 + $0x5f8] sm:$0xff]
      %v329 = vunpack.c.l.s8.bf16 %v137
      %v330 = vunpack.c.l.s8.bf16 %v138
      %v331 = vunpack.c.l.s8.bf16 %v139
      %v332 = vunpack.c.l.s8.bf16 %v140
      %v333 = vunpack.c.l.s8.bf16 %v141
      %v334 = vunpack.c.l.s8.bf16 %v142
      %v335 = vunpack.c.h.s8.bf16 %v137
      %v336 = vunpack.c.h.s8.bf16 %v138
      %v337 = vunpack.c.h.s8.bf16 %v139
      %v338 = vunpack.c.h.s8.bf16 %v140
      %v339 = vunpack.c.h.s8.bf16 %v141
      %v340 = vunpack.c.h.s8.bf16 %v142
      %v341 = vunpack.c.l.s8.bf16 %v143
      %v342 = vunpack.c.l.s8.bf16 %v144
      %v343 = vunpack.c.l.s8.bf16 %v145
      %v344 = vunpack.c.l.s8.bf16 %v146
      %v345 = vunpack.c.l.s8.bf16 %v147
      %v346 = vunpack.c.l.s8.bf16 %v148
      %v347 = vunpack.c.h.s8.bf16 %v143
      %v348 = vunpack.c.h.s8.bf16 %v144
      %v349 = vunpack.c.h.s8.bf16 %v145
      %v350 = vunpack.c.h.s8.bf16 %v146
      %v351 = vunpack.c.h.s8.bf16 %v147
      %v352 = vunpack.c.h.s8.bf16 %v148
      %v353 = vunpack.c.l.s8.bf16 %v149
      %v354 = vunpack.c.l.s8.bf16 %v150
      %v355 = vunpack.c.l.s8.bf16 %v151
      %v356 = vunpack.c.l.s8.bf16 %v152
      %v357 = vunpack.c.l.s8.bf16 %v153
      %v358 = vunpack.c.l.s8.bf16 %v154
      %v359 = vunpack.c.h.s8.bf16 %v149
      %v360 = vunpack.c.h.s8.bf16 %v150
      %v361 = vunpack.c.h.s8.bf16 %v151
      %v362 = vunpack.c.h.s8.bf16 %v152
      %v363 = vunpack.c.h.s8.bf16 %v153
      %v364 = vunpack.c.h.s8.bf16 %v154
      %v365 = vunpack.c.l.s8.bf16 %v155
      %v366 = vunpack.c.l.s8.bf16 %v156
      %v367 = vunpack.c.l.s8.bf16 %v157
      %v368 = vunpack.c.l.s8.bf16 %v158
      %v369 = vunpack.c.l.s8.bf16 %v159
      %v370 = vunpack.c.l.s8.bf16 %v160
      %v371 = vunpack.c.h.s8.bf16 %v155
      %v372 = vunpack.c.h.s8.bf16 %v156
      %v373 = vunpack.c.h.s8.bf16 %v157
      %v374 = vunpack.c.h.s8.bf16 %v158
      %v375 = vunpack.c.h.s8.bf16 %v159
      %v376 = vunpack.c.h.s8.bf16 %v160
      %v377 = vunpack.c.l.s8.bf16 %v161
      %v378 = vunpack.c.l.s8.bf16 %v162
      %v379 = vunpack.c.l.s8.bf16 %v163
      %v380 = vunpack.c.l.s8.bf16 %v164
      %v381 = vunpack.c.l.s8.bf16 %v165
      %v382 = vunpack.c.l.s8.bf16 %v166
      %v383 = vunpack.c.h.s8.bf16 %v161
      %v384 = vunpack.c.h.s8.bf16 %v162
      %v385 = vunpack.c.h.s8.bf16 %v163
      %v386 = vunpack.c.h.s8.bf16 %v164
      %v387 = vunpack.c.h.s8.bf16 %v165
      %v388 = vunpack.c.h.s8.bf16 %v166
      %v389 = vunpack.c.l.s8.bf16 %v167
      %v390 = vunpack.c.l.s8.bf16 %v168
      %v391 = vunpack.c.l.s8.bf16 %v169
      %v392 = vunpack.c.l.s8.bf16 %v170
      %v393 = vunpack.c.l.s8.bf16 %v171
      %v394 = vunpack.c.l.s8.bf16 %v172
      %v395 = vunpack.c.h.s8.bf16 %v167
      %v396 = vunpack.c.h.s8.bf16 %v168
      %v397 = vunpack.c.h.s8.bf16 %v169
      %v398 = vunpack.c.h.s8.bf16 %v170
      %v399 = vunpack.c.h.s8.bf16 %v171
      %v400 = vunpack.c.h.s8.bf16 %v172
      %v401 = vunpack.c.l.s8.bf16 %v173
      %v402 = vunpack.c.l.s8.bf16 %v174
      %v403 = vunpack.c.l.s8.bf16 %v175
      %v404 = vunpack.c.l.s8.bf16 %v176
      %v405 = vunpack.c.l.s8.bf16 %v177
      %v406 = vunpack.c.l.s8.bf16 %v178
      %v407 = vunpack.c.h.s8.bf16 %v173
      %v408 = vunpack.c.h.s8.bf16 %v174
      %v409 = vunpack.c.h.s8.bf16 %v175
      %v410 = vunpack.c.h.s8.bf16 %v176
      %v411 = vunpack.c.h.s8.bf16 %v177
      %v412 = vunpack.c.h.s8.bf16 %v178
      %v413 = vunpack.c.l.s8.bf16 %v179
      %v414 = vunpack.c.l.s8.bf16 %v180
      %v415 = vunpack.c.l.s8.bf16 %v181
      %v416 = vunpack.c.l.s8.bf16 %v182
      %v417 = vunpack.c.l.s8.bf16 %v183
      %v418 = vunpack.c.l.s8.bf16 %v184
      %v419 = vunpack.c.h.s8.bf16 %v179
      %v420 = vunpack.c.h.s8.bf16 %v180
      %v421 = vunpack.c.h.s8.bf16 %v181
      %v422 = vunpack.c.h.s8.bf16 %v182
      %v423 = vunpack.c.h.s8.bf16 %v183
      %v424 = vunpack.c.h.s8.bf16 %v184
      %v425 = vunpack.c.l.s8.bf16 %v185
      %v426 = vunpack.c.l.s8.bf16 %v186
      %v427 = vunpack.c.l.s8.bf16 %v187
      %v428 = vunpack.c.l.s8.bf16 %v188
      %v429 = vunpack.c.l.s8.bf16 %v189
      %v430 = vunpack.c.l.s8.bf16 %v190
      %v431 = vunpack.c.h.s8.bf16 %v185
      %v432 = vunpack.c.h.s8.bf16 %v186
      %v433 = vunpack.c.h.s8.bf16 %v187
      %v434 = vunpack.c.h.s8.bf16 %v188
      %v435 = vunpack.c.h.s8.bf16 %v189
      %v436 = vunpack.c.h.s8.bf16 %v190
      %v437 = vunpack.c.l.s8.bf16 %v191
      %v438 = vunpack.c.l.s8.bf16 %v192
      %v439 = vunpack.c.l.s8.bf16 %v193
      %v440 = vunpack.c.l.s8.bf16 %v194
      %v441 = vunpack.c.l.s8.bf16 %v195
      %v442 = vunpack.c.l.s8.bf16 %v196
      %v443 = vunpack.c.h.s8.bf16 %v191
      %v444 = vunpack.c.h.s8.bf16 %v192
      %v445 = vunpack.c.h.s8.bf16 %v193
      %v446 = vunpack.c.h.s8.bf16 %v194
      %v447 = vunpack.c.h.s8.bf16 %v195
      %v448 = vunpack.c.h.s8.bf16 %v196
      %v449 = vunpack.c.l.s8.bf16 %v197
      %v450 = vunpack.c.l.s8.bf16 %v198
      %v451 = vunpack.c.l.s8.bf16 %v199
      %v452 = vunpack.c.l.s8.bf16 %v200
      %v453 = vunpack.c.l.s8.bf16 %v201
      %v454 = vunpack.c.l.s8.bf16 %v202
      %v455 = vunpack.c.h.s8.bf16 %v197
      %v456 = vunpack.c.h.s8.bf16 %v198
      %v457 = vunpack.c.h.s8.bf16 %v199
      %v458 = vunpack.c.h.s8.bf16 %v200
      %v459 = vunpack.c.h.s8.bf16 %v201
      %v460 = vunpack.c.h.s8.bf16 %v202
      %v461 = vunpack.c.l.s8.bf16 %v203
      %v462 = vunpack.c.l.s8.bf16 %v204
      %v463 = vunpack.c.l.s8.bf16 %v205
      %v464 = vunpack.c.l.s8.bf16 %v206
      %v465 = vunpack.c.l.s8.bf16 %v207
      %v466 = vunpack.c.l.s8.bf16 %v208
      %v467 = vunpack.c.h.s8.bf16 %v203
      %v468 = vunpack.c.h.s8.bf16 %v204
      %v469 = vunpack.c.h.s8.bf16 %v205
      %v470 = vunpack.c.h.s8.bf16 %v206
      %v471 = vunpack.c.h.s8.bf16 %v207
      %v472 = vunpack.c.h.s8.bf16 %v208
      %v473 = vunpack.c.l.s8.bf16 %v209
      %v474 = vunpack.c.l.s8.bf16 %v210
      %v475 = vunpack.c.l.s8.bf16 %v211
      %v476 = vunpack.c.l.s8.bf16 %v212
      %v477 = vunpack.c.l.s8.bf16 %v213
      %v478 = vunpack.c.l.s8.bf16 %v214
      %v479 = vunpack.c.h.s8.bf16 %v209
      %v480 = vunpack.c.h.s8.bf16 %v210
      %v481 = vunpack.c.h.s8.bf16 %v211
      %v482 = vunpack.c.h.s8.bf16 %v212
      %v483 = vunpack.c.h.s8.bf16 %v213
      %v484 = vunpack.c.h.s8.bf16 %v214
      %v485 = vunpack.c.l.s8.bf16 %v215
      %v486 = vunpack.c.l.s8.bf16 %v216
      %v487 = vunpack.c.l.s8.bf16 %v217
      %v488 = vunpack.c.l.s8.bf16 %v218
      %v489 = vunpack.c.l.s8.bf16 %v219
      %v490 = vunpack.c.l.s8.bf16 %v220
      %v491 = vunpack.c.h.s8.bf16 %v215
      %v492 = vunpack.c.h.s8.bf16 %v216
      %v493 = vunpack.c.h.s8.bf16 %v217
      %v494 = vunpack.c.h.s8.bf16 %v218
      %v495 = vunpack.c.h.s8.bf16 %v219
      %v496 = vunpack.c.h.s8.bf16 %v220
      %v497 = vunpack.c.l.s8.bf16 %v221
      %v498 = vunpack.c.l.s8.bf16 %v222
      %v499 = vunpack.c.l.s8.bf16 %v223
      %v500 = vunpack.c.l.s8.bf16 %v224
      %v501 = vunpack.c.l.s8.bf16 %v225
      %v502 = vunpack.c.l.s8.bf16 %v226
      %v503 = vunpack.c.h.s8.bf16 %v221
      %v504 = vunpack.c.h.s8.bf16 %v222
      %v505 = vunpack.c.h.s8.bf16 %v223
      %v506 = vunpack.c.h.s8.bf16 %v224
      %v507 = vunpack.c.h.s8.bf16 %v225
      %v508 = vunpack.c.h.s8.bf16 %v226
      %v509 = vunpack.c.l.s8.bf16 %v227
      %v510 = vunpack.c.l.s8.bf16 %v228
      %v511 = vunpack.c.l.s8.bf16 %v229
      %v512 = vunpack.c.l.s8.bf16 %v230
      %v513 = vunpack.c.l.s8.bf16 %v231
      %v514 = vunpack.c.l.s8.bf16 %v232
      %v515 = vunpack.c.h.s8.bf16 %v227
      %v516 = vunpack.c.h.s8.bf16 %v228
      %v517 = vunpack.c.h.s8.bf16 %v229
      %v518 = vunpack.c.h.s8.bf16 %v230
      %v519 = vunpack.c.h.s8.bf16 %v231
      %v520 = vunpack.c.h.s8.bf16 %v232
      %v521 = vunpack.c.l.s8.bf16 %v233
      %v522 = vunpack.c.l.s8.bf16 %v234
      %v523 = vunpack.c.l.s8.bf16 %v235
      %v524 = vunpack.c.l.s8.bf16 %v236
      %v525 = vunpack.c.l.s8.bf16 %v237
      %v526 = vunpack.c.l.s8.bf16 %v238
      %v527 = vunpack.c.h.s8.bf16 %v233
      %v528 = vunpack.c.h.s8.bf16 %v234
      %v529 = vunpack.c.h.s8.bf16 %v235
      %v530 = vunpack.c.h.s8.bf16 %v236
      %v531 = vunpack.c.h.s8.bf16 %v237
      %v532 = vunpack.c.h.s8.bf16 %v238
      %v533 = vunpack.c.l.s8.bf16 %v239
      %v534 = vunpack.c.l.s8.bf16 %v240
      %v535 = vunpack.c.l.s8.bf16 %v241
      %v536 = vunpack.c.l.s8.bf16 %v242
      %v537 = vunpack.c.l.s8.bf16 %v243
      %v538 = vunpack.c.l.s8.bf16 %v244
      %v539 = vunpack.c.h.s8.bf16 %v239
      %v540 = vunpack.c.h.s8.bf16 %v240
      %v541 = vunpack.c.h.s8.bf16 %v241
      %v542 = vunpack.c.h.s8.bf16 %v242
      %v543 = vunpack.c.h.s8.bf16 %v243
      %v544 = vunpack.c.h.s8.bf16 %v244
      %v545 = vunpack.c.l.s8.bf16 %v245
      %v546 = vunpack.c.l.s8.bf16 %v246
      %v547 = vunpack.c.l.s8.bf16 %v247
      %v548 = vunpack.c.l.s8.bf16 %v248
      %v549 = vunpack.c.l.s8.bf16 %v249
      %v550 = vunpack.c.l.s8.bf16 %v250
      %v551 = vunpack.c.h.s8.bf16 %v245
      %v552 = vunpack.c.h.s8.bf16 %v246
      %v553 = vunpack.c.h.s8.bf16 %v247
      %v554 = vunpack.c.h.s8.bf16 %v248
      %v555 = vunpack.c.h.s8.bf16 %v249
      %v556 = vunpack.c.h.s8.bf16 %v250
      %v557 = vunpack.c.l.s8.bf16 %v251
      %v558 = vunpack.c.l.s8.bf16 %v252
      %v559 = vunpack.c.l.s8.bf16 %v253
      %v560 = vunpack.c.l.s8.bf16 %v254
      %v561 = vunpack.c.l.s8.bf16 %v255
      %v562 = vunpack.c.l.s8.bf16 %v256
      %v563 = vunpack.c.h.s8.bf16 %v251
      %v564 = vunpack.c.h.s8.bf16 %v252
      %v565 = vunpack.c.h.s8.bf16 %v253
      %v566 = vunpack.c.h.s8.bf16 %v254
      %v567 = vunpack.c.h.s8.bf16 %v255
      %v568 = vunpack.c.h.s8.bf16 %v256
      %v569 = vunpack.c.l.s8.bf16 %v257
      %v570 = vunpack.c.l.s8.bf16 %v258
      %v571 = vunpack.c.l.s8.bf16 %v259
      %v572 = vunpack.c.l.s8.bf16 %v260
      %v573 = vunpack.c.l.s8.bf16 %v261
      %v574 = vunpack.c.l.s8.bf16 %v262
      %v575 = vunpack.c.h.s8.bf16 %v257
      %v576 = vunpack.c.h.s8.bf16 %v258
      %v577 = vunpack.c.h.s8.bf16 %v259
      %v578 = vunpack.c.h.s8.bf16 %v260
      %v579 = vunpack.c.h.s8.bf16 %v261
      %v580 = vunpack.c.h.s8.bf16 %v262
      %v581 = vunpack.c.l.s8.bf16 %v263
      %v582 = vunpack.c.l.s8.bf16 %v264
      %v583 = vunpack.c.l.s8.bf16 %v265
      %v584 = vunpack.c.l.s8.bf16 %v266
      %v585 = vunpack.c.l.s8.bf16 %v267
      %v586 = vunpack.c.l.s8.bf16 %v268
      %v587 = vunpack.c.h.s8.bf16 %v263
      %v588 = vunpack.c.h.s8.bf16 %v264
      %v589 = vunpack.c.h.s8.bf16 %v265
      %v590 = vunpack.c.h.s8.bf16 %v266
      %v591 = vunpack.c.h.s8.bf16 %v267
      %v592 = vunpack.c.h.s8.bf16 %v268
      %v593 = vunpack.c.l.s8.bf16 %v269
      %v594 = vunpack.c.l.s8.bf16 %v270
      %v595 = vunpack.c.l.s8.bf16 %v271
      %v596 = vunpack.c.l.s8.bf16 %v272
      %v597 = vunpack.c.l.s8.bf16 %v273
      %v598 = vunpack.c.l.s8.bf16 %v274
      %v599 = vunpack.c.h.s8.bf16 %v269
      %v600 = vunpack.c.h.s8.bf16 %v270
      %v601 = vunpack.c.h.s8.bf16 %v271
      %v602 = vunpack.c.h.s8.bf16 %v272
      %v603 = vunpack.c.h.s8.bf16 %v273
      %v604 = vunpack.c.h.s8.bf16 %v274
      %v605 = vunpack.c.l.s8.bf16 %v275
      %v606 = vunpack.c.l.s8.bf16 %v276
      %v607 = vunpack.c.l.s8.bf16 %v277
      %v608 = vunpack.c.l.s8.bf16 %v278
      %v609 = vunpack.c.l.s8.bf16 %v279
      %v610 = vunpack.c.l.s8.bf16 %v280
      %v611 = vunpack.c.h.s8.bf16 %v275
      %v612 = vunpack.c.h.s8.bf16 %v276
      %v613 = vunpack.c.h.s8.bf16 %v277
      %v614 = vunpack.c.h.s8.bf16 %v278
      %v615 = vunpack.c.h.s8.bf16 %v279
      %v616 = vunpack.c.h.s8.bf16 %v280
      %v617 = vunpack.c.l.s8.bf16 %v281
      %v618 = vunpack.c.l.s8.bf16 %v282
      %v619 = vunpack.c.l.s8.bf16 %v283
      %v620 = vunpack.c.l.s8.bf16 %v284
      %v621 = vunpack.c.l.s8.bf16 %v285
      %v622 = vunpack.c.l.s8.bf16 %v286
      %v623 = vunpack.c.h.s8.bf16 %v281
      %v624 = vunpack.c.h.s8.bf16 %v282
      %v625 = vunpack.c.h.s8.bf16 %v283
      %v626 = vunpack.c.h.s8.bf16 %v284
      %v627 = vunpack.c.h.s8.bf16 %v285
      %v628 = vunpack.c.h.s8.bf16 %v286
      %v629 = vunpack.c.l.s8.bf16 %v287
      %v630 = vunpack.c.l.s8.bf16 %v288
      %v631 = vunpack.c.l.s8.bf16 %v289
      %v632 = vunpack.c.l.s8.bf16 %v290
      %v633 = vunpack.c.l.s8.bf16 %v291
      %v634 = vunpack.c.l.s8.bf16 %v292
      %v635 = vunpack.c.h.s8.bf16 %v287
      %v636 = vunpack.c.h.s8.bf16 %v288
      %v637 = vunpack.c.h.s8.bf16 %v289
      %v638 = vunpack.c.h.s8.bf16 %v290
      %v639 = vunpack.c.h.s8.bf16 %v291
      %v640 = vunpack.c.h.s8.bf16 %v292
      %v641 = vunpack.c.l.s8.bf16 %v293
      %v642 = vunpack.c.l.s8.bf16 %v294
      %v643 = vunpack.c.l.s8.bf16 %v295
      %v644 = vunpack.c.l.s8.bf16 %v296
      %v645 = vunpack.c.l.s8.bf16 %v297
      %v646 = vunpack.c.l.s8.bf16 %v298
      %v647 = vunpack.c.h.s8.bf16 %v293
      %v648 = vunpack.c.h.s8.bf16 %v294
      %v649 = vunpack.c.h.s8.bf16 %v295
      %v650 = vunpack.c.h.s8.bf16 %v296
      %v651 = vunpack.c.h.s8.bf16 %v297
      %v652 = vunpack.c.h.s8.bf16 %v298
      %v653 = vunpack.c.l.s8.bf16 %v299
      %v654 = vunpack.c.l.s8.bf16 %v300
      %v655 = vunpack.c.l.s8.bf16 %v301
      %v656 = vunpack.c.l.s8.bf16 %v302
      %v657 = vunpack.c.l.s8.bf16 %v303
      %v658 = vunpack.c.l.s8.bf16 %v304
      %v659 = vunpack.c.h.s8.bf16 %v299
      %v660 = vunpack.c.h.s8.bf16 %v300
      %v661 = vunpack.c.h.s8.bf16 %v301
      %v662 = vunpack.c.h.s8.bf16 %v302
      %v663 = vunpack.c.h.s8.bf16 %v303
      %v664 = vunpack.c.h.s8.bf16 %v304
      %v665 = vunpack.c.l.s8.bf16 %v305
      %v666 = vunpack.c.l.s8.bf16 %v306
      %v667 = vunpack.c.l.s8.bf16 %v307
      %v668 = vunpack.c.l.s8.bf16 %v308
      %v669 = vunpack.c.l.s8.bf16 %v309
      %v670 = vunpack.c.l.s8.bf16 %v310
      %v671 = vunpack.c.h.s8.bf16 %v305
      %v672 = vunpack.c.h.s8.bf16 %v306
      %v673 = vunpack.c.h.s8.bf16 %v307
      %v674 = vunpack.c.h.s8.bf16 %v308
      %v675 = vunpack.c.h.s8.bf16 %v309
      %v676 = vunpack.c.h.s8.bf16 %v310
      %v677 = vunpack.c.l.s8.bf16 %v311
      %v678 = vunpack.c.l.s8.bf16 %v312
      %v679 = vunpack.c.l.s8.bf16 %v313
      %v680 = vunpack.c.l.s8.bf16 %v314
      %v681 = vunpack.c.l.s8.bf16 %v315
      %v682 = vunpack.c.l.s8.bf16 %v316
      %v683 = vunpack.c.h.s8.bf16 %v311
      %v684 = vunpack.c.h.s8.bf16 %v312
      %v685 = vunpack.c.h.s8.bf16 %v313
      %v686 = vunpack.c.h.s8.bf16 %v314
      %v687 = vunpack.c.h.s8.bf16 %v315
      %v688 = vunpack.c.h.s8.bf16 %v316
      %v689 = vunpack.c.l.s8.bf16 %v317
      %v690 = vunpack.c.l.s8.bf16 %v318
      %v691 = vunpack.c.l.s8.bf16 %v319
      %v692 = vunpack.c.l.s8.bf16 %v320
      %v693 = vunpack.c.l.s8.bf16 %v321
      %v694 = vunpack.c.l.s8.bf16 %v322
      %v695 = vunpack.c.h.s8.bf16 %v317
      %v696 = vunpack.c.h.s8.bf16 %v318
      %v697 = vunpack.c.h.s8.bf16 %v319
      %v698 = vunpack.c.h.s8.bf16 %v320
      %v699 = vunpack.c.h.s8.bf16 %v321
      %v700 = vunpack.c.h.s8.bf16 %v322
      %v701 = vunpack.c.l.s8.bf16 %v323
      %v702 = vunpack.c.l.s8.bf16 %v324
      %v703 = vunpack.c.l.s8.bf16 %v325
      %v704 = vunpack.c.l.s8.bf16 %v326
      %v705 = vunpack.c.l.s8.bf16 %v327
      %v706 = vunpack.c.l.s8.bf16 %v328
      %v707 = vunpack.c.h.s8.bf16 %v323
      %v708 = vunpack.c.h.s8.bf16 %v324
      %v709 = vunpack.c.h.s8.bf16 %v325
      %v710 = vunpack.c.h.s8.bf16 %v326
      %v711 = vunpack.c.h.s8.bf16 %v327
      %v712 = vunpack.c.h.s8.bf16 %v328
      %713 = vst [vmem:[#allocation2] sm:$0xff] %v329
      %714 = vst [vmem:[#allocation2 + $0x8] sm:$0xff] %v330
      %715 = vst [vmem:[#allocation2 + $0x10] sm:$0xff] %v331
      %716 = vst [vmem:[#allocation2 + $0x18] sm:$0xff] %v332
      %717 = vst [vmem:[#allocation2 + $0x20] sm:$0xff] %v333
      %718 = vst [vmem:[#allocation2 + $0x28] sm:$0xff] %v334
      %719 = vst [vmem:[#allocation2 + $0x30] sm:$0xff] %v335
      %720 = vst [vmem:[#allocation2 + $0x38] sm:$0xff] %v336
      %721 = vst [vmem:[#allocation2 + $0x40] sm:$0xff] %v337
      %722 = vst [vmem:[#allocation2 + $0x48] sm:$0xff] %v338
      %723 = vst [vmem:[#allocation2 + $0x50] sm:$0xff] %v339
      %724 = vst [vmem:[#allocation2 + $0x58] sm:$0xff] %v340
      %725 = vst [vmem:[#allocation2 + $0x60] sm:$0xff] %v341
      %726 = vst [vmem:[#allocation2 + $0x68] sm:$0xff] %v342
      %727 = vst [vmem:[#allocation2 + $0x70] sm:$0xff] %v343
      %728 = vst [vmem:[#allocation2 + $0x78] sm:$0xff] %v344
      %729 = vst [vmem:[#allocation2 + $0x80] sm:$0xff] %v345
      %730 = vst [vmem:[#allocation2 + $0x88] sm:$0xff] %v346
      %731 = vst [vmem:[#allocation2 + $0x90] sm:$0xff] %v347
      %732 = vst [vmem:[#allocation2 + $0x98] sm:$0xff] %v348
      %733 = vst [vmem:[#allocation2 + $0xa0] sm:$0xff] %v349
      %734 = vst [vmem:[#allocation2 + $0xa8] sm:$0xff] %v350
      %735 = vst [vmem:[#allocation2 + $0xb0] sm:$0xff] %v351
      %736 = vst [vmem:[#allocation2 + $0xb8] sm:$0xff] %v352
      %737 = vst [vmem:[#allocation2 + $0xc0] sm:$0xff] %v353
      %738 = vst [vmem:[#allocation2 + $0xc8] sm:$0xff] %v354
      %739 = vst [vmem:[#allocation2 + $0xd0] sm:$0xff] %v355
      %740 = vst [vmem:[#allocation2 + $0xd8] sm:$0xff] %v356
      %741 = vst [vmem:[#allocation2 + $0xe0] sm:$0xff] %v357
      %742 = vst [vmem:[#allocation2 + $0xe8] sm:$0xff] %v358
      %743 = vst [vmem:[#allocation2 + $0xf0] sm:$0xff] %v359
      %744 = vst [vmem:[#allocation2 + $0xf8] sm:$0xff] %v360
      %745 = vst [vmem:[#allocation2 + $0x100] sm:$0xff] %v361
      %746 = vst [vmem:[#allocation2 + $0x108] sm:$0xff] %v362
      %747 = vst [vmem:[#allocation2 + $0x110] sm:$0xff] %v363
      %748 = vst [vmem:[#allocation2 + $0x118] sm:$0xff] %v364
      %749 = vst [vmem:[#allocation2 + $0x120] sm:$0xff] %v365
      %750 = vst [vmem:[#allocation2 + $0x128] sm:$0xff] %v366
      %751 = vst [vmem:[#allocation2 + $0x130] sm:$0xff] %v367
      %752 = vst [vmem:[#allocation2 + $0x138] sm:$0xff] %v368
      %753 = vst [vmem:[#allocation2 + $0x140] sm:$0xff] %v369
      %754 = vst [vmem:[#allocation2 + $0x148] sm:$0xff] %v370
      %755 = vst [vmem:[#allocation2 + $0x150] sm:$0xff] %v371
      %756 = vst [vmem:[#allocation2 + $0x158] sm:$0xff] %v372
      %757 = vst [vmem:[#allocation2 + $0x160] sm:$0xff] %v373
      %758 = vst [vmem:[#allocation2 + $0x168] sm:$0xff] %v374
      %759 = vst [vmem:[#allocation2 + $0x170] sm:$0xff] %v375
      %760 = vst [vmem:[#allocation2 + $0x178] sm:$0xff] %v376
      %761 = vst [vmem:[#allocation2 + $0x180] sm:$0xff] %v377
      %762 = vst [vmem:[#allocation2 + $0x188] sm:$0xff] %v378
      %763 = vst [vmem:[#allocation2 + $0x190] sm:$0xff] %v379
      %764 = vst [vmem:[#allocation2 + $0x198] sm:$0xff] %v380
      %765 = vst [vmem:[#allocation2 + $0x1a0] sm:$0xff] %v381
      %766 = vst [vmem:[#allocation2 + $0x1a8] sm:$0xff] %v382
      %767 = vst [vmem:[#allocation2 + $0x1b0] sm:$0xff] %v383
      %768 = vst [vmem:[#allocation2 + $0x1b8] sm:$0xff] %v384
      %769 = vst [vmem:[#allocation2 + $0x1c0] sm:$0xff] %v385
      %770 = vst [vmem:[#allocation2 + $0x1c8] sm:$0xff] %v386
      %771 = vst [vmem:[#allocation2 + $0x1d0] sm:$0xff] %v387
      %772 = vst [vmem:[#allocation2 + $0x1d8] sm:$0xff] %v388
      %773 = vst [vmem:[#allocation2 + $0x1e0] sm:$0xff] %v389
      %774 = vst [vmem:[#allocation2 + $0x1e8] sm:$0xff] %v390
      %775 = vst [vmem:[#allocation2 + $0x1f0] sm:$0xff] %v391
      %776 = vst [vmem:[#allocation2 + $0x1f8] sm:$0xff] %v392
      %777 = vst [vmem:[#allocation2 + $0x200] sm:$0xff] %v393
      %778 = vst [vmem:[#allocation2 + $0x208] sm:$0xff] %v394
      %779 = vst [vmem:[#allocation2 + $0x210] sm:$0xff] %v395
      %780 = vst [vmem:[#allocation2 + $0x218] sm:$0xff] %v396
      %781 = vst [vmem:[#allocation2 + $0x220] sm:$0xff] %v397
      %782 = vst [vmem:[#allocation2 + $0x228] sm:$0xff] %v398
      %783 = vst [vmem:[#allocation2 + $0x230] sm:$0xff] %v399
      %784 = vst [vmem:[#allocation2 + $0x238] sm:$0xff] %v400
      %785 = vst [vmem:[#allocation2 + $0x240] sm:$0xff] %v401
      %786 = vst [vmem:[#allocation2 + $0x248] sm:$0xff] %v402
      %787 = vst [vmem:[#allocation2 + $0x250] sm:$0xff] %v403
      %788 = vst [vmem:[#allocation2 + $0x258] sm:$0xff] %v404
      %789 = vst [vmem:[#allocation2 + $0x260] sm:$0xff] %v405
      %790 = vst [vmem:[#allocation2 + $0x268] sm:$0xff] %v406
      %791 = vst [vmem:[#allocation2 + $0x270] sm:$0xff] %v407
      %792 = vst [vmem:[#allocation2 + $0x278] sm:$0xff] %v408
      %793 = vst [vmem:[#allocation2 + $0x280] sm:$0xff] %v409
      %794 = vst [vmem:[#allocation2 + $0x288] sm:$0xff] %v410
      %795 = vst [vmem:[#allocation2 + $0x290] sm:$0xff] %v411
      %796 = vst [vmem:[#allocation2 + $0x298] sm:$0xff] %v412
      %797 = vst [vmem:[#allocation2 + $0x2a0] sm:$0xff] %v413
      %798 = vst [vmem:[#allocation2 + $0x2a8] sm:$0xff] %v414
      %799 = vst [vmem:[#allocation2 + $0x2b0] sm:$0xff] %v415
      %800 = vst [vmem:[#allocation2 + $0x2b8] sm:$0xff] %v416
      %801 = vst [vmem:[#allocation2 + $0x2c0] sm:$0xff] %v417
      %802 = vst [vmem:[#allocation2 + $0x2c8] sm:$0xff] %v418
      %803 = vst [vmem:[#allocation2 + $0x2d0] sm:$0xff] %v419
      %804 = vst [vmem:[#allocation2 + $0x2d8] sm:$0xff] %v420
      %805 = vst [vmem:[#allocation2 + $0x2e0] sm:$0xff] %v421
      %806 = vst [vmem:[#allocation2 + $0x2e8] sm:$0xff] %v422
      %807 = vst [vmem:[#allocation2 + $0x2f0] sm:$0xff] %v423
      %808 = vst [vmem:[#allocation2 + $0x2f8] sm:$0xff] %v424
      %809 = vst [vmem:[#allocation2 + $0x300] sm:$0xff] %v425
      %810 = vst [vmem:[#allocation2 + $0x308] sm:$0xff] %v426
      %811 = vst [vmem:[#allocation2 + $0x310] sm:$0xff] %v427
      %812 = vst [vmem:[#allocation2 + $0x318] sm:$0xff] %v428
      %813 = vst [vmem:[#allocation2 + $0x320] sm:$0xff] %v429
      %814 = vst [vmem:[#allocation2 + $0x328] sm:$0xff] %v430
      %815 = vst [vmem:[#allocation2 + $0x330] sm:$0xff] %v431
      %816 = vst [vmem:[#allocation2 + $0x338] sm:$0xff] %v432
      %817 = vst [vmem:[#allocation2 + $0x340] sm:$0xff] %v433
      %818 = vst [vmem:[#allocation2 + $0x348] sm:$0xff] %v434
      %819 = vst [vmem:[#allocation2 + $0x350] sm:$0xff] %v435
      %820 = vst [vmem:[#allocation2 + $0x358] sm:$0xff] %v436
      %821 = vst [vmem:[#allocation2 + $0x360] sm:$0xff] %v437
      %822 = vst [vmem:[#allocation2 + $0x368] sm:$0xff] %v438
      %823 = vst [vmem:[#allocation2 + $0x370] sm:$0xff] %v439
      %824 = vst [vmem:[#allocation2 + $0x378] sm:$0xff] %v440
      %825 = vst [vmem:[#allocation2 + $0x380] sm:$0xff] %v441
      %826 = vst [vmem:[#allocation2 + $0x388] sm:$0xff] %v442
      %827 = vst [vmem:[#allocation2 + $0x390] sm:$0xff] %v443
      %828 = vst [vmem:[#allocation2 + $0x398] sm:$0xff] %v444
      %829 = vst [vmem:[#allocation2 + $0x3a0] sm:$0xff] %v445
      %830 = vst [vmem:[#allocation2 + $0x3a8] sm:$0xff] %v446
      %831 = vst [vmem:[#allocation2 + $0x3b0] sm:$0xff] %v447
      %832 = vst [vmem:[#allocation2 + $0x3b8] sm:$0xff] %v448
      %833 = vst [vmem:[#allocation2 + $0x3c0] sm:$0xff] %v449
      %834 = vst [vmem:[#allocation2 + $0x3c8] sm:$0xff] %v450
      %835 = vst [vmem:[#allocation2 + $0x3d0] sm:$0xff] %v451
      %836 = vst [vmem:[#allocation2 + $0x3d8] sm:$0xff] %v452
      %837 = vst [vmem:[#allocation2 + $0x3e0] sm:$0xff] %v453
      %838 = vst [vmem:[#allocation2 + $0x3e8] sm:$0xff] %v454
      %839 = vst [vmem:[#allocation2 + $0x3f0] sm:$0xff] %v455
      %840 = vst [vmem:[#allocation2 + $0x3f8] sm:$0xff] %v456
      %841 = vst [vmem:[#allocation2 + $0x400] sm:$0xff] %v457
      %842 = vst [vmem:[#allocation2 + $0x408] sm:$0xff] %v458
      %843 = vst [vmem:[#allocation2 + $0x410] sm:$0xff] %v459
      %844 = vst [vmem:[#allocation2 + $0x418] sm:$0xff] %v460
      %845 = vst [vmem:[#allocation2 + $0x420] sm:$0xff] %v461
      %846 = vst [vmem:[#allocation2 + $0x428] sm:$0xff] %v462
      %847 = vst [vmem:[#allocation2 + $0x430] sm:$0xff] %v463
      %848 = vst [vmem:[#allocation2 + $0x438] sm:$0xff] %v464
      %849 = vst [vmem:[#allocation2 + $0x440] sm:$0xff] %v465
      %850 = vst [vmem:[#allocation2 + $0x448] sm:$0xff] %v466
      %851 = vst [vmem:[#allocation2 + $0x450] sm:$0xff] %v467
      %852 = vst [vmem:[#allocation2 + $0x458] sm:$0xff] %v468
      %853 = vst [vmem:[#allocation2 + $0x460] sm:$0xff] %v469
      %854 = vst [vmem:[#allocation2 + $0x468] sm:$0xff] %v470
      %855 = vst [vmem:[#allocation2 + $0x470] sm:$0xff] %v471
      %856 = vst [vmem:[#allocation2 + $0x478] sm:$0xff] %v472
      %857 = vst [vmem:[#allocation2 + $0x480] sm:$0xff] %v473
      %858 = vst [vmem:[#allocation2 + $0x488] sm:$0xff] %v474
      %859 = vst [vmem:[#allocation2 + $0x490] sm:$0xff] %v475
      %860 = vst [vmem:[#allocation2 + $0x498] sm:$0xff] %v476
      %861 = vst [vmem:[#allocation2 + $0x4a0] sm:$0xff] %v477
      %862 = vst [vmem:[#allocation2 + $0x4a8] sm:$0xff] %v478
      %863 = vst [vmem:[#allocation2 + $0x4b0] sm:$0xff] %v479
      %864 = vst [vmem:[#allocation2 + $0x4b8] sm:$0xff] %v480
      %865 = vst [vmem:[#allocation2 + $0x4c0] sm:$0xff] %v481
      %866 = vst [vmem:[#allocation2 + $0x4c8] sm:$0xff] %v482
      %867 = vst [vmem:[#allocation2 + $0x4d0] sm:$0xff] %v483
      %868 = vst [vmem:[#allocation2 + $0x4d8] sm:$0xff] %v484
      %869 = vst [vmem:[#allocation2 + $0x4e0] sm:$0xff] %v485
      %870 = vst [vmem:[#allocation2 + $0x4e8] sm:$0xff] %v486
      %871 = vst [vmem:[#allocation2 + $0x4f0] sm:$0xff] %v487
      %872 = vst [vmem:[#allocation2 + $0x4f8] sm:$0xff] %v488
      %873 = vst [vmem:[#allocation2 + $0x500] sm:$0xff] %v489
      %874 = vst [vmem:[#allocation2 + $0x508] sm:$0xff] %v490
      %875 = vst [vmem:[#allocation2 + $0x510] sm:$0xff] %v491
      %876 = vst [vmem:[#allocation2 + $0x518] sm:$0xff] %v492
      %877 = vst [vmem:[#allocation2 + $0x520] sm:$0xff] %v493
      %878 = vst [vmem:[#allocation2 + $0x528] sm:$0xff] %v494
      %879 = vst [vmem:[#allocation2 + $0x530] sm:$0xff] %v495
      %880 = vst [vmem:[#allocation2 + $0x538] sm:$0xff] %v496
      %881 = vst [vmem:[#allocation2 + $0x540] sm:$0xff] %v497
      %882 = vst [vmem:[#allocation2 + $0x548] sm:$0xff] %v498
      %883 = vst [vmem:[#allocation2 + $0x550] sm:$0xff] %v499
      %884 = vst [vmem:[#allocation2 + $0x558] sm:$0xff] %v500
      %885 = vst [vmem:[#allocation2 + $0x560] sm:$0xff] %v501
      %886 = vst [vmem:[#allocation2 + $0x568] sm:$0xff] %v502
      %887 = vst [vmem:[#allocation2 + $0x570] sm:$0xff] %v503
      %888 = vst [vmem:[#allocation2 + $0x578] sm:$0xff] %v504
      %889 = vst [vmem:[#allocation2 + $0x580] sm:$0xff] %v505
      %890 = vst [vmem:[#allocation2 + $0x588] sm:$0xff] %v506
      %891 = vst [vmem:[#allocation2 + $0x590] sm:$0xff] %v507
      %892 = vst [vmem:[#allocation2 + $0x598] sm:$0xff] %v508
      %893 = vst [vmem:[#allocation2 + $0x5a0] sm:$0xff] %v509
      %894 = vst [vmem:[#allocation2 + $0x5a8] sm:$0xff] %v510
      %895 = vst [vmem:[#allocation2 + $0x5b0] sm:$0xff] %v511
      %896 = vst [vmem:[#allocation2 + $0x5b8] sm:$0xff] %v512
      %897 = vst [vmem:[#allocation2 + $0x5c0] sm:$0xff] %v513
      %898 = vst [vmem:[#allocation2 + $0x5c8] sm:$0xff] %v514
      %899 = vst [vmem:[#allocation2 + $0x5d0] sm:$0xff] %v515
      %900 = vst [vmem:[#allocation2 + $0x5d8] sm:$0xff] %v516
      %901 = vst [vmem:[#allocation2 + $0x5e0] sm:$0xff] %v517
      %902 = vst [vmem:[#allocation2 + $0x5e8] sm:$0xff] %v518
      %903 = vst [vmem:[#allocation2 + $0x5f0] sm:$0xff] %v519
      %904 = vst [vmem:[#allocation2 + $0x5f8] sm:$0xff] %v520
      %905 = vst [vmem:[#allocation2 + $0x600] sm:$0xff] %v521
      %906 = vst [vmem:[#allocation2 + $0x608] sm:$0xff] %v522
      %907 = vst [vmem:[#allocation2 + $0x610] sm:$0xff] %v523
      %908 = vst [vmem:[#allocation2 + $0x618] sm:$0xff] %v524
      %909 = vst [vmem:[#allocation2 + $0x620] sm:$0xff] %v525
      %910 = vst [vmem:[#allocation2 + $0x628] sm:$0xff] %v526
      %911 = vst [vmem:[#allocation2 + $0x630] sm:$0xff] %v527
      %912 = vst [vmem:[#allocation2 + $0x638] sm:$0xff] %v528
      %913 = vst [vmem:[#allocation2 + $0x640] sm:$0xff] %v529
      %914 = vst [vmem:[#allocation2 + $0x648] sm:$0xff] %v530
      %915 = vst [vmem:[#allocation2 + $0x650] sm:$0xff] %v531
      %916 = vst [vmem:[#allocation2 + $0x658] sm:$0xff] %v532
      %917 = vst [vmem:[#allocation2 + $0x660] sm:$0xff] %v533
      %918 = vst [vmem:[#allocation2 + $0x668] sm:$0xff] %v534
      %919 = vst [vmem:[#allocation2 + $0x670] sm:$0xff] %v535
      %920 = vst [vmem:[#allocation2 + $0x678] sm:$0xff] %v536
      %921 = vst [vmem:[#allocation2 + $0x680] sm:$0xff] %v537
      %922 = vst [vmem:[#allocation2 + $0x688] sm:$0xff] %v538
      %923 = vst [vmem:[#allocation2 + $0x690] sm:$0xff] %v539
      %924 = vst [vmem:[#allocation2 + $0x698] sm:$0xff] %v540
      %925 = vst [vmem:[#allocation2 + $0x6a0] sm:$0xff] %v541
      %926 = vst [vmem:[#allocation2 + $0x6a8] sm:$0xff] %v542
      %927 = vst [vmem:[#allocation2 + $0x6b0] sm:$0xff] %v543
      %928 = vst [vmem:[#allocation2 + $0x6b8] sm:$0xff] %v544
      %929 = vst [vmem:[#allocation2 + $0x6c0] sm:$0xff] %v545
      %930 = vst [vmem:[#allocation2 + $0x6c8] sm:$0xff] %v546
      %931 = vst [vmem:[#allocation2 + $0x6d0] sm:$0xff] %v547
      %932 = vst [vmem:[#allocation2 + $0x6d8] sm:$0xff] %v548
      %933 = vst [vmem:[#allocation2 + $0x6e0] sm:$0xff] %v549
      %934 = vst [vmem:[#allocation2 + $0x6e8] sm:$0xff] %v550
      %935 = vst [vmem:[#allocation2 + $0x6f0] sm:$0xff] %v551
      %936 = vst [vmem:[#allocation2 + $0x6f8] sm:$0xff] %v552
      %937 = vst [vmem:[#allocation2 + $0x700] sm:$0xff] %v553
      %938 = vst [vmem:[#allocation2 + $0x708] sm:$0xff] %v554
      %939 = vst [vmem:[#allocation2 + $0x710] sm:$0xff] %v555
      %940 = vst [vmem:[#allocation2 + $0x718] sm:$0xff] %v556
      %941 = vst [vmem:[#allocation2 + $0x720] sm:$0xff] %v557
      %942 = vst [vmem:[#allocation2 + $0x728] sm:$0xff] %v558
      %943 = vst [vmem:[#allocation2 + $0x730] sm:$0xff] %v559
      %944 = vst [vmem:[#allocation2 + $0x738] sm:$0xff] %v560
      %945 = vst [vmem:[#allocation2 + $0x740] sm:$0xff] %v561
      %946 = vst [vmem:[#allocation2 + $0x748] sm:$0xff] %v562
      %947 = vst [vmem:[#allocation2 + $0x750] sm:$0xff] %v563
      %948 = vst [vmem:[#allocation2 + $0x758] sm:$0xff] %v564
      %949 = vst [vmem:[#allocation2 + $0x760] sm:$0xff] %v565
      %950 = vst [vmem:[#allocation2 + $0x768] sm:$0xff] %v566
      %951 = vst [vmem:[#allocation2 + $0x770] sm:$0xff] %v567
      %952 = vst [vmem:[#allocation2 + $0x778] sm:$0xff] %v568
      %953 = vst [vmem:[#allocation2 + $0x780] sm:$0xff] %v569
      %954 = vst [vmem:[#allocation2 + $0x788] sm:$0xff] %v570
      %955 = vst [vmem:[#allocation2 + $0x790] sm:$0xff] %v571
      %956 = vst [vmem:[#allocation2 + $0x798] sm:$0xff] %v572
      %957 = vst [vmem:[#allocation2 + $0x7a0] sm:$0xff] %v573
      %958 = vst [vmem:[#allocation2 + $0x7a8] sm:$0xff] %v574
      %959 = vst [vmem:[#allocation2 + $0x7b0] sm:$0xff] %v575
      %960 = vst [vmem:[#allocation2 + $0x7b8] sm:$0xff] %v576
      %961 = vst [vmem:[#allocation2 + $0x7c0] sm:$0xff] %v577
      %962 = vst [vmem:[#allocation2 + $0x7c8] sm:$0xff] %v578
      %963 = vst [vmem:[#allocation2 + $0x7d0] sm:$0xff] %v579
      %964 = vst [vmem:[#allocation2 + $0x7d8] sm:$0xff] %v580
      %965 = vst [vmem:[#allocation2 + $0x7e0] sm:$0xff] %v581
      %966 = vst [vmem:[#allocation2 + $0x7e8] sm:$0xff] %v582
      %967 = vst [vmem:[#allocation2 + $0x7f0] sm:$0xff] %v583
      %968 = vst [vmem:[#allocation2 + $0x7f8] sm:$0xff] %v584
      %969 = vst [vmem:[#allocation2 + $0x800] sm:$0xff] %v585
      %970 = vst [vmem:[#allocation2 + $0x808] sm:$0xff] %v586
      %971 = vst [vmem:[#allocation2 + $0x810] sm:$0xff] %v587
      %972 = vst [vmem:[#allocation2 + $0x818] sm:$0xff] %v588
      %973 = vst [vmem:[#allocation2 + $0x820] sm:$0xff] %v589
      %974 = vst [vmem:[#allocation2 + $0x828] sm:$0xff] %v590
      %975 = vst [vmem:[#allocation2 + $0x830] sm:$0xff] %v591
      %976 = vst [vmem:[#allocation2 + $0x838] sm:$0xff] %v592
      %977 = vst [vmem:[#allocation2 + $0x840] sm:$0xff] %v593
      %978 = vst [vmem:[#allocation2 + $0x848] sm:$0xff] %v594
      %979 = vst [vmem:[#allocation2 + $0x850] sm:$0xff] %v595
      %980 = vst [vmem:[#allocation2 + $0x858] sm:$0xff] %v596
      %981 = vst [vmem:[#allocation2 + $0x860] sm:$0xff] %v597
      %982 = vst [vmem:[#allocation2 + $0x868] sm:$0xff] %v598
      %983 = vst [vmem:[#allocation2 + $0x870] sm:$0xff] %v599
      %984 = vst [vmem:[#allocation2 + $0x878] sm:$0xff] %v600
      %985 = vst [vmem:[#allocation2 + $0x880] sm:$0xff] %v601
      %986 = vst [vmem:[#allocation2 + $0x888] sm:$0xff] %v602
      %987 = vst [vmem:[#allocation2 + $0x890] sm:$0xff] %v603
      %988 = vst [vmem:[#allocation2 + $0x898] sm:$0xff] %v604
      %989 = vst [vmem:[#allocation2 + $0x8a0] sm:$0xff] %v605
      %990 = vst [vmem:[#allocation2 + $0x8a8] sm:$0xff] %v606
      %991 = vst [vmem:[#allocation2 + $0x8b0] sm:$0xff] %v607
      %992 = vst [vmem:[#allocation2 + $0x8b8] sm:$0xff] %v608
      %993 = vst [vmem:[#allocation2 + $0x8c0] sm:$0xff] %v609
      %994 = vst [vmem:[#allocation2 + $0x8c8] sm:$0xff] %v610
      %995 = vst [vmem:[#allocation2 + $0x8d0] sm:$0xff] %v611
      %996 = vst [vmem:[#allocation2 + $0x8d8] sm:$0xff] %v612
      %997 = vst [vmem:[#allocation2 + $0x8e0] sm:$0xff] %v613
      %998 = vst [vmem:[#allocation2 + $0x8e8] sm:$0xff] %v614
      %999 = vst [vmem:[#allocation2 + $0x8f0] sm:$0xff] %v615
      %1000 = vst [vmem:[#allocation2 + $0x8f8] sm:$0xff] %v616
      %1001 = vst [vmem:[#allocation2 + $0x900] sm:$0xff] %v617
      %1002 = vst [vmem:[#allocation2 + $0x908] sm:$0xff] %v618
      %1003 = vst [vmem:[#allocation2 + $0x910] sm:$0xff] %v619
      %1004 = vst [vmem:[#allocation2 + $0x918] sm:$0xff] %v620
      %1005 = vst [vmem:[#allocation2 + $0x920] sm:$0xff] %v621
      %1006 = vst [vmem:[#allocation2 + $0x928] sm:$0xff] %v622
      %1007 = vst [vmem:[#allocation2 + $0x930] sm:$0xff] %v623
      %1008 = vst [vmem:[#allocation2 + $0x938] sm:$0xff] %v624
      %1009 = vst [vmem:[#allocation2 + $0x940] sm:$0xff] %v625
      %1010 = vst [vmem:[#allocation2 + $0x948] sm:$0xff] %v626
      %1011 = vst [vmem:[#allocation2 + $0x950] sm:$0xff] %v627
      %1012 = vst [vmem:[#allocation2 + $0x958] sm:$0xff] %v628
      %1013 = vst [vmem:[#allocation2 + $0x960] sm:$0xff] %v629
      %1014 = vst [vmem:[#allocation2 + $0x968] sm:$0xff] %v630
      %1015 = vst [vmem:[#allocation2 + $0x970] sm:$0xff] %v631
      %1016 = vst [vmem:[#allocation2 + $0x978] sm:$0xff] %v632
      %1017 = vst [vmem:[#allocation2 + $0x980] sm:$0xff] %v633
      %1018 = vst [vmem:[#allocation2 + $0x988] sm:$0xff] %v634
      %1019 = vst [vmem:[#allocation2 + $0x990] sm:$0xff] %v635
      %1020 = vst [vmem:[#allocation2 + $0x998] sm:$0xff] %v636
      %1021 = vst [vmem:[#allocation2 + $0x9a0] sm:$0xff] %v637
      %1022 = vst [vmem:[#allocation2 + $0x9a8] sm:$0xff] %v638
      %1023 = vst [vmem:[#allocation2 + $0x9b0] sm:$0xff] %v639
      %1024 = vst [vmem:[#allocation2 + $0x9b8] sm:$0xff] %v640
      %1025 = vst [vmem:[#allocation2 + $0x9c0] sm:$0xff] %v641
      %1026 = vst [vmem:[#allocation2 + $0x9c8] sm:$0xff] %v642
      %1027 = vst [vmem:[#allocation2 + $0x9d0] sm:$0xff] %v643
      %1028 = vst [vmem:[#allocation2 + $0x9d8] sm:$0xff] %v644
      %1029 = vst [vmem:[#allocation2 + $0x9e0] sm:$0xff] %v645
      %1030 = vst [vmem:[#allocation2 + $0x9e8] sm:$0xff] %v646
      %1031 = vst [vmem:[#allocation2 + $0x9f0] sm:$0xff] %v647
      %1032 = vst [vmem:[#allocation2 + $0x9f8] sm:$0xff] %v648
      %1033 = vst [vmem:[#allocation2 + $0xa00] sm:$0xff] %v649
      %1034 = vst [vmem:[#allocation2 + $0xa08] sm:$0xff] %v650
      %1035 = vst [vmem:[#allocation2 + $0xa10] sm:$0xff] %v651
      %1036 = vst [vmem:[#allocation2 + $0xa18] sm:$0xff] %v652
      %1037 = vst [vmem:[#allocation2 + $0xa20] sm:$0xff] %v653
      %1038 = vst [vmem:[#allocation2 + $0xa28] sm:$0xff] %v654
      %1039 = vst [vmem:[#allocation2 + $0xa30] sm:$0xff] %v655
      %1040 = vst [vmem:[#allocation2 + $0xa38] sm:$0xff] %v656
      %1041 = vst [vmem:[#allocation2 + $0xa40] sm:$0xff] %v657
      %1042 = vst [vmem:[#allocation2 + $0xa48] sm:$0xff] %v658
      %1043 = vst [vmem:[#allocation2 + $0xa50] sm:$0xff] %v659
      %1044 = vst [vmem:[#allocation2 + $0xa58] sm:$0xff] %v660
      %1045 = vst [vmem:[#allocation2 + $0xa60] sm:$0xff] %v661
      %1046 = vst [vmem:[#allocation2 + $0xa68] sm:$0xff] %v662
      %1047 = vst [vmem:[#allocation2 + $0xa70] sm:$0xff] %v663
      %1048 = vst [vmem:[#allocation2 + $0xa78] sm:$0xff] %v664
      %1049 = vst [vmem:[#allocation2 + $0xa80] sm:$0xff] %v665
      %1050 = vst [vmem:[#allocation2 + $0xa88] sm:$0xff] %v666
      %1051 = vst [vmem:[#allocation2 + $0xa90] sm:$0xff] %v667
      %1052 = vst [vmem:[#allocation2 + $0xa98] sm:$0xff] %v668
      %1053 = vst [vmem:[#allocation2 + $0xaa0] sm:$0xff] %v669
      %1054 = vst [vmem:[#allocation2 + $0xaa8] sm:$0xff] %v670
      %1055 = vst [vmem:[#allocation2 + $0xab0] sm:$0xff] %v671
      %1056 = vst [vmem:[#allocation2 + $0xab8] sm:$0xff] %v672
      %1057 = vst [vmem:[#allocation2 + $0xac0] sm:$0xff] %v673
      %1058 = vst [vmem:[#allocation2 + $0xac8] sm:$0xff] %v674
      %1059 = vst [vmem:[#allocation2 + $0xad0] sm:$0xff] %v675
      %1060 = vst [vmem:[#allocation2 + $0xad8] sm:$0xff] %v676
      %1061 = vst [vmem:[#allocation2 + $0xae0] sm:$0xff] %v677
      %1062 = vst [vmem:[#allocation2 + $0xae8] sm:$0xff] %v678
      %1063 = vst [vmem:[#allocation2 + $0xaf0] sm:$0xff] %v679
      %1064 = vst [vmem:[#allocation2 + $0xaf8] sm:$0xff] %v680
      %1065 = vst [vmem:[#allocation2 + $0xb00] sm:$0xff] %v681
      %1066 = vst [vmem:[#allocation2 + $0xb08] sm:$0xff] %v682
      %1067 = vst [vmem:[#allocation2 + $0xb10] sm:$0xff] %v683
      %1068 = vst [vmem:[#allocation2 + $0xb18] sm:$0xff] %v684
      %1069 = vst [vmem:[#allocation2 + $0xb20] sm:$0xff] %v685
      %1070 = vst [vmem:[#allocation2 + $0xb28] sm:$0xff] %v686
      %1071 = vst [vmem:[#allocation2 + $0xb30] sm:$0xff] %v687
      %1072 = vst [vmem:[#allocation2 + $0xb38] sm:$0xff] %v688
      %1073 = vst [vmem:[#allocation2 + $0xb40] sm:$0xff] %v689
      %1074 = vst [vmem:[#allocation2 + $0xb48] sm:$0xff] %v690
      %1075 = vst [vmem:[#allocation2 + $0xb50] sm:$0xff] %v691
      %1076 = vst [vmem:[#allocation2 + $0xb58] sm:$0xff] %v692
      %1077 = vst [vmem:[#allocation2 + $0xb60] sm:$0xff] %v693
      %1078 = vst [vmem:[#allocation2 + $0xb68] sm:$0xff] %v694
      %1079 = vst [vmem:[#allocation2 + $0xb70] sm:$0xff] %v695
      %1080 = vst [vmem:[#allocation2 + $0xb78] sm:$0xff] %v696
      %1081 = vst [vmem:[#allocation2 + $0xb80] sm:$0xff] %v697
      %1082 = vst [vmem:[#allocation2 + $0xb88] sm:$0xff] %v698
      %1083 = vst [vmem:[#allocation2 + $0xb90] sm:$0xff] %v699
      %1084 = vst [vmem:[#allocation2 + $0xb98] sm:$0xff] %v700
      %1085 = vst [vmem:[#allocation2 + $0xba0] sm:$0xff] %v701
      %1086 = vst [vmem:[#allocation2 + $0xba8] sm:$0xff] %v702
      %1087 = vst [vmem:[#allocation2 + $0xbb0] sm:$0xff] %v703
      %1088 = vst [vmem:[#allocation2 + $0xbb8] sm:$0xff] %v704
      %1089 = vst [vmem:[#allocation2 + $0xbc0] sm:$0xff] %v705
      %1090 = vst [vmem:[#allocation2 + $0xbc8] sm:$0xff] %v706
      %1091 = vst [vmem:[#allocation2 + $0xbd0] sm:$0xff] %v707
      %1092 = vst [vmem:[#allocation2 + $0xbd8] sm:$0xff] %v708
      %1093 = vst [vmem:[#allocation2 + $0xbe0] sm:$0xff] %v709
      %1094 = vst [vmem:[#allocation2 + $0xbe8] sm:$0xff] %v710
      %1095 = vst [vmem:[#allocation2 + $0xbf0] sm:$0xff] %v711
      %1096 = vst [vmem:[#allocation2 + $0xbf8] sm:$0xff] %v712
      %v1097 = vld [vmem:[#allocation11] sm:$0xff]
      %v1098 = vld [vmem:[#allocation11 + $0x8] sm:$0xff]
      %v1099 = vld [vmem:[#allocation11 + $0x10] sm:$0xff]
      %v1100 = vld [vmem:[#allocation11 + $0x18] sm:$0xff]
      %v1101 = vld [vmem:[#allocation11 + $0x20] sm:$0xff]
      %v1102 = vld [vmem:[#allocation11 + $0x28] sm:$0xff]
      %v1103 = vld [vmem:[#allocation11 + $0x30] sm:$0xff]
      %v1104 = vld [vmem:[#allocation11 + $0x38] sm:$0xff]
      %v1105 = vld [vmem:[#allocation11 + $0x40] sm:$0xff]
      %v1106 = vld [vmem:[#allocation11 + $0x48] sm:$0xff]
      %v1107 = vld [vmem:[#allocation11 + $0x50] sm:$0xff]
      %v1108 = vld [vmem:[#allocation11 + $0x58] sm:$0xff]
      %v1109 = vld [vmem:[#allocation11 + $0x60] sm:$0xff]
      %v1110 = vld [vmem:[#allocation11 + $0x68] sm:$0xff]
      %v1111 = vld [vmem:[#allocation11 + $0x70] sm:$0xff]
      %v1112 = vld [vmem:[#allocation11 + $0x78] sm:$0xff]
      %v1113 = vld [vmem:[#allocation11 + $0x80] sm:$0xff]
      %v1114 = vld [vmem:[#allocation11 + $0x88] sm:$0xff]
      %v1115 = vld [vmem:[#allocation11 + $0x90] sm:$0xff]
      %v1116 = vld [vmem:[#allocation11 + $0x98] sm:$0xff]
      %v1117 = vld [vmem:[#allocation11 + $0xa0] sm:$0xff]
      %v1118 = vld [vmem:[#allocation11 + $0xa8] sm:$0xff]
      %v1119 = vld [vmem:[#allocation11 + $0xb0] sm:$0xff]
      %v1120 = vld [vmem:[#allocation11 + $0xb8] sm:$0xff]
      %v1121 = vld [vmem:[#allocation11 + $0xc0] sm:$0xff]
      %v1122 = vld [vmem:[#allocation11 + $0xc8] sm:$0xff]
      %v1123 = vld [vmem:[#allocation11 + $0xd0] sm:$0xff]
      %v1124 = vld [vmem:[#allocation11 + $0xd8] sm:$0xff]
      %v1125 = vld [vmem:[#allocation11 + $0xe0] sm:$0xff]
      %v1126 = vld [vmem:[#allocation11 + $0xe8] sm:$0xff]
      %v1127 = vld [vmem:[#allocation11 + $0xf0] sm:$0xff]
      %v1128 = vld [vmem:[#allocation11 + $0xf8] sm:$0xff]
      %v1129 = vld [vmem:[#allocation11 + $0x100] sm:$0xff]
      %v1130 = vld [vmem:[#allocation11 + $0x108] sm:$0xff]
      %v1131 = vld [vmem:[#allocation11 + $0x110] sm:$0xff]
      %v1132 = vld [vmem:[#allocation11 + $0x118] sm:$0xff]
      %v1133 = vld [vmem:[#allocation11 + $0x120] sm:$0xff]
      %v1134 = vld [vmem:[#allocation11 + $0x128] sm:$0xff]
      %v1135 = vld [vmem:[#allocation11 + $0x130] sm:$0xff]
      %v1136 = vld [vmem:[#allocation11 + $0x138] sm:$0xff]
      %v1137 = vld [vmem:[#allocation11 + $0x140] sm:$0xff]
      %v1138 = vld [vmem:[#allocation11 + $0x148] sm:$0xff]
      %v1139 = vld [vmem:[#allocation11 + $0x150] sm:$0xff]
      %v1140 = vld [vmem:[#allocation11 + $0x158] sm:$0xff]
      %v1141 = vld [vmem:[#allocation11 + $0x160] sm:$0xff]
      %v1142 = vld [vmem:[#allocation11 + $0x168] sm:$0xff]
      %v1143 = vld [vmem:[#allocation11 + $0x170] sm:$0xff]
      %v1144 = vld [vmem:[#allocation11 + $0x178] sm:$0xff]
      %v1145 = vld [vmem:[#allocation11 + $0x180] sm:$0xff]
      %v1146 = vld [vmem:[#allocation11 + $0x188] sm:$0xff]
      %v1147 = vld [vmem:[#allocation11 + $0x190] sm:$0xff]
      %v1148 = vld [vmem:[#allocation11 + $0x198] sm:$0xff]
      %v1149 = vld [vmem:[#allocation11 + $0x1a0] sm:$0xff]
      %v1150 = vld [vmem:[#allocation11 + $0x1a8] sm:$0xff]
      %v1151 = vld [vmem:[#allocation11 + $0x1b0] sm:$0xff]
      %v1152 = vld [vmem:[#allocation11 + $0x1b8] sm:$0xff]
      %v1153 = vld [vmem:[#allocation11 + $0x1c0] sm:$0xff]
      %v1154 = vld [vmem:[#allocation11 + $0x1c8] sm:$0xff]
      %v1155 = vld [vmem:[#allocation11 + $0x1d0] sm:$0xff]
      %v1156 = vld [vmem:[#allocation11 + $0x1d8] sm:$0xff]
      %v1157 = vld [vmem:[#allocation11 + $0x1e0] sm:$0xff]
      %v1158 = vld [vmem:[#allocation11 + $0x1e8] sm:$0xff]
      %v1159 = vld [vmem:[#allocation11 + $0x1f0] sm:$0xff]
      %v1160 = vld [vmem:[#allocation11 + $0x1f8] sm:$0xff]
      %v1161 = vld [vmem:[#allocation11 + $0x200] sm:$0xff]
      %v1162 = vld [vmem:[#allocation11 + $0x208] sm:$0xff]
      %v1163 = vld [vmem:[#allocation11 + $0x210] sm:$0xff]
      %v1164 = vld [vmem:[#allocation11 + $0x218] sm:$0xff]
      %v1165 = vld [vmem:[#allocation11 + $0x220] sm:$0xff]
      %v1166 = vld [vmem:[#allocation11 + $0x228] sm:$0xff]
      %v1167 = vld [vmem:[#allocation11 + $0x230] sm:$0xff]
      %v1168 = vld [vmem:[#allocation11 + $0x238] sm:$0xff]
      %v1169 = vld [vmem:[#allocation11 + $0x240] sm:$0xff]
      %v1170 = vld [vmem:[#allocation11 + $0x248] sm:$0xff]
      %v1171 = vld [vmem:[#allocation11 + $0x250] sm:$0xff]
      %v1172 = vld [vmem:[#allocation11 + $0x258] sm:$0xff]
      %v1173 = vld [vmem:[#allocation11 + $0x260] sm:$0xff]
      %v1174 = vld [vmem:[#allocation11 + $0x268] sm:$0xff]
      %v1175 = vld [vmem:[#allocation11 + $0x270] sm:$0xff]
      %v1176 = vld [vmem:[#allocation11 + $0x278] sm:$0xff]
      %v1177 = vld [vmem:[#allocation11 + $0x280] sm:$0xff]
      %v1178 = vld [vmem:[#allocation11 + $0x288] sm:$0xff]
      %v1179 = vld [vmem:[#allocation11 + $0x290] sm:$0xff]
      %v1180 = vld [vmem:[#allocation11 + $0x298] sm:$0xff]
      %v1181 = vld [vmem:[#allocation11 + $0x2a0] sm:$0xff]
      %v1182 = vld [vmem:[#allocation11 + $0x2a8] sm:$0xff]
      %v1183 = vld [vmem:[#allocation11 + $0x2b0] sm:$0xff]
      %v1184 = vld [vmem:[#allocation11 + $0x2b8] sm:$0xff]
      %v1185 = vld [vmem:[#allocation11 + $0x2c0] sm:$0xff]
      %v1186 = vld [vmem:[#allocation11 + $0x2c8] sm:$0xff]
      %v1187 = vld [vmem:[#allocation11 + $0x2d0] sm:$0xff]
      %v1188 = vld [vmem:[#allocation11 + $0x2d8] sm:$0xff]
      %v1189 = vld [vmem:[#allocation11 + $0x2e0] sm:$0xff]
      %v1190 = vld [vmem:[#allocation11 + $0x2e8] sm:$0xff]
      %v1191 = vld [vmem:[#allocation11 + $0x2f0] sm:$0xff]
      %v1192 = vld [vmem:[#allocation11 + $0x2f8] sm:$0xff]
      %v1193 = vunpack.c.l.s8.bf16 %v1097
      %v1194 = vunpack.c.l.s8.bf16 %v1098
      %v1195 = vunpack.c.l.s8.bf16 %v1099
      %v1196 = vunpack.c.l.s8.bf16 %v1100
      %v1197 = vunpack.c.h.s8.bf16 %v1097
      %v1198 = vunpack.c.h.s8.bf16 %v1098
      %v1199 = vunpack.c.h.s8.bf16 %v1099
      %v1200 = vunpack.c.h.s8.bf16 %v1100
      %v1201 = vunpack.c.l.s8.bf16 %v1101
      %v1202 = vunpack.c.l.s8.bf16 %v1102
      %v1203 = vunpack.c.l.s8.bf16 %v1103
      %v1204 = vunpack.c.l.s8.bf16 %v1104
      %v1205 = vunpack.c.h.s8.bf16 %v1101
      %v1206 = vunpack.c.h.s8.bf16 %v1102
      %v1207 = vunpack.c.h.s8.bf16 %v1103
      %v1208 = vunpack.c.h.s8.bf16 %v1104
      %v1209 = vunpack.c.l.s8.bf16 %v1105
      %v1210 = vunpack.c.l.s8.bf16 %v1106
      %v1211 = vunpack.c.l.s8.bf16 %v1107
      %v1212 = vunpack.c.l.s8.bf16 %v1108
      %v1213 = vunpack.c.h.s8.bf16 %v1105
      %v1214 = vunpack.c.h.s8.bf16 %v1106
      %v1215 = vunpack.c.h.s8.bf16 %v1107
      %v1216 = vunpack.c.h.s8.bf16 %v1108
      %v1217 = vunpack.c.l.s8.bf16 %v1109
      %v1218 = vunpack.c.l.s8.bf16 %v1110
      %v1219 = vunpack.c.l.s8.bf16 %v1111
      %v1220 = vunpack.c.l.s8.bf16 %v1112
      %v1221 = vunpack.c.h.s8.bf16 %v1109
      %v1222 = vunpack.c.h.s8.bf16 %v1110
      %v1223 = vunpack.c.h.s8.bf16 %v1111
      %v1224 = vunpack.c.h.s8.bf16 %v1112
      %v1225 = vunpack.c.l.s8.bf16 %v1113
      %v1226 = vunpack.c.l.s8.bf16 %v1114
      %v1227 = vunpack.c.l.s8.bf16 %v1115
      %v1228 = vunpack.c.l.s8.bf16 %v1116
      %v1229 = vunpack.c.h.s8.bf16 %v1113
      %v1230 = vunpack.c.h.s8.bf16 %v1114
      %v1231 = vunpack.c.h.s8.bf16 %v1115
      %v1232 = vunpack.c.h.s8.bf16 %v1116
      %v1233 = vunpack.c.l.s8.bf16 %v1117
      %v1234 = vunpack.c.l.s8.bf16 %v1118
      %v1235 = vunpack.c.l.s8.bf16 %v1119
      %v1236 = vunpack.c.l.s8.bf16 %v1120
      %v1237 = vunpack.c.h.s8.bf16 %v1117
      %v1238 = vunpack.c.h.s8.bf16 %v1118
      %v1239 = vunpack.c.h.s8.bf16 %v1119
      %v1240 = vunpack.c.h.s8.bf16 %v1120
      %v1241 = vunpack.c.l.s8.bf16 %v1121
      %v1242 = vunpack.c.l.s8.bf16 %v1122
      %v1243 = vunpack.c.l.s8.bf16 %v1123
      %v1244 = vunpack.c.l.s8.bf16 %v1124
      %v1245 = vunpack.c.h.s8.bf16 %v1121
      %v1246 = vunpack.c.h.s8.bf16 %v1122
      %v1247 = vunpack.c.h.s8.bf16 %v1123
      %v1248 = vunpack.c.h.s8.bf16 %v1124
      %v1249 = vunpack.c.l.s8.bf16 %v1125
      %v1250 = vunpack.c.l.s8.bf16 %v1126
      %v1251 = vunpack.c.l.s8.bf16 %v1127
      %v1252 = vunpack.c.l.s8.bf16 %v1128
      %v1253 = vunpack.c.h.s8.bf16 %v1125
      %v1254 = vunpack.c.h.s8.bf16 %v1126
      %v1255 = vunpack.c.h.s8.bf16 %v1127
      %v1256 = vunpack.c.h.s8.bf16 %v1128
      %v1257 = vunpack.c.l.s8.bf16 %v1129
      %v1258 = vunpack.c.l.s8.bf16 %v1130
      %v1259 = vunpack.c.l.s8.bf16 %v1131
      %v1260 = vunpack.c.l.s8.bf16 %v1132
      %v1261 = vunpack.c.h.s8.bf16 %v1129
      %v1262 = vunpack.c.h.s8.bf16 %v1130
      %v1263 = vunpack.c.h.s8.bf16 %v1131
      %v1264 = vunpack.c.h.s8.bf16 %v1132
      %v1265 = vunpack.c.l.s8.bf16 %v1133
      %v1266 = vunpack.c.l.s8.bf16 %v1134
      %v1267 = vunpack.c.l.s8.bf16 %v1135
      %v1268 = vunpack.c.l.s8.bf16 %v1136
      %v1269 = vunpack.c.h.s8.bf16 %v1133
      %v1270 = vunpack.c.h.s8.bf16 %v1134
      %v1271 = vunpack.c.h.s8.bf16 %v1135
      %v1272 = vunpack.c.h.s8.bf16 %v1136
      %v1273 = vunpack.c.l.s8.bf16 %v1137
      %v1274 = vunpack.c.l.s8.bf16 %v1138
      %v1275 = vunpack.c.l.s8.bf16 %v1139
      %v1276 = vunpack.c.l.s8.bf16 %v1140
      %v1277 = vunpack.c.h.s8.bf16 %v1137
      %v1278 = vunpack.c.h.s8.bf16 %v1138
      %v1279 = vunpack.c.h.s8.bf16 %v1139
      %v1280 = vunpack.c.h.s8.bf16 %v1140
      %v1281 = vunpack.c.l.s8.bf16 %v1141
      %v1282 = vunpack.c.l.s8.bf16 %v1142
      %v1283 = vunpack.c.l.s8.bf16 %v1143
      %v1284 = vunpack.c.l.s8.bf16 %v1144
      %v1285 = vunpack.c.h.s8.bf16 %v1141
      %v1286 = vunpack.c.h.s8.bf16 %v1142
      %v1287 = vunpack.c.h.s8.bf16 %v1143
      %v1288 = vunpack.c.h.s8.bf16 %v1144
      %v1289 = vunpack.c.l.s8.bf16 %v1145
      %v1290 = vunpack.c.l.s8.bf16 %v1146
      %v1291 = vunpack.c.l.s8.bf16 %v1147
      %v1292 = vunpack.c.l.s8.bf16 %v1148
      %v1293 = vunpack.c.h.s8.bf16 %v1145
      %v1294 = vunpack.c.h.s8.bf16 %v1146
      %v1295 = vunpack.c.h.s8.bf16 %v1147
      %v1296 = vunpack.c.h.s8.bf16 %v1148
      %v1297 = vunpack.c.l.s8.bf16 %v1149
      %v1298 = vunpack.c.l.s8.bf16 %v1150
      %v1299 = vunpack.c.l.s8.bf16 %v1151
      %v1300 = vunpack.c.l.s8.bf16 %v1152
      %v1301 = vunpack.c.h.s8.bf16 %v1149
      %v1302 = vunpack.c.h.s8.bf16 %v1150
      %v1303 = vunpack.c.h.s8.bf16 %v1151
      %v1304 = vunpack.c.h.s8.bf16 %v1152
      %v1305 = vunpack.c.l.s8.bf16 %v1153
      %v1306 = vunpack.c.l.s8.bf16 %v1154
      %v1307 = vunpack.c.l.s8.bf16 %v1155
      %v1308 = vunpack.c.l.s8.bf16 %v1156
      %v1309 = vunpack.c.h.s8.bf16 %v1153
      %v1310 = vunpack.c.h.s8.bf16 %v1154
      %v1311 = vunpack.c.h.s8.bf16 %v1155
      %v1312 = vunpack.c.h.s8.bf16 %v1156
      %v1313 = vunpack.c.l.s8.bf16 %v1157
      %v1314 = vunpack.c.l.s8.bf16 %v1158
      %v1315 = vunpack.c.l.s8.bf16 %v1159
      %v1316 = vunpack.c.l.s8.bf16 %v1160
      %v1317 = vunpack.c.h.s8.bf16 %v1157
      %v1318 = vunpack.c.h.s8.bf16 %v1158
      %v1319 = vunpack.c.h.s8.bf16 %v1159
      %v1320 = vunpack.c.h.s8.bf16 %v1160
      %v1321 = vunpack.c.l.s8.bf16 %v1161
      %v1322 = vunpack.c.l.s8.bf16 %v1162
      %v1323 = vunpack.c.l.s8.bf16 %v1163
      %v1324 = vunpack.c.l.s8.bf16 %v1164
      %v1325 = vunpack.c.h.s8.bf16 %v1161
      %v1326 = vunpack.c.h.s8.bf16 %v1162
      %v1327 = vunpack.c.h.s8.bf16 %v1163
      %v1328 = vunpack.c.h.s8.bf16 %v1164
      %v1329 = vunpack.c.l.s8.bf16 %v1165
      %v1330 = vunpack.c.l.s8.bf16 %v1166
      %v1331 = vunpack.c.l.s8.bf16 %v1167
      %v1332 = vunpack.c.l.s8.bf16 %v1168
      %v1333 = vunpack.c.h.s8.bf16 %v1165
      %v1334 = vunpack.c.h.s8.bf16 %v1166
      %v1335 = vunpack.c.h.s8.bf16 %v1167
      %v1336 = vunpack.c.h.s8.bf16 %v1168
      %v1337 = vunpack.c.l.s8.bf16 %v1169
      %v1338 = vunpack.c.l.s8.bf16 %v1170
      %v1339 = vunpack.c.l.s8.bf16 %v1171
      %v1340 = vunpack.c.l.s8.bf16 %v1172
      %v1341 = vunpack.c.h.s8.bf16 %v1169
      %v1342 = vunpack.c.h.s8.bf16 %v1170
      %v1343 = vunpack.c.h.s8.bf16 %v1171
      %v1344 = vunpack.c.h.s8.bf16 %v1172
      %v1345 = vunpack.c.l.s8.bf16 %v1173
      %v1346 = vunpack.c.l.s8.bf16 %v1174
      %v1347 = vunpack.c.l.s8.bf16 %v1175
      %v1348 = vunpack.c.l.s8.bf16 %v1176
      %v1349 = vunpack.c.h.s8.bf16 %v1173
      %v1350 = vunpack.c.h.s8.bf16 %v1174
      %v1351 = vunpack.c.h.s8.bf16 %v1175
      %v1352 = vunpack.c.h.s8.bf16 %v1176
      %v1353 = vunpack.c.l.s8.bf16 %v1177
      %v1354 = vunpack.c.l.s8.bf16 %v1178
      %v1355 = vunpack.c.l.s8.bf16 %v1179
      %v1356 = vunpack.c.l.s8.bf16 %v1180
      %v1357 = vunpack.c.h.s8.bf16 %v1177
      %v1358 = vunpack.c.h.s8.bf16 %v1178
      %v1359 = vunpack.c.h.s8.bf16 %v1179
      %v1360 = vunpack.c.h.s8.bf16 %v1180
      %v1361 = vunpack.c.l.s8.bf16 %v1181
      %v1362 = vunpack.c.l.s8.bf16 %v1182
      %v1363 = vunpack.c.l.s8.bf16 %v1183
      %v1364 = vunpack.c.l.s8.bf16 %v1184
      %v1365 = vunpack.c.h.s8.bf16 %v1181
      %v1366 = vunpack.c.h.s8.bf16 %v1182
      %v1367 = vunpack.c.h.s8.bf16 %v1183
      %v1368 = vunpack.c.h.s8.bf16 %v1184
      %v1369 = vunpack.c.l.s8.bf16 %v1185
      %v1370 = vunpack.c.l.s8.bf16 %v1186
      %v1371 = vunpack.c.l.s8.bf16 %v1187
      %v1372 = vunpack.c.l.s8.bf16 %v1188
      %v1373 = vunpack.c.h.s8.bf16 %v1185
      %v1374 = vunpack.c.h.s8.bf16 %v1186
      %v1375 = vunpack.c.h.s8.bf16 %v1187
      %v1376 = vunpack.c.h.s8.bf16 %v1188
      %v1377 = vunpack.c.l.s8.bf16 %v1189
      %v1378 = vunpack.c.l.s8.bf16 %v1190
      %v1379 = vunpack.c.l.s8.bf16 %v1191
      %v1380 = vunpack.c.l.s8.bf16 %v1192
      %v1381 = vunpack.c.h.s8.bf16 %v1189
      %v1382 = vunpack.c.h.s8.bf16 %v1190
      %v1383 = vunpack.c.h.s8.bf16 %v1191
      %v1384 = vunpack.c.h.s8.bf16 %v1192
      %1385 = vst [vmem:[#allocation3] sm:$0xff] %v1193
      %1386 = vst [vmem:[#allocation3 + $0x8] sm:$0xff] %v1194
      %1387 = vst [vmem:[#allocation3 + $0x10] sm:$0xff] %v1195
      %1388 = vst [vmem:[#allocation3 + $0x18] sm:$0xff] %v1196
      %1389 = vst [vmem:[#allocation3 + $0x20] sm:$0xff] %v1197
      %1390 = vst [vmem:[#allocation3 + $0x28] sm:$0xff] %v1198
      %1391 = vst [vmem:[#allocation3 + $0x30] sm:$0xff] %v1199
      %1392 = vst [vmem:[#allocation3 + $0x38] sm:$0xff] %v1200
      %1393 = vst [vmem:[#allocation3 + $0x40] sm:$0xff] %v1201
      %1394 = vst [vmem:[#allocation3 + $0x48] sm:$0xff] %v1202
      %1395 = vst [vmem:[#allocation3 + $0x50] sm:$0xff] %v1203
      %1396 = vst [vmem:[#allocation3 + $0x58] sm:$0xff] %v1204
      %1397 = vst [vmem:[#allocation3 + $0x60] sm:$0xff] %v1205
      %1398 = vst [vmem:[#allocation3 + $0x68] sm:$0xff] %v1206
      %1399 = vst [vmem:[#allocation3 + $0x70] sm:$0xff] %v1207
      %1400 = vst [vmem:[#allocation3 + $0x78] sm:$0xff] %v1208
      %1401 = vst [vmem:[#allocation3 + $0x80] sm:$0xff] %v1209
      %1402 = vst [vmem:[#allocation3 + $0x88] sm:$0xff] %v1210
      %1403 = vst [vmem:[#allocation3 + $0x90] sm:$0xff] %v1211
      %1404 = vst [vmem:[#allocation3 + $0x98] sm:$0xff] %v1212
      %1405 = vst [vmem:[#allocation3 + $0xa0] sm:$0xff] %v1213
      %1406 = vst [vmem:[#allocation3 + $0xa8] sm:$0xff] %v1214
      %1407 = vst [vmem:[#allocation3 + $0xb0] sm:$0xff] %v1215
      %1408 = vst [vmem:[#allocation3 + $0xb8] sm:$0xff] %v1216
      %1409 = vst [vmem:[#allocation3 + $0xc0] sm:$0xff] %v1217
      %1410 = vst [vmem:[#allocation3 + $0xc8] sm:$0xff] %v1218
      %1411 = vst [vmem:[#allocation3 + $0xd0] sm:$0xff] %v1219
      %1412 = vst [vmem:[#allocation3 + $0xd8] sm:$0xff] %v1220
      %1413 = vst [vmem:[#allocation3 + $0xe0] sm:$0xff] %v1221
      %1414 = vst [vmem:[#allocation3 + $0xe8] sm:$0xff] %v1222
      %1415 = vst [vmem:[#allocation3 + $0xf0] sm:$0xff] %v1223
      %1416 = vst [vmem:[#allocation3 + $0xf8] sm:$0xff] %v1224
      %1417 = vst [vmem:[#allocation3 + $0x100] sm:$0xff] %v1225
      %1418 = vst [vmem:[#allocation3 + $0x108] sm:$0xff] %v1226
      %1419 = vst [vmem:[#allocation3 + $0x110] sm:$0xff] %v1227
      %1420 = vst [vmem:[#allocation3 + $0x118] sm:$0xff] %v1228
      %1421 = vst [vmem:[#allocation3 + $0x120] sm:$0xff] %v1229
      %1422 = vst [vmem:[#allocation3 + $0x128] sm:$0xff] %v1230
      %1423 = vst [vmem:[#allocation3 + $0x130] sm:$0xff] %v1231
      %1424 = vst [vmem:[#allocation3 + $0x138] sm:$0xff] %v1232
      %1425 = vst [vmem:[#allocation3 + $0x140] sm:$0xff] %v1233
      %1426 = vst [vmem:[#allocation3 + $0x148] sm:$0xff] %v1234
      %1427 = vst [vmem:[#allocation3 + $0x150] sm:$0xff] %v1235
      %1428 = vst [vmem:[#allocation3 + $0x158] sm:$0xff] %v1236
      %1429 = vst [vmem:[#allocation3 + $0x160] sm:$0xff] %v1237
      %1430 = vst [vmem:[#allocation3 + $0x168] sm:$0xff] %v1238
      %1431 = vst [vmem:[#allocation3 + $0x170] sm:$0xff] %v1239
      %1432 = vst [vmem:[#allocation3 + $0x178] sm:$0xff] %v1240
      %1433 = vst [vmem:[#allocation3 + $0x180] sm:$0xff] %v1241
      %1434 = vst [vmem:[#allocation3 + $0x188] sm:$0xff] %v1242
      %1435 = vst [vmem:[#allocation3 + $0x190] sm:$0xff] %v1243
      %1436 = vst [vmem:[#allocation3 + $0x198] sm:$0xff] %v1244
      %1437 = vst [vmem:[#allocation3 + $0x1a0] sm:$0xff] %v1245
      %1438 = vst [vmem:[#allocation3 + $0x1a8] sm:$0xff] %v1246
      %1439 = vst [vmem:[#allocation3 + $0x1b0] sm:$0xff] %v1247
      %1440 = vst [vmem:[#allocation3 + $0x1b8] sm:$0xff] %v1248
      %1441 = vst [vmem:[#allocation3 + $0x1c0] sm:$0xff] %v1249
      %1442 = vst [vmem:[#allocation3 + $0x1c8] sm:$0xff] %v1250
      %1443 = vst [vmem:[#allocation3 + $0x1d0] sm:$0xff] %v1251
      %1444 = vst [vmem:[#allocation3 + $0x1d8] sm:$0xff] %v1252
      %1445 = vst [vmem:[#allocation3 + $0x1e0] sm:$0xff] %v1253
      %1446 = vst [vmem:[#allocation3 + $0x1e8] sm:$0xff] %v1254
      %1447 = vst [vmem:[#allocation3 + $0x1f0] sm:$0xff] %v1255
      %1448 = vst [vmem:[#allocation3 + $0x1f8] sm:$0xff] %v1256
      %1449 = vst [vmem:[#allocation3 + $0x200] sm:$0xff] %v1257
      %1450 = vst [vmem:[#allocation3 + $0x208] sm:$0xff] %v1258
      %1451 = vst [vmem:[#allocation3 + $0x210] sm:$0xff] %v1259
      %1452 = vst [vmem:[#allocation3 + $0x218] sm:$0xff] %v1260
      %1453 = vst [vmem:[#allocation3 + $0x220] sm:$0xff] %v1261
      %1454 = vst [vmem:[#allocation3 + $0x228] sm:$0xff] %v1262
      %1455 = vst [vmem:[#allocation3 + $0x230] sm:$0xff] %v1263
      %1456 = vst [vmem:[#allocation3 + $0x238] sm:$0xff] %v1264
      %1457 = vst [vmem:[#allocation3 + $0x240] sm:$0xff] %v1265
      %1458 = vst [vmem:[#allocation3 + $0x248] sm:$0xff] %v1266
      %1459 = vst [vmem:[#allocation3 + $0x250] sm:$0xff] %v1267
      %1460 = vst [vmem:[#allocation3 + $0x258] sm:$0xff] %v1268
      %1461 = vst [vmem:[#allocation3 + $0x260] sm:$0xff] %v1269
      %1462 = vst [vmem:[#allocation3 + $0x268] sm:$0xff] %v1270
      %1463 = vst [vmem:[#allocation3 + $0x270] sm:$0xff] %v1271
      %1464 = vst [vmem:[#allocation3 + $0x278] sm:$0xff] %v1272
      %1465 = vst [vmem:[#allocation3 + $0x280] sm:$0xff] %v1273
      %1466 = vst [vmem:[#allocation3 + $0x288] sm:$0xff] %v1274
      %1467 = vst [vmem:[#allocation3 + $0x290] sm:$0xff] %v1275
      %1468 = vst [vmem:[#allocation3 + $0x298] sm:$0xff] %v1276
      %1469 = vst [vmem:[#allocation3 + $0x2a0] sm:$0xff] %v1277
      %1470 = vst [vmem:[#allocation3 + $0x2a8] sm:$0xff] %v1278
      %1471 = vst [vmem:[#allocation3 + $0x2b0] sm:$0xff] %v1279
      %1472 = vst [vmem:[#allocation3 + $0x2b8] sm:$0xff] %v1280
      %1473 = vst [vmem:[#allocation3 + $0x2c0] sm:$0xff] %v1281
      %1474 = vst [vmem:[#allocation3 + $0x2c8] sm:$0xff] %v1282
      %1475 = vst [vmem:[#allocation3 + $0x2d0] sm:$0xff] %v1283
      %1476 = vst [vmem:[#allocation3 + $0x2d8] sm:$0xff] %v1284
      %1477 = vst [vmem:[#allocation3 + $0x2e0] sm:$0xff] %v1285
      %1478 = vst [vmem:[#allocation3 + $0x2e8] sm:$0xff] %v1286
      %1479 = vst [vmem:[#allocation3 + $0x2f0] sm:$0xff] %v1287
      %1480 = vst [vmem:[#allocation3 + $0x2f8] sm:$0xff] %v1288
      %1481 = vst [vmem:[#allocation3 + $0x300] sm:$0xff] %v1289
      %1482 = vst [vmem:[#allocation3 + $0x308] sm:$0xff] %v1290
      %1483 = vst [vmem:[#allocation3 + $0x310] sm:$0xff] %v1291
      %1484 = vst [vmem:[#allocation3 + $0x318] sm:$0xff] %v1292
      %1485 = vst [vmem:[#allocation3 + $0x320] sm:$0xff] %v1293
      %1486 = vst [vmem:[#allocation3 + $0x328] sm:$0xff] %v1294
      %1487 = vst [vmem:[#allocation3 + $0x330] sm:$0xff] %v1295
      %1488 = vst [vmem:[#allocation3 + $0x338] sm:$0xff] %v1296
      %1489 = vst [vmem:[#allocation3 + $0x340] sm:$0xff] %v1297
      %1490 = vst [vmem:[#allocation3 + $0x348] sm:$0xff] %v1298
      %1491 = vst [vmem:[#allocation3 + $0x350] sm:$0xff] %v1299
      %1492 = vst [vmem:[#allocation3 + $0x358] sm:$0xff] %v1300
      %1493 = vst [vmem:[#allocation3 + $0x360] sm:$0xff] %v1301
      %1494 = vst [vmem:[#allocation3 + $0x368] sm:$0xff] %v1302
      %1495 = vst [vmem:[#allocation3 + $0x370] sm:$0xff] %v1303
      %1496 = vst [vmem:[#allocation3 + $0x378] sm:$0xff] %v1304
      %1497 = vst [vmem:[#allocation3 + $0x380] sm:$0xff] %v1305
      %1498 = vst [vmem:[#allocation3 + $0x388] sm:$0xff] %v1306
      %1499 = vst [vmem:[#allocation3 + $0x390] sm:$0xff] %v1307
      %1500 = vst [vmem:[#allocation3 + $0x398] sm:$0xff] %v1308
      %1501 = vst [vmem:[#allocation3 + $0x3a0] sm:$0xff] %v1309
      %1502 = vst [vmem:[#allocation3 + $0x3a8] sm:$0xff] %v1310
      %1503 = vst [vmem:[#allocation3 + $0x3b0] sm:$0xff] %v1311
      %1504 = vst [vmem:[#allocation3 + $0x3b8] sm:$0xff] %v1312
      %1505 = vst [vmem:[#allocation3 + $0x3c0] sm:$0xff] %v1313
      %1506 = vst [vmem:[#allocation3 + $0x3c8] sm:$0xff] %v1314
      %1507 = vst [vmem:[#allocation3 + $0x3d0] sm:$0xff] %v1315
      %1508 = vst [vmem:[#allocation3 + $0x3d8] sm:$0xff] %v1316
      %1509 = vst [vmem:[#allocation3 + $0x3e0] sm:$0xff] %v1317
      %1510 = vst [vmem:[#allocation3 + $0x3e8] sm:$0xff] %v1318
      %1511 = vst [vmem:[#allocation3 + $0x3f0] sm:$0xff] %v1319
      %1512 = vst [vmem:[#allocation3 + $0x3f8] sm:$0xff] %v1320
      %1513 = vst [vmem:[#allocation3 + $0x400] sm:$0xff] %v1321
      %1514 = vst [vmem:[#allocation3 + $0x408] sm:$0xff] %v1322
      %1515 = vst [vmem:[#allocation3 + $0x410] sm:$0xff] %v1323
      %1516 = vst [vmem:[#allocation3 + $0x418] sm:$0xff] %v1324
      %1517 = vst [vmem:[#allocation3 + $0x420] sm:$0xff] %v1325
      %1518 = vst [vmem:[#allocation3 + $0x428] sm:$0xff] %v1326
      %1519 = vst [vmem:[#allocation3 + $0x430] sm:$0xff] %v1327
      %1520 = vst [vmem:[#allocation3 + $0x438] sm:$0xff] %v1328
      %1521 = vst [vmem:[#allocation3 + $0x440] sm:$0xff] %v1329
      %1522 = vst [vmem:[#allocation3 + $0x448] sm:$0xff] %v1330
      %1523 = vst [vmem:[#allocation3 + $0x450] sm:$0xff] %v1331
      %1524 = vst [vmem:[#allocation3 + $0x458] sm:$0xff] %v1332
      %1525 = vst [vmem:[#allocation3 + $0x460] sm:$0xff] %v1333
      %1526 = vst [vmem:[#allocation3 + $0x468] sm:$0xff] %v1334
      %1527 = vst [vmem:[#allocation3 + $0x470] sm:$0xff] %v1335
      %1528 = vst [vmem:[#allocation3 + $0x478] sm:$0xff] %v1336
      %1529 = vst [vmem:[#allocation3 + $0x480] sm:$0xff] %v1337
      %1530 = vst [vmem:[#allocation3 + $0x488] sm:$0xff] %v1338
      %1531 = vst [vmem:[#allocation3 + $0x490] sm:$0xff] %v1339
      %1532 = vst [vmem:[#allocation3 + $0x498] sm:$0xff] %v1340
      %1533 = vst [vmem:[#allocation3 + $0x4a0] sm:$0xff] %v1341
      %1534 = vst [vmem:[#allocation3 + $0x4a8] sm:$0xff] %v1342
      %1535 = vst [vmem:[#allocation3 + $0x4b0] sm:$0xff] %v1343
      %1536 = vst [vmem:[#allocation3 + $0x4b8] sm:$0xff] %v1344
      %1537 = vst [vmem:[#allocation3 + $0x4c0] sm:$0xff] %v1345
      %1538 = vst [vmem:[#allocation3 + $0x4c8] sm:$0xff] %v1346
      %1539 = vst [vmem:[#allocation3 + $0x4d0] sm:$0xff] %v1347
      %1540 = vst [vmem:[#allocation3 + $0x4d8] sm:$0xff] %v1348
      %1541 = vst [vmem:[#allocation3 + $0x4e0] sm:$0xff] %v1349
      %1542 = vst [vmem:[#allocation3 + $0x4e8] sm:$0xff] %v1350
      %1543 = vst [vmem:[#allocation3 + $0x4f0] sm:$0xff] %v1351
      %1544 = vst [vmem:[#allocation3 + $0x4f8] sm:$0xff] %v1352
      %1545 = vst [vmem:[#allocation3 + $0x500] sm:$0xff] %v1353
      %1546 = vst [vmem:[#allocation3 + $0x508] sm:$0xff] %v1354
      %1547 = vst [vmem:[#allocation3 + $0x510] sm:$0xff] %v1355
      %1548 = vst [vmem:[#allocation3 + $0x518] sm:$0xff] %v1356
      %1549 = vst [vmem:[#allocation3 + $0x520] sm:$0xff] %v1357
      %1550 = vst [vmem:[#allocation3 + $0x528] sm:$0xff] %v1358
      %1551 = vst [vmem:[#allocation3 + $0x530] sm:$0xff] %v1359
      %1552 = vst [vmem:[#allocation3 + $0x538] sm:$0xff] %v1360
      %1553 = vst [vmem:[#allocation3 + $0x540] sm:$0xff] %v1361
      %1554 = vst [vmem:[#allocation3 + $0x548] sm:$0xff] %v1362
      %1555 = vst [vmem:[#allocation3 + $0x550] sm:$0xff] %v1363
      %1556 = vst [vmem:[#allocation3 + $0x558] sm:$0xff] %v1364
      %1557 = vst [vmem:[#allocation3 + $0x560] sm:$0xff] %v1365
      %1558 = vst [vmem:[#allocation3 + $0x568] sm:$0xff] %v1366
      %1559 = vst [vmem:[#allocation3 + $0x570] sm:$0xff] %v1367
      %1560 = vst [vmem:[#allocation3 + $0x578] sm:$0xff] %v1368
      %1561 = vst [vmem:[#allocation3 + $0x580] sm:$0xff] %v1369
      %1562 = vst [vmem:[#allocation3 + $0x588] sm:$0xff] %v1370
      %1563 = vst [vmem:[#allocation3 + $0x590] sm:$0xff] %v1371
      %1564 = vst [vmem:[#allocation3 + $0x598] sm:$0xff] %v1372
      %1565 = vst [vmem:[#allocation3 + $0x5a0] sm:$0xff] %v1373
      %1566 = vst [vmem:[#allocation3 + $0x5a8] sm:$0xff] %v1374
      %1567 = vst [vmem:[#allocation3 + $0x5b0] sm:$0xff] %v1375
      %1568 = vst [vmem:[#allocation3 + $0x5b8] sm:$0xff] %v1376
      %1569 = vst [vmem:[#allocation3 + $0x5c0] sm:$0xff] %v1377
      %1570 = vst [vmem:[#allocation3 + $0x5c8] sm:$0xff] %v1378
      %1571 = vst [vmem:[#allocation3 + $0x5d0] sm:$0xff] %v1379
      %1572 = vst [vmem:[#allocation3 + $0x5d8] sm:$0xff] %v1380
      %1573 = vst [vmem:[#allocation3 + $0x5e0] sm:$0xff] %v1381
      %1574 = vst [vmem:[#allocation3 + $0x5e8] sm:$0xff] %v1382
      %1575 = vst [vmem:[#allocation3 + $0x5f0] sm:$0xff] %v1383
      %1576 = vst [vmem:[#allocation3 + $0x5f8] sm:$0xff] %v1384
      %v1577 = vld [vmem:[#allocation14] sm:$0xff]
      %v1578 = vld [vmem:[#allocation14 + $0x8] sm:$0xff]
      %v1579 = vld [vmem:[#allocation14 + $0x10] sm:$0xff]
      %v1580 = vld [vmem:[#allocation14 + $0x18] sm:$0xff]
      %v1581 = vld [vmem:[#allocation14 + $0x20] sm:$0xff]
      %v1582 = vld [vmem:[#allocation14 + $0x28] sm:$0xff]
      %v1583 = vld [vmem:[#allocation14 + $0x30] sm:$0xff]
      %v1584 = vld [vmem:[#allocation14 + $0x38] sm:$0xff]
      %v1585 = vld [vmem:[#allocation14 + $0x40] sm:$0xff]
      %v1586 = vld [vmem:[#allocation14 + $0x48] sm:$0xff]
      %v1587 = vld [vmem:[#allocation14 + $0x50] sm:$0xff]
      %v1588 = vld [vmem:[#allocation14 + $0x58] sm:$0xff]
      %v1589 = vld [vmem:[#allocation14 + $0x60] sm:$0xff]
      %v1590 = vld [vmem:[#allocation14 + $0x68] sm:$0xff]
      %v1591 = vld [vmem:[#allocation14 + $0x70] sm:$0xff]
      %v1592 = vld [vmem:[#allocation14 + $0x78] sm:$0xff]
      %v1593 = vld [vmem:[#allocation14 + $0x80] sm:$0xff]
      %v1594 = vld [vmem:[#allocation14 + $0x88] sm:$0xff]
      %v1595 = vld [vmem:[#allocation14 + $0x90] sm:$0xff]
      %v1596 = vld [vmem:[#allocation14 + $0x98] sm:$0xff]
      %v1597 = vld [vmem:[#allocation14 + $0xa0] sm:$0xff]
      %v1598 = vld [vmem:[#allocation14 + $0xa8] sm:$0xff]
      %v1599 = vld [vmem:[#allocation14 + $0xb0] sm:$0xff]
      %v1600 = vld [vmem:[#allocation14 + $0xb8] sm:$0xff]
      %v1601 = vld [vmem:[#allocation14 + $0xc0] sm:$0xff]
      %v1602 = vld [vmem:[#allocation14 + $0xc8] sm:$0xff]
      %v1603 = vld [vmem:[#allocation14 + $0xd0] sm:$0xff]
      %v1604 = vld [vmem:[#allocation14 + $0xd8] sm:$0xff]
      %v1605 = vld [vmem:[#allocation14 + $0xe0] sm:$0xff]
      %v1606 = vld [vmem:[#allocation14 + $0xe8] sm:$0xff]
      %v1607 = vld [vmem:[#allocation14 + $0xf0] sm:$0xff]
      %v1608 = vld [vmem:[#allocation14 + $0xf8] sm:$0xff]
      %v1609 = vld [vmem:[#allocation14 + $0x100] sm:$0xff]
      %v1610 = vld [vmem:[#allocation14 + $0x108] sm:$0xff]
      %v1611 = vld [vmem:[#allocation14 + $0x110] sm:$0xff]
      %v1612 = vld [vmem:[#allocation14 + $0x118] sm:$0xff]
      %v1613 = vld [vmem:[#allocation14 + $0x120] sm:$0xff]
      %v1614 = vld [vmem:[#allocation14 + $0x128] sm:$0xff]
      %v1615 = vld [vmem:[#allocation14 + $0x130] sm:$0xff]
      %v1616 = vld [vmem:[#allocation14 + $0x138] sm:$0xff]
      %v1617 = vld [vmem:[#allocation14 + $0x140] sm:$0xff]
      %v1618 = vld [vmem:[#allocation14 + $0x148] sm:$0xff]
      %v1619 = vld [vmem:[#allocation14 + $0x150] sm:$0xff]
      %v1620 = vld [vmem:[#allocation14 + $0x158] sm:$0xff]
      %v1621 = vld [vmem:[#allocation14 + $0x160] sm:$0xff]
      %v1622 = vld [vmem:[#allocation14 + $0x168] sm:$0xff]
      %v1623 = vld [vmem:[#allocation14 + $0x170] sm:$0xff]
      %v1624 = vld [vmem:[#allocation14 + $0x178] sm:$0xff]
      %v1625 = vunpack.c.l.s8.bf16 %v1577
      %v1626 = vunpack.c.l.s8.bf16 %v1578
      %v1627 = vunpack.c.l.s8.bf16 %v1579
      %v1628 = vunpack.c.h.s8.bf16 %v1577
      %v1629 = vunpack.c.h.s8.bf16 %v1578
      %v1630 = vunpack.c.h.s8.bf16 %v1579
      %v1631 = vunpack.c.l.s8.bf16 %v1580
      %v1632 = vunpack.c.l.s8.bf16 %v1581
      %v1633 = vunpack.c.l.s8.bf16 %v1582
      %v1634 = vunpack.c.h.s8.bf16 %v1580
      %v1635 = vunpack.c.h.s8.bf16 %v1581
      %v1636 = vunpack.c.h.s8.bf16 %v1582
      %v1637 = vunpack.c.l.s8.bf16 %v1583
      %v1638 = vunpack.c.l.s8.bf16 %v1584
      %v1639 = vunpack.c.l.s8.bf16 %v1585
      %v1640 = vunpack.c.h.s8.bf16 %v1583
      %v1641 = vunpack.c.h.s8.bf16 %v1584
      %v1642 = vunpack.c.h.s8.bf16 %v1585
      %v1643 = vunpack.c.l.s8.bf16 %v1586
      %v1644 = vunpack.c.l.s8.bf16 %v1587
      %v1645 = vunpack.c.l.s8.bf16 %v1588
      %v1646 = vunpack.c.h.s8.bf16 %v1586
      %v1647 = vunpack.c.h.s8.bf16 %v1587
      %v1648 = vunpack.c.h.s8.bf16 %v1588
      %v1649 = vunpack.c.l.s8.bf16 %v1589
      %v1650 = vunpack.c.l.s8.bf16 %v1590
      %v1651 = vunpack.c.l.s8.bf16 %v1591
      %v1652 = vunpack.c.h.s8.bf16 %v1589
      %v1653 = vunpack.c.h.s8.bf16 %v1590
      %v1654 = vunpack.c.h.s8.bf16 %v1591
      %v1655 = vunpack.c.l.s8.bf16 %v1592
      %v1656 = vunpack.c.l.s8.bf16 %v1593
      %v1657 = vunpack.c.l.s8.bf16 %v1594
      %v1658 = vunpack.c.h.s8.bf16 %v1592
      %v1659 = vunpack.c.h.s8.bf16 %v1593
      %v1660 = vunpack.c.h.s8.bf16 %v1594
      %v1661 = vunpack.c.l.s8.bf16 %v1595
      %v1662 = vunpack.c.l.s8.bf16 %v1596
      %v1663 = vunpack.c.l.s8.bf16 %v1597
      %v1664 = vunpack.c.h.s8.bf16 %v1595
      %v1665 = vunpack.c.h.s8.bf16 %v1596
      %v1666 = vunpack.c.h.s8.bf16 %v1597
      %v1667 = vunpack.c.l.s8.bf16 %v1598
      %v1668 = vunpack.c.l.s8.bf16 %v1599
      %v1669 = vunpack.c.l.s8.bf16 %v1600
      %v1670 = vunpack.c.h.s8.bf16 %v1598
      %v1671 = vunpack.c.h.s8.bf16 %v1599
      %v1672 = vunpack.c.h.s8.bf16 %v1600
      %v1673 = vunpack.c.l.s8.bf16 %v1601
      %v1674 = vunpack.c.l.s8.bf16 %v1602
      %v1675 = vunpack.c.l.s8.bf16 %v1603
      %v1676 = vunpack.c.h.s8.bf16 %v1601
      %v1677 = vunpack.c.h.s8.bf16 %v1602
      %v1678 = vunpack.c.h.s8.bf16 %v1603
      %v1679 = vunpack.c.l.s8.bf16 %v1604
      %v1680 = vunpack.c.l.s8.bf16 %v1605
      %v1681 = vunpack.c.l.s8.bf16 %v1606
      %v1682 = vunpack.c.h.s8.bf16 %v1604
      %v1683 = vunpack.c.h.s8.bf16 %v1605
      %v1684 = vunpack.c.h.s8.bf16 %v1606
      %v1685 = vunpack.c.l.s8.bf16 %v1607
      %v1686 = vunpack.c.l.s8.bf16 %v1608
      %v1687 = vunpack.c.l.s8.bf16 %v1609
      %v1688 = vunpack.c.h.s8.bf16 %v1607
      %v1689 = vunpack.c.h.s8.bf16 %v1608
      %v1690 = vunpack.c.h.s8.bf16 %v1609
      %v1691 = vunpack.c.l.s8.bf16 %v1610
      %v1692 = vunpack.c.l.s8.bf16 %v1611
      %v1693 = vunpack.c.l.s8.bf16 %v1612
      %v1694 = vunpack.c.h.s8.bf16 %v1610
      %v1695 = vunpack.c.h.s8.bf16 %v1611
      %v1696 = vunpack.c.h.s8.bf16 %v1612
      %v1697 = vunpack.c.l.s8.bf16 %v1613
      %v1698 = vunpack.c.l.s8.bf16 %v1614
      %v1699 = vunpack.c.l.s8.bf16 %v1615
      %v1700 = vunpack.c.h.s8.bf16 %v1613
      %v1701 = vunpack.c.h.s8.bf16 %v1614
      %v1702 = vunpack.c.h.s8.bf16 %v1615
      %v1703 = vunpack.c.l.s8.bf16 %v1616
      %v1704 = vunpack.c.l.s8.bf16 %v1617
      %v1705 = vunpack.c.l.s8.bf16 %v1618
      %v1706 = vunpack.c.h.s8.bf16 %v1616
      %v1707 = vunpack.c.h.s8.bf16 %v1617
      %v1708 = vunpack.c.h.s8.bf16 %v1618
      %v1709 = vunpack.c.l.s8.bf16 %v1619
      %v1710 = vunpack.c.l.s8.bf16 %v1620
      %v1711 = vunpack.c.l.s8.bf16 %v1621
      %v1712 = vunpack.c.h.s8.bf16 %v1619
      %v1713 = vunpack.c.h.s8.bf16 %v1620
      %v1714 = vunpack.c.h.s8.bf16 %v1621
      %v1715 = vunpack.c.l.s8.bf16 %v1622
      %v1716 = vunpack.c.l.s8.bf16 %v1623
      %v1717 = vunpack.c.l.s8.bf16 %v1624
      %v1718 = vunpack.c.h.s8.bf16 %v1622
      %v1719 = vunpack.c.h.s8.bf16 %v1623
      %v1720 = vunpack.c.h.s8.bf16 %v1624
      %1721 = vst [vmem:[#allocation4] sm:$0xff] %v1625
      %1722 = vst [vmem:[#allocation4 + $0x8] sm:$0xff] %v1626
      %1723 = vst [vmem:[#allocation4 + $0x10] sm:$0xff] %v1627
      %1724 = vst [vmem:[#allocation4 + $0x18] sm:$0xff] %v1628
      %1725 = vst [vmem:[#allocation4 + $0x20] sm:$0xff] %v1629
      %1726 = vst [vmem:[#allocation4 + $0x28] sm:$0xff] %v1630
      %1727 = vst [vmem:[#allocation4 + $0x30] sm:$0xff] %v1631
      %1728 = vst [vmem:[#allocation4 + $0x38] sm:$0xff] %v1632
      %1729 = vst [vmem:[#allocation4 + $0x40] sm:$0xff] %v1633
      %1730 = vst [vmem:[#allocation4 + $0x48] sm:$0xff] %v1634
      %1731 = vst [vmem:[#allocation4 + $0x50] sm:$0xff] %v1635
      %1732 = vst [vmem:[#allocation4 + $0x58] sm:$0xff] %v1636
      %1733 = vst [vmem:[#allocation4 + $0x60] sm:$0xff] %v1637
      %1734 = vst [vmem:[#allocation4 + $0x68] sm:$0xff] %v1638
      %1735 = vst [vmem:[#allocation4 + $0x70] sm:$0xff] %v1639
      %1736 = vst [vmem:[#allocation4 + $0x78] sm:$0xff] %v1640
      %1737 = vst [vmem:[#allocation4 + $0x80] sm:$0xff] %v1641
      %1738 = vst [vmem:[#allocation4 + $0x88] sm:$0xff] %v1642
      %1739 = vst [vmem:[#allocation4 + $0x90] sm:$0xff] %v1643
      %1740 = vst [vmem:[#allocation4 + $0x98] sm:$0xff] %v1644
      %1741 = vst [vmem:[#allocation4 + $0xa0] sm:$0xff] %v1645
      %1742 = vst [vmem:[#allocation4 + $0xa8] sm:$0xff] %v1646
      %1743 = vst [vmem:[#allocation4 + $0xb0] sm:$0xff] %v1647
      %1744 = vst [vmem:[#allocation4 + $0xb8] sm:$0xff] %v1648
      %1745 = vst [vmem:[#allocation4 + $0xc0] sm:$0xff] %v1649
      %1746 = vst [vmem:[#allocation4 + $0xc8] sm:$0xff] %v1650
      %1747 = vst [vmem:[#allocation4 + $0xd0] sm:$0xff] %v1651
      %1748 = vst [vmem:[#allocation4 + $0xd8] sm:$0xff] %v1652
      %1749 = vst [vmem:[#allocation4 + $0xe0] sm:$0xff] %v1653
      %1750 = vst [vmem:[#allocation4 + $0xe8] sm:$0xff] %v1654
      %1751 = vst [vmem:[#allocation4 + $0xf0] sm:$0xff] %v1655
      %1752 = vst [vmem:[#allocation4 + $0xf8] sm:$0xff] %v1656
      %1753 = vst [vmem:[#allocation4 + $0x100] sm:$0xff] %v1657
      %1754 = vst [vmem:[#allocation4 + $0x108] sm:$0xff] %v1658
      %1755 = vst [vmem:[#allocation4 + $0x110] sm:$0xff] %v1659
      %1756 = vst [vmem:[#allocation4 + $0x118] sm:$0xff] %v1660
      %1757 = vst [vmem:[#allocation4 + $0x120] sm:$0xff] %v1661
      %1758 = vst [vmem:[#allocation4 + $0x128] sm:$0xff] %v1662
      %1759 = vst [vmem:[#allocation4 + $0x130] sm:$0xff] %v1663
      %1760 = vst [vmem:[#allocation4 + $0x138] sm:$0xff] %v1664
      %1761 = vst [vmem:[#allocation4 + $0x140] sm:$0xff] %v1665
      %1762 = vst [vmem:[#allocation4 + $0x148] sm:$0xff] %v1666
      %1763 = vst [vmem:[#allocation4 + $0x150] sm:$0xff] %v1667
      %1764 = vst [vmem:[#allocation4 + $0x158] sm:$0xff] %v1668
      %1765 = vst [vmem:[#allocation4 + $0x160] sm:$0xff] %v1669
      %1766 = vst [vmem:[#allocation4 + $0x168] sm:$0xff] %v1670
      %1767 = vst [vmem:[#allocation4 + $0x170] sm:$0xff] %v1671
      %1768 = vst [vmem:[#allocation4 + $0x178] sm:$0xff] %v1672
      %1769 = vst [vmem:[#allocation4 + $0x180] sm:$0xff] %v1673
      %1770 = vst [vmem:[#allocation4 + $0x188] sm:$0xff] %v1674
      %1771 = vst [vmem:[#allocation4 + $0x190] sm:$0xff] %v1675
      %1772 = vst [vmem:[#allocation4 + $0x198] sm:$0xff] %v1676
      %1773 = vst [vmem:[#allocation4 + $0x1a0] sm:$0xff] %v1677
      %1774 = vst [vmem:[#allocation4 + $0x1a8] sm:$0xff] %v1678
      %1775 = vst [vmem:[#allocation4 + $0x1b0] sm:$0xff] %v1679
      %1776 = vst [vmem:[#allocation4 + $0x1b8] sm:$0xff] %v1680
      %1777 = vst [vmem:[#allocation4 + $0x1c0] sm:$0xff] %v1681
      %1778 = vst [vmem:[#allocation4 + $0x1c8] sm:$0xff] %v1682
      %1779 = vst [vmem:[#allocation4 + $0x1d0] sm:$0xff] %v1683
      %1780 = vst [vmem:[#allocation4 + $0x1d8] sm:$0xff] %v1684
      %1781 = vst [vmem:[#allocation4 + $0x1e0] sm:$0xff] %v1685
      %1782 = vst [vmem:[#allocation4 + $0x1e8] sm:$0xff] %v1686
      %1783 = vst [vmem:[#allocation4 + $0x1f0] sm:$0xff] %v1687
      %1784 = vst [vmem:[#allocation4 + $0x1f8] sm:$0xff] %v1688
      %1785 = vst [vmem:[#allocation4 + $0x200] sm:$0xff] %v1689
      %1786 = vst [vmem:[#allocation4 + $0x208] sm:$0xff] %v1690
      %1787 = vst [vmem:[#allocation4 + $0x210] sm:$0xff] %v1691
      %1788 = vst [vmem:[#allocation4 + $0x218] sm:$0xff] %v1692
      %1789 = vst [vmem:[#allocation4 + $0x220] sm:$0xff] %v1693
      %1790 = vst [vmem:[#allocation4 + $0x228] sm:$0xff] %v1694
      %1791 = vst [vmem:[#allocation4 + $0x230] sm:$0xff] %v1695
      %1792 = vst [vmem:[#allocation4 + $0x238] sm:$0xff] %v1696
      %1793 = vst [vmem:[#allocation4 + $0x240] sm:$0xff] %v1697
      %1794 = vst [vmem:[#allocation4 + $0x248] sm:$0xff] %v1698
      %1795 = vst [vmem:[#allocation4 + $0x250] sm:$0xff] %v1699
      %1796 = vst [vmem:[#allocation4 + $0x258] sm:$0xff] %v1700
      %1797 = vst [vmem:[#allocation4 + $0x260] sm:$0xff] %v1701
      %1798 = vst [vmem:[#allocation4 + $0x268] sm:$0xff] %v1702
      %1799 = vst [vmem:[#allocation4 + $0x270] sm:$0xff] %v1703
      %1800 = vst [vmem:[#allocation4 + $0x278] sm:$0xff] %v1704
      %1801 = vst [vmem:[#allocation4 + $0x280] sm:$0xff] %v1705
      %1802 = vst [vmem:[#allocation4 + $0x288] sm:$0xff] %v1706
      %1803 = vst [vmem:[#allocation4 + $0x290] sm:$0xff] %v1707
      %1804 = vst [vmem:[#allocation4 + $0x298] sm:$0xff] %v1708
      %1805 = vst [vmem:[#allocation4 + $0x2a0] sm:$0xff] %v1709
      %1806 = vst [vmem:[#allocation4 + $0x2a8] sm:$0xff] %v1710
      %1807 = vst [vmem:[#allocation4 + $0x2b0] sm:$0xff] %v1711
      %1808 = vst [vmem:[#allocation4 + $0x2b8] sm:$0xff] %v1712
      %1809 = vst [vmem:[#allocation4 + $0x2c0] sm:$0xff] %v1713
      %1810 = vst [vmem:[#allocation4 + $0x2c8] sm:$0xff] %v1714
      %1811 = vst [vmem:[#allocation4 + $0x2d0] sm:$0xff] %v1715
      %1812 = vst [vmem:[#allocation4 + $0x2d8] sm:$0xff] %v1716
      %1813 = vst [vmem:[#allocation4 + $0x2e0] sm:$0xff] %v1717
      %1814 = vst [vmem:[#allocation4 + $0x2e8] sm:$0xff] %v1718
      %1815 = vst [vmem:[#allocation4 + $0x2f0] sm:$0xff] %v1719
      %1816 = vst [vmem:[#allocation4 + $0x2f8] sm:$0xff] %v1720
    $region85: #{f2s_forward.1} parent=1 // pred_fallthru
      _
    %v1817 = vld [vmem:[#allocation5] sm:$0xff]
    %v1818 = vld [vmem:[#allocation5 + $0x8] sm:$0xff]
    %v1819 = vld [vmem:[#allocation5 + $0x10] sm:$0xff]
    %v1820 = vld [vmem:[#allocation5 + $0x18] sm:$0xff]
    %v1821 = vld [vmem:[#allocation5 + $0x20] sm:$0xff]
    %v1822 = vld [vmem:[#allocation5 + $0x28] sm:$0xff]
    %v1823 = vld [vmem:[#allocation5 + $0x30] sm:$0xff]
    %v1824 = vld [vmem:[#allocation5 + $0x38] sm:$0xff]
    %v1825 = vpack.c.bf16 %v1817, %v1817
    %v1826 = vpack.c.bf16 %v1818, %v1818
    %v1827 = vpack.c.bf16 %v1819, %v1819
    %v1828 = vpack.c.bf16 %v1820, %v1820
    %v1829 = vpack.c.bf16 %v1821, %v1821
    %v1830 = vpack.c.bf16 %v1822, %v1822
    %v1831 = vpack.c.bf16 %v1823, %v1823
    %v1832 = vpack.c.bf16 %v1824, %v1824
    %v1833 = vld [vmem:[#allocation2] sm:$0xff]
    %v1834 = vld [vmem:[#allocation2 + $0x8] sm:$0xff]
    %v1835 = vld [vmem:[#allocation2 + $0x10] sm:$0xff]
    %v1836 = vld [vmem:[#allocation2 + $0x18] sm:$0xff]
    %v1837 = vld [vmem:[#allocation2 + $0x20] sm:$0xff]
    %v1838 = vld [vmem:[#allocation2 + $0x28] sm:$0xff]
    %v1839 = vld [vmem:[#allocation2 + $0x30] sm:$0xff]
    %v1840 = vld [vmem:[#allocation2 + $0x38] sm:$0xff]
    %v1841 = vld [vmem:[#allocation2 + $0x40] sm:$0xff]
    %v1842 = vld [vmem:[#allocation2 + $0x48] sm:$0xff]
    %v1843 = vld [vmem:[#allocation2 + $0x50] sm:$0xff]
    %v1844 = vld [vmem:[#allocation2 + $0x58] sm:$0xff]
    %v1845 = vld [vmem:[#allocation2 + $0x60] sm:$0xff]
    %v1846 = vld [vmem:[#allocation2 + $0x68] sm:$0xff]
    %v1847 = vld [vmem:[#allocation2 + $0x70] sm:$0xff]
    %v1848 = vld [vmem:[#allocation2 + $0x78] sm:$0xff]
    %v1849 = vld [vmem:[#allocation2 + $0x80] sm:$0xff]
    %v1850 = vld [vmem:[#allocation2 + $0x88] sm:$0xff]
    %v1851 = vld [vmem:[#allocation2 + $0x90] sm:$0xff]
    %v1852 = vld [vmem:[#allocation2 + $0x98] sm:$0xff]
    %v1853 = vld [vmem:[#allocation2 + $0xa0] sm:$0xff]
    %v1854 = vld [vmem:[#allocation2 + $0xa8] sm:$0xff]
    %v1855 = vld [vmem:[#allocation2 + $0xb0] sm:$0xff]
    %v1856 = vld [vmem:[#allocation2 + $0xb8] sm:$0xff]
    %v1857 = vld [vmem:[#allocation2 + $0xc0] sm:$0xff]
    %v1858 = vld [vmem:[#allocation2 + $0xc8] sm:$0xff]
    %v1859 = vld [vmem:[#allocation2 + $0xd0] sm:$0xff]
    %v1860 = vld [vmem:[#allocation2 + $0xd8] sm:$0xff]
    %v1861 = vld [vmem:[#allocation2 + $0xe0] sm:$0xff]
    %v1862 = vld [vmem:[#allocation2 + $0xe8] sm:$0xff]
    %v1863 = vld [vmem:[#allocation2 + $0xf0] sm:$0xff]
    %v1864 = vld [vmem:[#allocation2 + $0xf8] sm:$0xff]
    %v1865 = vld [vmem:[#allocation2 + $0x100] sm:$0xff]
    %v1866 = vld [vmem:[#allocation2 + $0x108] sm:$0xff]
    %v1867 = vld [vmem:[#allocation2 + $0x110] sm:$0xff]
    %v1868 = vld [vmem:[#allocation2 + $0x118] sm:$0xff]
    %v1869 = vld [vmem:[#allocation2 + $0x120] sm:$0xff]
    %v1870 = vld [vmem:[#allocation2 + $0x128] sm:$0xff]
    %v1871 = vld [vmem:[#allocation2 + $0x130] sm:$0xff]
    %v1872 = vld [vmem:[#allocation2 + $0x138] sm:$0xff]
    %v1873 = vld [vmem:[#allocation2 + $0x140] sm:$0xff]
    %v1874 = vld [vmem:[#allocation2 + $0x148] sm:$0xff]
    %v1875 = vld [vmem:[#allocation2 + $0x150] sm:$0xff]
    %v1876 = vld [vmem:[#allocation2 + $0x158] sm:$0xff]
    %v1877 = vld [vmem:[#allocation2 + $0x160] sm:$0xff]
    %v1878 = vld [vmem:[#allocation2 + $0x168] sm:$0xff]
    %v1879 = vld [vmem:[#allocation2 + $0x170] sm:$0xff]
    %v1880 = vld [vmem:[#allocation2 + $0x178] sm:$0xff]
    %v1881 = vld [vmem:[#allocation2 + $0x180] sm:$0xff]
    %v1882 = vld [vmem:[#allocation2 + $0x188] sm:$0xff]
    %v1883 = vld [vmem:[#allocation2 + $0x190] sm:$0xff]
    %v1884 = vld [vmem:[#allocation2 + $0x198] sm:$0xff]
    %v1885 = vld [vmem:[#allocation2 + $0x1a0] sm:$0xff]
    %v1886 = vld [vmem:[#allocation2 + $0x1a8] sm:$0xff]
    %v1887 = vld [vmem:[#allocation2 + $0x1b0] sm:$0xff]
    %v1888 = vld [vmem:[#allocation2 + $0x1b8] sm:$0xff]
    %v1889 = vld [vmem:[#allocation2 + $0x1c0] sm:$0xff]
    %v1890 = vld [vmem:[#allocation2 + $0x1c8] sm:$0xff]
    %v1891 = vld [vmem:[#allocation2 + $0x1d0] sm:$0xff]
    %v1892 = vld [vmem:[#allocation2 + $0x1d8] sm:$0xff]
    %v1893 = vld [vmem:[#allocation2 + $0x1e0] sm:$0xff]
    %v1894 = vld [vmem:[#allocation2 + $0x1e8] sm:$0xff]
    %v1895 = vld [vmem:[#allocation2 + $0x1f0] sm:$0xff]
    %v1896 = vld [vmem:[#allocation2 + $0x1f8] sm:$0xff]
    %v1897 = vld [vmem:[#allocation2 + $0x200] sm:$0xff]
    %v1898 = vld [vmem:[#allocation2 + $0x208] sm:$0xff]
    %v1899 = vld [vmem:[#allocation2 + $0x210] sm:$0xff]
    %v1900 = vld [vmem:[#allocation2 + $0x218] sm:$0xff]
    %v1901 = vld [vmem:[#allocation2 + $0x220] sm:$0xff]
    %v1902 = vld [vmem:[#allocation2 + $0x228] sm:$0xff]
    %v1903 = vld [vmem:[#allocation2 + $0x230] sm:$0xff]
    %v1904 = vld [vmem:[#allocation2 + $0x238] sm:$0xff]
    %v1905 = vld [vmem:[#allocation2 + $0x240] sm:$0xff]
    %v1906 = vld [vmem:[#allocation2 + $0x248] sm:$0xff]
    %v1907 = vld [vmem:[#allocation2 + $0x250] sm:$0xff]
    %v1908 = vld [vmem:[#allocation2 + $0x258] sm:$0xff]
    %v1909 = vld [vmem:[#allocation2 + $0x260] sm:$0xff]
    %v1910 = vld [vmem:[#allocation2 + $0x268] sm:$0xff]
    %v1911 = vld [vmem:[#allocation2 + $0x270] sm:$0xff]
    %v1912 = vld [vmem:[#allocation2 + $0x278] sm:$0xff]
    %v1913 = vld [vmem:[#allocation2 + $0x280] sm:$0xff]
    %v1914 = vld [vmem:[#allocation2 + $0x288] sm:$0xff]
    %v1915 = vld [vmem:[#allocation2 + $0x290] sm:$0xff]
    %v1916 = vld [vmem:[#allocation2 + $0x298] sm:$0xff]
    %v1917 = vld [vmem:[#allocation2 + $0x2a0] sm:$0xff]
    %v1918 = vld [vmem:[#allocation2 + $0x2a8] sm:$0xff]
    %v1919 = vld [vmem:[#allocation2 + $0x2b0] sm:$0xff]
    %v1920 = vld [vmem:[#allocation2 + $0x2b8] sm:$0xff]
    %v1921 = vld [vmem:[#allocation2 + $0x2c0] sm:$0xff]
    %v1922 = vld [vmem:[#allocation2 + $0x2c8] sm:$0xff]
    %v1923 = vld [vmem:[#allocation2 + $0x2d0] sm:$0xff]
    %v1924 = vld [vmem:[#allocation2 + $0x2d8] sm:$0xff]
    %v1925 = vld [vmem:[#allocation2 + $0x2e0] sm:$0xff]
    %v1926 = vld [vmem:[#allocation2 + $0x2e8] sm:$0xff]
    %v1927 = vld [vmem:[#allocation2 + $0x2f0] sm:$0xff]
    %v1928 = vld [vmem:[#allocation2 + $0x2f8] sm:$0xff]
    %v1929 = vld [vmem:[#allocation2 + $0x300] sm:$0xff]
    %v1930 = vld [vmem:[#allocation2 + $0x308] sm:$0xff]
    %v1931 = vld [vmem:[#allocation2 + $0x310] sm:$0xff]
    %v1932 = vld [vmem:[#allocation2 + $0x318] sm:$0xff]
    %v1933 = vld [vmem:[#allocation2 + $0x320] sm:$0xff]
    %v1934 = vld [vmem:[#allocation2 + $0x328] sm:$0xff]
    %v1935 = vld [vmem:[#allocation2 + $0x330] sm:$0xff]
    %v1936 = vld [vmem:[#allocation2 + $0x338] sm:$0xff]
    %v1937 = vld [vmem:[#allocation2 + $0x340] sm:$0xff]
    %v1938 = vld [vmem:[#allocation2 + $0x348] sm:$0xff]
    %v1939 = vld [vmem:[#allocation2 + $0x350] sm:$0xff]
    %v1940 = vld [vmem:[#allocation2 + $0x358] sm:$0xff]
    %v1941 = vld [vmem:[#allocation2 + $0x360] sm:$0xff]
    %v1942 = vld [vmem:[#allocation2 + $0x368] sm:$0xff]
    %v1943 = vld [vmem:[#allocation2 + $0x370] sm:$0xff]
    %v1944 = vld [vmem:[#allocation2 + $0x378] sm:$0xff]
    %v1945 = vld [vmem:[#allocation2 + $0x380] sm:$0xff]
    %v1946 = vld [vmem:[#allocation2 + $0x388] sm:$0xff]
    %v1947 = vld [vmem:[#allocation2 + $0x390] sm:$0xff]
    %v1948 = vld [vmem:[#allocation2 + $0x398] sm:$0xff]
    %v1949 = vld [vmem:[#allocation2 + $0x3a0] sm:$0xff]
    %v1950 = vld [vmem:[#allocation2 + $0x3a8] sm:$0xff]
    %v1951 = vld [vmem:[#allocation2 + $0x3b0] sm:$0xff]
    %v1952 = vld [vmem:[#allocation2 + $0x3b8] sm:$0xff]
    %v1953 = vld [vmem:[#allocation2 + $0x3c0] sm:$0xff]
    %v1954 = vld [vmem:[#allocation2 + $0x3c8] sm:$0xff]
    %v1955 = vld [vmem:[#allocation2 + $0x3d0] sm:$0xff]
    %v1956 = vld [vmem:[#allocation2 + $0x3d8] sm:$0xff]
    %v1957 = vld [vmem:[#allocation2 + $0x3e0] sm:$0xff]
    %v1958 = vld [vmem:[#allocation2 + $0x3e8] sm:$0xff]
    %v1959 = vld [vmem:[#allocation2 + $0x3f0] sm:$0xff]
    %v1960 = vld [vmem:[#allocation2 + $0x3f8] sm:$0xff]
    %v1961 = vld [vmem:[#allocation2 + $0x400] sm:$0xff]
    %v1962 = vld [vmem:[#allocation2 + $0x408] sm:$0xff]
    %v1963 = vld [vmem:[#allocation2 + $0x410] sm:$0xff]
    %v1964 = vld [vmem:[#allocation2 + $0x418] sm:$0xff]
    %v1965 = vld [vmem:[#allocation2 + $0x420] sm:$0xff]
    %v1966 = vld [vmem:[#allocation2 + $0x428] sm:$0xff]
    %v1967 = vld [vmem:[#allocation2 + $0x430] sm:$0xff]
    %v1968 = vld [vmem:[#allocation2 + $0x438] sm:$0xff]
    %v1969 = vld [vmem:[#allocation2 + $0x440] sm:$0xff]
    %v1970 = vld [vmem:[#allocation2 + $0x448] sm:$0xff]
    %v1971 = vld [vmem:[#allocation2 + $0x450] sm:$0xff]
    %v1972 = vld [vmem:[#allocation2 + $0x458] sm:$0xff]
    %v1973 = vld [vmem:[#allocation2 + $0x460] sm:$0xff]
    %v1974 = vld [vmem:[#allocation2 + $0x468] sm:$0xff]
    %v1975 = vld [vmem:[#allocation2 + $0x470] sm:$0xff]
    %v1976 = vld [vmem:[#allocation2 + $0x478] sm:$0xff]
    %v1977 = vld [vmem:[#allocation2 + $0x480] sm:$0xff]
    %v1978 = vld [vmem:[#allocation2 + $0x488] sm:$0xff]
    %v1979 = vld [vmem:[#allocation2 + $0x490] sm:$0xff]
    %v1980 = vld [vmem:[#allocation2 + $0x498] sm:$0xff]
    %v1981 = vld [vmem:[#allocation2 + $0x4a0] sm:$0xff]
    %v1982 = vld [vmem:[#allocation2 + $0x4a8] sm:$0xff]
    %v1983 = vld [vmem:[#allocation2 + $0x4b0] sm:$0xff]
    %v1984 = vld [vmem:[#allocation2 + $0x4b8] sm:$0xff]
    %v1985 = vld [vmem:[#allocation2 + $0x4c0] sm:$0xff]
    %v1986 = vld [vmem:[#allocation2 + $0x4c8] sm:$0xff]
    %v1987 = vld [vmem:[#allocation2 + $0x4d0] sm:$0xff]
    %v1988 = vld [vmem:[#allocation2 + $0x4d8] sm:$0xff]
    %v1989 = vld [vmem:[#allocation2 + $0x4e0] sm:$0xff]
    %v1990 = vld [vmem:[#allocation2 + $0x4e8] sm:$0xff]
    %v1991 = vld [vmem:[#allocation2 + $0x4f0] sm:$0xff]
    %v1992 = vld [vmem:[#allocation2 + $0x4f8] sm:$0xff]
    %v1993 = vld [vmem:[#allocation2 + $0x500] sm:$0xff]
    %v1994 = vld [vmem:[#allocation2 + $0x508] sm:$0xff]
    %v1995 = vld [vmem:[#allocation2 + $0x510] sm:$0xff]
    %v1996 = vld [vmem:[#allocation2 + $0x518] sm:$0xff]
    %v1997 = vld [vmem:[#allocation2 + $0x520] sm:$0xff]
    %v1998 = vld [vmem:[#allocation2 + $0x528] sm:$0xff]
    %v1999 = vld [vmem:[#allocation2 + $0x530] sm:$0xff]
    %v2000 = vld [vmem:[#allocation2 + $0x538] sm:$0xff]
    %v2001 = vld [vmem:[#allocation2 + $0x540] sm:$0xff]
    %v2002 = vld [vmem:[#allocation2 + $0x548] sm:$0xff]
    %v2003 = vld [vmem:[#allocation2 + $0x550] sm:$0xff]
    %v2004 = vld [vmem:[#allocation2 + $0x558] sm:$0xff]
    %v2005 = vld [vmem:[#allocation2 + $0x560] sm:$0xff]
    %v2006 = vld [vmem:[#allocation2 + $0x568] sm:$0xff]
    %v2007 = vld [vmem:[#allocation2 + $0x570] sm:$0xff]
    %v2008 = vld [vmem:[#allocation2 + $0x578] sm:$0xff]
    %v2009 = vld [vmem:[#allocation2 + $0x580] sm:$0xff]
    %v2010 = vld [vmem:[#allocation2 + $0x588] sm:$0xff]
    %v2011 = vld [vmem:[#allocation2 + $0x590] sm:$0xff]
    %v2012 = vld [vmem:[#allocation2 + $0x598] sm:$0xff]
    %v2013 = vld [vmem:[#allocation2 + $0x5a0] sm:$0xff]
    %v2014 = vld [vmem:[#allocation2 + $0x5a8] sm:$0xff]
    %v2015 = vld [vmem:[#allocation2 + $0x5b0] sm:$0xff]
    %v2016 = vld [vmem:[#allocation2 + $0x5b8] sm:$0xff]
    %v2017 = vld [vmem:[#allocation2 + $0x5c0] sm:$0xff]
    %v2018 = vld [vmem:[#allocation2 + $0x5c8] sm:$0xff]
    %v2019 = vld [vmem:[#allocation2 + $0x5d0] sm:$0xff]
    %v2020 = vld [vmem:[#allocation2 + $0x5d8] sm:$0xff]
    %v2021 = vld [vmem:[#allocation2 + $0x5e0] sm:$0xff]
    %v2022 = vld [vmem:[#allocation2 + $0x5e8] sm:$0xff]
    %v2023 = vld [vmem:[#allocation2 + $0x5f0] sm:$0xff]
    %v2024 = vld [vmem:[#allocation2 + $0x5f8] sm:$0xff]
    %v2025 = vld [vmem:[#allocation2 + $0x600] sm:$0xff]
    %v2026 = vld [vmem:[#allocation2 + $0x608] sm:$0xff]
    %v2027 = vld [vmem:[#allocation2 + $0x610] sm:$0xff]
    %v2028 = vld [vmem:[#allocation2 + $0x618] sm:$0xff]
    %v2029 = vld [vmem:[#allocation2 + $0x620] sm:$0xff]
    %v2030 = vld [vmem:[#allocation2 + $0x628] sm:$0xff]
    %v2031 = vld [vmem:[#allocation2 + $0x630] sm:$0xff]
    %v2032 = vld [vmem:[#allocation2 + $0x638] sm:$0xff]
    %v2033 = vld [vmem:[#allocation2 + $0x640] sm:$0xff]
    %v2034 = vld [vmem:[#allocation2 + $0x648] sm:$0xff]
    %v2035 = vld [vmem:[#allocation2 + $0x650] sm:$0xff]
    %v2036 = vld [vmem:[#allocation2 + $0x658] sm:$0xff]
    %v2037 = vld [vmem:[#allocation2 + $0x660] sm:$0xff]
    %v2038 = vld [vmem:[#allocation2 + $0x668] sm:$0xff]
    %v2039 = vld [vmem:[#allocation2 + $0x670] sm:$0xff]
    %v2040 = vld [vmem:[#allocation2 + $0x678] sm:$0xff]
    %v2041 = vld [vmem:[#allocation2 + $0x680] sm:$0xff]
    %v2042 = vld [vmem:[#allocation2 + $0x688] sm:$0xff]
    %v2043 = vld [vmem:[#allocation2 + $0x690] sm:$0xff]
    %v2044 = vld [vmem:[#allocation2 + $0x698] sm:$0xff]
    %v2045 = vld [vmem:[#allocation2 + $0x6a0] sm:$0xff]
    %v2046 = vld [vmem:[#allocation2 + $0x6a8] sm:$0xff]
    %v2047 = vld [vmem:[#allocation2 + $0x6b0] sm:$0xff]
    %v2048 = vld [vmem:[#allocation2 + $0x6b8] sm:$0xff]
    %v2049 = vld [vmem:[#allocation2 + $0x6c0] sm:$0xff]
    %v2050 = vld [vmem:[#allocation2 + $0x6c8] sm:$0xff]
    %v2051 = vld [vmem:[#allocation2 + $0x6d0] sm:$0xff]
    %v2052 = vld [vmem:[#allocation2 + $0x6d8] sm:$0xff]
    %v2053 = vld [vmem:[#allocation2 + $0x6e0] sm:$0xff]
    %v2054 = vld [vmem:[#allocation2 + $0x6e8] sm:$0xff]
    %v2055 = vld [vmem:[#allocation2 + $0x6f0] sm:$0xff]
    %v2056 = vld [vmem:[#allocation2 + $0x6f8] sm:$0xff]
    %v2057 = vld [vmem:[#allocation2 + $0x700] sm:$0xff]
    %v2058 = vld [vmem:[#allocation2 + $0x708] sm:$0xff]
    %v2059 = vld [vmem:[#allocation2 + $0x710] sm:$0xff]
    %v2060 = vld [vmem:[#allocation2 + $0x718] sm:$0xff]
    %v2061 = vld [vmem:[#allocation2 + $0x720] sm:$0xff]
    %v2062 = vld [vmem:[#allocation2 + $0x728] sm:$0xff]
    %v2063 = vld [vmem:[#allocation2 + $0x730] sm:$0xff]
    %v2064 = vld [vmem:[#allocation2 + $0x738] sm:$0xff]
    %v2065 = vld [vmem:[#allocation2 + $0x740] sm:$0xff]
    %v2066 = vld [vmem:[#allocation2 + $0x748] sm:$0xff]
    %v2067 = vld [vmem:[#allocation2 + $0x750] sm:$0xff]
    %v2068 = vld [vmem:[#allocation2 + $0x758] sm:$0xff]
    %v2069 = vld [vmem:[#allocation2 + $0x760] sm:$0xff]
    %v2070 = vld [vmem:[#allocation2 + $0x768] sm:$0xff]
    %v2071 = vld [vmem:[#allocation2 + $0x770] sm:$0xff]
    %v2072 = vld [vmem:[#allocation2 + $0x778] sm:$0xff]
    %v2073 = vld [vmem:[#allocation2 + $0x780] sm:$0xff]
    %v2074 = vld [vmem:[#allocation2 + $0x788] sm:$0xff]
    %v2075 = vld [vmem:[#allocation2 + $0x790] sm:$0xff]
    %v2076 = vld [vmem:[#allocation2 + $0x798] sm:$0xff]
    %v2077 = vld [vmem:[#allocation2 + $0x7a0] sm:$0xff]
    %v2078 = vld [vmem:[#allocation2 + $0x7a8] sm:$0xff]
    %v2079 = vld [vmem:[#allocation2 + $0x7b0] sm:$0xff]
    %v2080 = vld [vmem:[#allocation2 + $0x7b8] sm:$0xff]
    %v2081 = vld [vmem:[#allocation2 + $0x7c0] sm:$0xff]
    %v2082 = vld [vmem:[#allocation2 + $0x7c8] sm:$0xff]
    %v2083 = vld [vmem:[#allocation2 + $0x7d0] sm:$0xff]
    %v2084 = vld [vmem:[#allocation2 + $0x7d8] sm:$0xff]
    %v2085 = vld [vmem:[#allocation2 + $0x7e0] sm:$0xff]
    %v2086 = vld [vmem:[#allocation2 + $0x7e8] sm:$0xff]
    %v2087 = vld [vmem:[#allocation2 + $0x7f0] sm:$0xff]
    %v2088 = vld [vmem:[#allocation2 + $0x7f8] sm:$0xff]
    %v2089 = vld [vmem:[#allocation2 + $0x800] sm:$0xff]
    %v2090 = vld [vmem:[#allocation2 + $0x808] sm:$0xff]
    %v2091 = vld [vmem:[#allocation2 + $0x810] sm:$0xff]
    %v2092 = vld [vmem:[#allocation2 + $0x818] sm:$0xff]
    %v2093 = vld [vmem:[#allocation2 + $0x820] sm:$0xff]
    %v2094 = vld [vmem:[#allocation2 + $0x828] sm:$0xff]
    %v2095 = vld [vmem:[#allocation2 + $0x830] sm:$0xff]
    %v2096 = vld [vmem:[#allocation2 + $0x838] sm:$0xff]
    %v2097 = vld [vmem:[#allocation2 + $0x840] sm:$0xff]
    %v2098 = vld [vmem:[#allocation2 + $0x848] sm:$0xff]
    %v2099 = vld [vmem:[#allocation2 + $0x850] sm:$0xff]
    %v2100 = vld [vmem:[#allocation2 + $0x858] sm:$0xff]
    %v2101 = vld [vmem:[#allocation2 + $0x860] sm:$0xff]
    %v2102 = vld [vmem:[#allocation2 + $0x868] sm:$0xff]
    %v2103 = vld [vmem:[#allocation2 + $0x870] sm:$0xff]
    %v2104 = vld [vmem:[#allocation2 + $0x878] sm:$0xff]
    %v2105 = vld [vmem:[#allocation2 + $0x880] sm:$0xff]
    %v2106 = vld [vmem:[#allocation2 + $0x888] sm:$0xff]
    %v2107 = vld [vmem:[#allocation2 + $0x890] sm:$0xff]
    %v2108 = vld [vmem:[#allocation2 + $0x898] sm:$0xff]
    %v2109 = vld [vmem:[#allocation2 + $0x8a0] sm:$0xff]
    %v2110 = vld [vmem:[#allocation2 + $0x8a8] sm:$0xff]
    %v2111 = vld [vmem:[#allocation2 + $0x8b0] sm:$0xff]
    %v2112 = vld [vmem:[#allocation2 + $0x8b8] sm:$0xff]
    %v2113 = vld [vmem:[#allocation2 + $0x8c0] sm:$0xff]
    %v2114 = vld [vmem:[#allocation2 + $0x8c8] sm:$0xff]
    %v2115 = vld [vmem:[#allocation2 + $0x8d0] sm:$0xff]
    %v2116 = vld [vmem:[#allocation2 + $0x8d8] sm:$0xff]
    %v2117 = vld [vmem:[#allocation2 + $0x8e0] sm:$0xff]
    %v2118 = vld [vmem:[#allocation2 + $0x8e8] sm:$0xff]
    %v2119 = vld [vmem:[#allocation2 + $0x8f0] sm:$0xff]
    %v2120 = vld [vmem:[#allocation2 + $0x8f8] sm:$0xff]
    %v2121 = vld [vmem:[#allocation2 + $0x900] sm:$0xff]
    %v2122 = vld [vmem:[#allocation2 + $0x908] sm:$0xff]
    %v2123 = vld [vmem:[#allocation2 + $0x910] sm:$0xff]
    %v2124 = vld [vmem:[#allocation2 + $0x918] sm:$0xff]
    %v2125 = vld [vmem:[#allocation2 + $0x920] sm:$0xff]
    %v2126 = vld [vmem:[#allocation2 + $0x928] sm:$0xff]
    %v2127 = vld [vmem:[#allocation2 + $0x930] sm:$0xff]
    %v2128 = vld [vmem:[#allocation2 + $0x938] sm:$0xff]
    %v2129 = vld [vmem:[#allocation2 + $0x940] sm:$0xff]
    %v2130 = vld [vmem:[#allocation2 + $0x948] sm:$0xff]
    %v2131 = vld [vmem:[#allocation2 + $0x950] sm:$0xff]
    %v2132 = vld [vmem:[#allocation2 + $0x958] sm:$0xff]
    %v2133 = vld [vmem:[#allocation2 + $0x960] sm:$0xff]
    %v2134 = vld [vmem:[#allocation2 + $0x968] sm:$0xff]
    %v2135 = vld [vmem:[#allocation2 + $0x970] sm:$0xff]
    %v2136 = vld [vmem:[#allocation2 + $0x978] sm:$0xff]
    %v2137 = vld [vmem:[#allocation2 + $0x980] sm:$0xff]
    %v2138 = vld [vmem:[#allocation2 + $0x988] sm:$0xff]
    %v2139 = vld [vmem:[#allocation2 + $0x990] sm:$0xff]
    %v2140 = vld [vmem:[#allocation2 + $0x998] sm:$0xff]
    %v2141 = vld [vmem:[#allocation2 + $0x9a0] sm:$0xff]
    %v2142 = vld [vmem:[#allocation2 + $0x9a8] sm:$0xff]
    %v2143 = vld [vmem:[#allocation2 + $0x9b0] sm:$0xff]
    %v2144 = vld [vmem:[#allocation2 + $0x9b8] sm:$0xff]
    %v2145 = vld [vmem:[#allocation2 + $0x9c0] sm:$0xff]
    %v2146 = vld [vmem:[#allocation2 + $0x9c8] sm:$0xff]
    %v2147 = vld [vmem:[#allocation2 + $0x9d0] sm:$0xff]
    %v2148 = vld [vmem:[#allocation2 + $0x9d8] sm:$0xff]
    %v2149 = vld [vmem:[#allocation2 + $0x9e0] sm:$0xff]
    %v2150 = vld [vmem:[#allocation2 + $0x9e8] sm:$0xff]
    %v2151 = vld [vmem:[#allocation2 + $0x9f0] sm:$0xff]
    %v2152 = vld [vmem:[#allocation2 + $0x9f8] sm:$0xff]
    %v2153 = vld [vmem:[#allocation2 + $0xa00] sm:$0xff]
    %v2154 = vld [vmem:[#allocation2 + $0xa08] sm:$0xff]
    %v2155 = vld [vmem:[#allocation2 + $0xa10] sm:$0xff]
    %v2156 = vld [vmem:[#allocation2 + $0xa18] sm:$0xff]
    %v2157 = vld [vmem:[#allocation2 + $0xa20] sm:$0xff]
    %v2158 = vld [vmem:[#allocation2 + $0xa28] sm:$0xff]
    %v2159 = vld [vmem:[#allocation2 + $0xa30] sm:$0xff]
    %v2160 = vld [vmem:[#allocation2 + $0xa38] sm:$0xff]
    %v2161 = vld [vmem:[#allocation2 + $0xa40] sm:$0xff]
    %v2162 = vld [vmem:[#allocation2 + $0xa48] sm:$0xff]
    %v2163 = vld [vmem:[#allocation2 + $0xa50] sm:$0xff]
    %v2164 = vld [vmem:[#allocation2 + $0xa58] sm:$0xff]
    %v2165 = vld [vmem:[#allocation2 + $0xa60] sm:$0xff]
    %v2166 = vld [vmem:[#allocation2 + $0xa68] sm:$0xff]
    %v2167 = vld [vmem:[#allocation2 + $0xa70] sm:$0xff]
    %v2168 = vld [vmem:[#allocation2 + $0xa78] sm:$0xff]
    %v2169 = vld [vmem:[#allocation2 + $0xa80] sm:$0xff]
    %v2170 = vld [vmem:[#allocation2 + $0xa88] sm:$0xff]
    %v2171 = vld [vmem:[#allocation2 + $0xa90] sm:$0xff]
    %v2172 = vld [vmem:[#allocation2 + $0xa98] sm:$0xff]
    %v2173 = vld [vmem:[#allocation2 + $0xaa0] sm:$0xff]
    %v2174 = vld [vmem:[#allocation2 + $0xaa8] sm:$0xff]
    %v2175 = vld [vmem:[#allocation2 + $0xab0] sm:$0xff]
    %v2176 = vld [vmem:[#allocation2 + $0xab8] sm:$0xff]
    %v2177 = vld [vmem:[#allocation2 + $0xac0] sm:$0xff]
    %v2178 = vld [vmem:[#allocation2 + $0xac8] sm:$0xff]
    %v2179 = vld [vmem:[#allocation2 + $0xad0] sm:$0xff]
    %v2180 = vld [vmem:[#allocation2 + $0xad8] sm:$0xff]
    %v2181 = vld [vmem:[#allocation2 + $0xae0] sm:$0xff]
    %v2182 = vld [vmem:[#allocation2 + $0xae8] sm:$0xff]
    %v2183 = vld [vmem:[#allocation2 + $0xaf0] sm:$0xff]
    %v2184 = vld [vmem:[#allocation2 + $0xaf8] sm:$0xff]
    %v2185 = vld [vmem:[#allocation2 + $0xb00] sm:$0xff]
    %v2186 = vld [vmem:[#allocation2 + $0xb08] sm:$0xff]
    %v2187 = vld [vmem:[#allocation2 + $0xb10] sm:$0xff]
    %v2188 = vld [vmem:[#allocation2 + $0xb18] sm:$0xff]
    %v2189 = vld [vmem:[#allocation2 + $0xb20] sm:$0xff]
    %v2190 = vld [vmem:[#allocation2 + $0xb28] sm:$0xff]
    %v2191 = vld [vmem:[#allocation2 + $0xb30] sm:$0xff]
    %v2192 = vld [vmem:[#allocation2 + $0xb38] sm:$0xff]
    %v2193 = vld [vmem:[#allocation2 + $0xb40] sm:$0xff]
    %v2194 = vld [vmem:[#allocation2 + $0xb48] sm:$0xff]
    %v2195 = vld [vmem:[#allocation2 + $0xb50] sm:$0xff]
    %v2196 = vld [vmem:[#allocation2 + $0xb58] sm:$0xff]
    %v2197 = vld [vmem:[#allocation2 + $0xb60] sm:$0xff]
    %v2198 = vld [vmem:[#allocation2 + $0xb68] sm:$0xff]
    %v2199 = vld [vmem:[#allocation2 + $0xb70] sm:$0xff]
    %v2200 = vld [vmem:[#allocation2 + $0xb78] sm:$0xff]
    %v2201 = vld [vmem:[#allocation2 + $0xb80] sm:$0xff]
    %v2202 = vld [vmem:[#allocation2 + $0xb88] sm:$0xff]
    %v2203 = vld [vmem:[#allocation2 + $0xb90] sm:$0xff]
    %v2204 = vld [vmem:[#allocation2 + $0xb98] sm:$0xff]
    %v2205 = vld [vmem:[#allocation2 + $0xba0] sm:$0xff]
    %v2206 = vld [vmem:[#allocation2 + $0xba8] sm:$0xff]
    %v2207 = vld [vmem:[#allocation2 + $0xbb0] sm:$0xff]
    %v2208 = vld [vmem:[#allocation2 + $0xbb8] sm:$0xff]
    %v2209 = vld [vmem:[#allocation2 + $0xbc0] sm:$0xff]
    %v2210 = vld [vmem:[#allocation2 + $0xbc8] sm:$0xff]
    %v2211 = vld [vmem:[#allocation2 + $0xbd0] sm:$0xff]
    %v2212 = vld [vmem:[#allocation2 + $0xbd8] sm:$0xff]
    %v2213 = vld [vmem:[#allocation2 + $0xbe0] sm:$0xff]
    %v2214 = vld [vmem:[#allocation2 + $0xbe8] sm:$0xff]
    %v2215 = vld [vmem:[#allocation2 + $0xbf0] sm:$0xff]
    %v2216 = vld [vmem:[#allocation2 + $0xbf8] sm:$0xff]
    %2217 = vmatprep.subr.bf16.mxu0 %v1834
    %2218 = vmatpush1.bf16.msra.mxu0 %v1833
    %2219 = vmatprep.subr.bf16.mxu0 %v1840
    %2220 = vmatpush1.bf16.msra.mxu0 %v1839
    %2221 = vmatprep.subr.bf16.mxu0 %v1846
    %2222 = vmatpush1.bf16.msra.mxu0 %v1845
    %2223 = vmatprep.subr.bf16.mxu0 %v1852
    %2224 = vmatpush1.bf16.msra.mxu0 %v1851
    %2225 = vmatprep.subr.bf16.mxu0 %v1858
    %2226 = vmatpush1.bf16.msra.mxu0 %v1857
    %2227 = vmatprep.subr.bf16.mxu0 %v1864
    %2228 = vmatpush1.bf16.msra.mxu0 %v1863
    %2229 = vmatprep.subr.bf16.mxu0 %v1870
    %2230 = vmatpush1.bf16.msra.mxu0 %v1869
    %2231 = vmatprep.subr.bf16.mxu0 %v1876
    %2232 = vmatpush1.bf16.msra.mxu0 %v1875
    %2233 = vmatprep.subr.bf16.mxu0 %v1882
    %2234 = vmatpush1.bf16.msra.mxu0 %v1881
    %2235 = vmatprep.subr.bf16.mxu0 %v1888
    %2236 = vmatpush1.bf16.msra.mxu0 %v1887
    %2237 = vmatprep.subr.bf16.mxu0 %v1894
    %2238 = vmatpush1.bf16.msra.mxu0 %v1893
    %2239 = vmatprep.subr.bf16.mxu0 %v1900
    %2240 = vmatpush1.bf16.msra.mxu0 %v1899
    %2241 = vmatprep.subr.bf16.mxu0 %v1906
    %2242 = vmatpush1.bf16.msra.mxu0 %v1905
    %2243 = vmatprep.subr.bf16.mxu0 %v1912
    %2244 = vmatpush1.bf16.msra.mxu0 %v1911
    %2245 = vmatprep.subr.bf16.mxu0 %v1918
    %2246 = vmatpush1.bf16.msra.mxu0 %v1917
    %2247 = vmatprep.subr.bf16.mxu0 %v1924
    %2248 = vmatpush1.bf16.msra.mxu0 %v1923
    %2249 = vmatprep.mubr.bf16.mxu0 %v1826
    %2250 = vmatmul.mubr.bf16.gmra.mrb[0].mxu0 %v1825
    %v2251 = vpop.f32.mrb[0].mxu0
    %v2252 = vadd.f32 0.0, %v2251
    %v2253 = vpop.f32.mrb[0].mxu0
    %v2254 = vadd.f32 0.0, %v2253
    %v2255 = vpop.f32.mrb[0].mxu0
    %v2256 = vpop.f32.mrb[0].mxu0
    %2257 = vdwg.mxu0
    %2258 = vmatprep.subr.bf16.mxu0 %v1930
    %2259 = vmatpush1.bf16.msra.mxu0 %v1929
    %2260 = vmatprep.subr.bf16.mxu0 %v1936
    %2261 = vmatpush1.bf16.msra.mxu0 %v1935
    %2262 = vmatprep.subr.bf16.mxu0 %v1942
    %2263 = vmatpush1.bf16.msra.mxu0 %v1941
    %2264 = vmatprep.subr.bf16.mxu0 %v1948
    %2265 = vmatpush1.bf16.msra.mxu0 %v1947
    %2266 = vmatprep.subr.bf16.mxu0 %v1954
    %2267 = vmatpush1.bf16.msra.mxu0 %v1953
    %2268 = vmatprep.subr.bf16.mxu0 %v1960
    %2269 = vmatpush1.bf16.msra.mxu0 %v1959
    %2270 = vmatprep.subr.bf16.mxu0 %v1966
    %2271 = vmatpush1.bf16.msra.mxu0 %v1965
    %2272 = vmatprep.subr.bf16.mxu0 %v1972
    %2273 = vmatpush1.bf16.msra.mxu0 %v1971
    %2274 = vmatprep.subr.bf16.mxu0 %v1978
    %2275 = vmatpush1.bf16.msra.mxu0 %v1977
    %2276 = vmatprep.subr.bf16.mxu0 %v1984
    %2277 = vmatpush1.bf16.msra.mxu0 %v1983
    %2278 = vmatprep.subr.bf16.mxu0 %v1990
    %2279 = vmatpush1.bf16.msra.mxu0 %v1989
    %2280 = vmatprep.subr.bf16.mxu0 %v1996
    %2281 = vmatpush1.bf16.msra.mxu0 %v1995
    %2282 = vmatprep.subr.bf16.mxu0 %v2002
    %2283 = vmatpush1.bf16.msra.mxu0 %v2001
    %2284 = vmatprep.subr.bf16.mxu0 %v2008
    %2285 = vmatpush1.bf16.msra.mxu0 %v2007
    %2286 = vmatprep.subr.bf16.mxu0 %v2014
    %2287 = vmatpush1.bf16.msra.mxu0 %v2013
    %2288 = vmatprep.subr.bf16.mxu0 %v2020
    %2289 = vmatpush1.bf16.msra.mxu0 %v2019
    %2290 = vmatprep.mubr.bf16.mxu0 %v1828
    %2291 = vmatmul.mubr.bf16.gmra.mrb[0].mxu0 %v1827
    %v2292 = vpop.f32.mrb[0].mxu0
    %v2293 = vadd.f32 %v2252, %v2292
    %v2294 = vpop.f32.mrb[0].mxu0
    %v2295 = vadd.f32 %v2254, %v2294
    %v2296 = vpop.f32.mrb[0].mxu0
    %v2297 = vpop.f32.mrb[0].mxu0
    %2298 = vdwg.mxu0
    %2299 = vmatprep.subr.bf16.mxu0 %v2026
    %2300 = vmatpush1.bf16.msra.mxu0 %v2025
    %2301 = vmatprep.subr.bf16.mxu0 %v2032
    %2302 = vmatpush1.bf16.msra.mxu0 %v2031
    %2303 = vmatprep.subr.bf16.mxu0 %v2038
    %2304 = vmatpush1.bf16.msra.mxu0 %v2037
    %2305 = vmatprep.subr.bf16.mxu0 %v2044
    %2306 = vmatpush1.bf16.msra.mxu0 %v2043
    %2307 = vmatprep.subr.bf16.mxu0 %v2050
    %2308 = vmatpush1.bf16.msra.mxu0 %v2049
    %2309 = vmatprep.subr.bf16.mxu0 %v2056
    %2310 = vmatpush1.bf16.msra.mxu0 %v2055
    %2311 = vmatprep.subr.bf16.mxu0 %v2062
    %2312 = vmatpush1.bf16.msra.mxu0 %v2061
    %2313 = vmatprep.subr.bf16.mxu0 %v2068
    %2314 = vmatpush1.bf16.msra.mxu0 %v2067
    %2315 = vmatprep.subr.bf16.mxu0 %v2074
    %2316 = vmatpush1.bf16.msra.mxu0 %v2073
    %2317 = vmatprep.subr.bf16.mxu0 %v2080
    %2318 = vmatpush1.bf16.msra.mxu0 %v2079
    %2319 = vmatprep.subr.bf16.mxu0 %v2086
    %2320 = vmatpush1.bf16.msra.mxu0 %v2085
    %2321 = vmatprep.subr.bf16.mxu0 %v2092
    %2322 = vmatpush1.bf16.msra.mxu0 %v2091
    %2323 = vmatprep.subr.bf16.mxu0 %v2098
    %2324 = vmatpush1.bf16.msra.mxu0 %v2097
    %2325 = vmatprep.subr.bf16.mxu0 %v2104
    %2326 = vmatpush1.bf16.msra.mxu0 %v2103
    %2327 = vmatprep.subr.bf16.mxu0 %v2110
    %2328 = vmatpush1.bf16.msra.mxu0 %v2109
    %2329 = vmatprep.subr.bf16.mxu0 %v2116
    %2330 = vmatpush1.bf16.msra.mxu0 %v2115
    %2331 = vmatprep.mubr.bf16.mxu0 %v1830
    %2332 = vmatmul.mubr.bf16.gmra.mrb[0].mxu0 %v1829
    %v2333 = vpop.f32.mrb[0].mxu0
    %v2334 = vadd.f32 %v2293, %v2333
    %v2335 = vpop.f32.mrb[0].mxu0
    %v2336 = vadd.f32 %v2295, %v2335
    %v2337 = vpop.f32.mrb[0].mxu0
    %v2338 = vpop.f32.mrb[0].mxu0
    %2339 = vdwg.mxu0
    %2340 = vmatprep.subr.bf16.mxu0 %v2122
    %2341 = vmatpush1.bf16.msra.mxu0 %v2121
    %2342 = vmatprep.subr.bf16.mxu0 %v2128
    %2343 = vmatpush1.bf16.msra.mxu0 %v2127
    %2344 = vmatprep.subr.bf16.mxu0 %v2134
    %2345 = vmatpush1.bf16.msra.mxu0 %v2133
    %2346 = vmatprep.subr.bf16.mxu0 %v2140
    %2347 = vmatpush1.bf16.msra.mxu0 %v2139
    %2348 = vmatprep.subr.bf16.mxu0 %v2146
    %2349 = vmatpush1.bf16.msra.mxu0 %v2145
    %2350 = vmatprep.subr.bf16.mxu0 %v2152
    %2351 = vmatpush1.bf16.msra.mxu0 %v2151
    %2352 = vmatprep.subr.bf16.mxu0 %v2158
    %2353 = vmatpush1.bf16.msra.mxu0 %v2157
    %2354 = vmatprep.subr.bf16.mxu0 %v2164
    %2355 = vmatpush1.bf16.msra.mxu0 %v2163
    %2356 = vmatprep.subr.bf16.mxu0 %v2170
    %2357 = vmatpush1.bf16.msra.mxu0 %v2169
    %2358 = vmatprep.subr.bf16.mxu0 %v2176
    %2359 = vmatpush1.bf16.msra.mxu0 %v2175
    %2360 = vmatprep.subr.bf16.mxu0 %v2182
    %2361 = vmatpush1.bf16.msra.mxu0 %v2181
    %2362 = vmatprep.subr.bf16.mxu0 %v2188
    %2363 = vmatpush1.bf16.msra.mxu0 %v2187
    %2364 = vmatprep.subr.bf16.mxu0 %v2194
    %2365 = vmatpush1.bf16.msra.mxu0 %v2193
    %2366 = vmatprep.subr.bf16.mxu0 %v2200
    %2367 = vmatpush1.bf16.msra.mxu0 %v2199
    %2368 = vmatprep.subr.bf16.mxu0 %v2206
    %2369 = vmatpush1.bf16.msra.mxu0 %v2205
    %2370 = vmatprep.subr.bf16.mxu0 %v2212
    %2371 = vmatpush1.bf16.msra.mxu0 %v2211
    %2372 = vmatprep.mubr.bf16.mxu0 %v1832
    %2373 = vmatmul.mubr.bf16.gmra.mrb[0].mxu0 %v1831
    %v2374 = vpop.f32.mrb[0].mxu0
    %v2375 = vadd.f32 %v2334, %v2374
    %v2376 = vpop.f32.mrb[0].mxu0
    %v2377 = vadd.f32 %v2336, %v2376
    %v2378 = vpop.f32.mrb[0].mxu0
    %v2379 = vpop.f32.mrb[0].mxu0
    %2380 = vdwg.mxu0
    %2381 = vmatprep.subr.bf16.mxu0 %v1836
    %2382 = vmatpush1.bf16.msra.mxu0 %v1835
    %2383 = vmatprep.subr.bf16.mxu0 %v1842
    %2384 = vmatpush1.bf16.msra.mxu0 %v1841
    %2385 = vmatprep.subr.bf16.mxu0 %v1848
    %2386 = vmatpush1.bf16.msra.mxu0 %v1847
    %2387 = vmatprep.subr.bf16.mxu0 %v1854
    %2388 = vmatpush1.bf16.msra.mxu0 %v1853
    %2389 = vmatprep.subr.bf16.mxu0 %v1860
    %2390 = vmatpush1.bf16.msra.mxu0 %v1859
    %2391 = vmatprep.subr.bf16.mxu0 %v1866
    %2392 = vmatpush1.bf16.msra.mxu0 %v1865
    %2393 = vmatprep.subr.bf16.mxu0 %v1872
    %2394 = vmatpush1.bf16.msra.mxu0 %v1871
    %2395 = vmatprep.subr.bf16.mxu0 %v1878
    %2396 = vmatpush1.bf16.msra.mxu0 %v1877
    %2397 = vmatprep.subr.bf16.mxu0 %v1884
    %2398 = vmatpush1.bf16.msra.mxu0 %v1883
    %2399 = vmatprep.subr.bf16.mxu0 %v1890
    %2400 = vmatpush1.bf16.msra.mxu0 %v1889
    %2401 = vmatprep.subr.bf16.mxu0 %v1896
    %2402 = vmatpush1.bf16.msra.mxu0 %v1895
    %2403 = vmatprep.subr.bf16.mxu0 %v1902
    %2404 = vmatpush1.bf16.msra.mxu0 %v1901
    %2405 = vmatprep.subr.bf16.mxu0 %v1908
    %2406 = vmatpush1.bf16.msra.mxu0 %v1907
    %2407 = vmatprep.subr.bf16.mxu0 %v1914
    %2408 = vmatpush1.bf16.msra.mxu0 %v1913
    %2409 = vmatprep.subr.bf16.mxu0 %v1920
    %2410 = vmatpush1.bf16.msra.mxu0 %v1919
    %2411 = vmatprep.subr.bf16.mxu0 %v1926
    %2412 = vmatpush1.bf16.msra.mxu0 %v1925
    %2413 = vmatprep.mubr.bf16.mxu0 %v1826
    %2414 = vmatmul.mubr.bf16.gmra.mrb[0].mxu0 %v1825
    %v2415 = vpop.f32.mrb[0].mxu0
    %v2416 = vadd.f32 0.0, %v2415
    %v2417 = vpop.f32.mrb[0].mxu0
    %v2418 = vadd.f32 0.0, %v2417
    %v2419 = vpop.f32.mrb[0].mxu0
    %v2420 = vpop.f32.mrb[0].mxu0
    %2421 = vdwg.mxu0
    %2422 = vmatprep.subr.bf16.mxu0 %v1932
    %2423 = vmatpush1.bf16.msra.mxu0 %v1931
    %2424 = vmatprep.subr.bf16.mxu0 %v1938
    %2425 = vmatpush1.bf16.msra.mxu0 %v1937
    %2426 = vmatprep.subr.bf16.mxu0 %v1944
    %2427 = vmatpush1.bf16.msra.mxu0 %v1943
    %2428 = vmatprep.subr.bf16.mxu0 %v1950
    %2429 = vmatpush1.bf16.msra.mxu0 %v1949
    %2430 = vmatprep.subr.bf16.mxu0 %v1956
    %2431 = vmatpush1.bf16.msra.mxu0 %v1955
    %2432 = vmatprep.subr.bf16.mxu0 %v1962
    %2433 = vmatpush1.bf16.msra.mxu0 %v1961
    %2434 = vmatprep.subr.bf16.mxu0 %v1968
    %2435 = vmatpush1.bf16.msra.mxu0 %v1967
    %2436 = vmatprep.subr.bf16.mxu0 %v1974
    %2437 = vmatpush1.bf16.msra.mxu0 %v1973
    %2438 = vmatprep.subr.bf16.mxu0 %v1980
    %2439 = vmatpush1.bf16.msra.mxu0 %v1979
    %2440 = vmatprep.subr.bf16.mxu0 %v1986
    %2441 = vmatpush1.bf16.msra.mxu0 %v1985
    %2442 = vmatprep.subr.bf16.mxu0 %v1992
    %2443 = vmatpush1.bf16.msra.mxu0 %v1991
    %2444 = vmatprep.subr.bf16.mxu0 %v1998
    %2445 = vmatpush1.bf16.msra.mxu0 %v1997
    %2446 = vmatprep.subr.bf16.mxu0 %v2004
    %2447 = vmatpush1.bf16.msra.mxu0 %v2003
    %2448 = vmatprep.subr.bf16.mxu0 %v2010
    %2449 = vmatpush1.bf16.msra.mxu0 %v2009
    %2450 = vmatprep.subr.bf16.mxu0 %v2016
    %2451 = vmatpush1.bf16.msra.mxu0 %v2015
    %2452 = vmatprep.subr.bf16.mxu0 %v2022
    %2453 = vmatpush1.bf16.msra.mxu0 %v2021
    %2454 = vmatprep.mubr.bf16.mxu0 %v1828
    %2455 = vmatmul.mubr.bf16.gmra.mrb[0].mxu0 %v1827
    %v2456 = vpop.f32.mrb[0].mxu0
    %v2457 = vadd.f32 %v2416, %v2456
    %v2458 = vpop.f32.mrb[0].mxu0
    %v2459 = vadd.f32 %v2418, %v2458
    %v2460 = vpop.f32.mrb[0].mxu0
    %v2461 = vpop.f32.mrb[0].mxu0
    %2462 = vdwg.mxu0
    %2463 = vmatprep.subr.bf16.mxu0 %v2028
    %2464 = vmatpush1.bf16.msra.mxu0 %v2027
    %2465 = vmatprep.subr.bf16.mxu0 %v2034
    %2466 = vmatpush1.bf16.msra.mxu0 %v2033
    %2467 = vmatprep.subr.bf16.mxu0 %v2040
    %2468 = vmatpush1.bf16.msra.mxu0 %v2039
    %2469 = vmatprep.subr.bf16.mxu0 %v2046
    %2470 = vmatpush1.bf16.msra.mxu0 %v2045
    %2471 = vmatprep.subr.bf16.mxu0 %v2052
    %2472 = vmatpush1.bf16.msra.mxu0 %v2051
    %2473 = vmatprep.subr.bf16.mxu0 %v2058
    %2474 = vmatpush1.bf16.msra.mxu0 %v2057
    %2475 = vmatprep.subr.bf16.mxu0 %v2064
    %2476 = vmatpush1.bf16.msra.mxu0 %v2063
    %2477 = vmatprep.subr.bf16.mxu0 %v2070
    %2478 = vmatpush1.bf16.msra.mxu0 %v2069
    %2479 = vmatprep.subr.bf16.mxu0 %v2076
    %2480 = vmatpush1.bf16.msra.mxu0 %v2075
    %2481 = vmatprep.subr.bf16.mxu0 %v2082
    %2482 = vmatpush1.bf16.msra.mxu0 %v2081
    %2483 = vmatprep.subr.bf16.mxu0 %v2088
    %2484 = vmatpush1.bf16.msra.mxu0 %v2087
    %2485 = vmatprep.subr.bf16.mxu0 %v2094
    %2486 = vmatpush1.bf16.msra.mxu0 %v2093
    %2487 = vmatprep.subr.bf16.mxu0 %v2100
    %2488 = vmatpush1.bf16.msra.mxu0 %v2099
    %2489 = vmatprep.subr.bf16.mxu0 %v2106
    %2490 = vmatpush1.bf16.msra.mxu0 %v2105
    %2491 = vmatprep.subr.bf16.mxu0 %v2112
    %2492 = vmatpush1.bf16.msra.mxu0 %v2111
    %2493 = vmatprep.subr.bf16.mxu0 %v2118
    %2494 = vmatpush1.bf16.msra.mxu0 %v2117
    %2495 = vmatprep.mubr.bf16.mxu0 %v1830
    %2496 = vmatmul.mubr.bf16.gmra.mrb[0].mxu0 %v1829
    %v2497 = vpop.f32.mrb[0].mxu0
    %v2498 = vadd.f32 %v2457, %v2497
    %v2499 = vpop.f32.mrb[0].mxu0
    %v2500 = vadd.f32 %v2459, %v2499
    %v2501 = vpop.f32.mrb[0].mxu0
    %v2502 = vpop.f32.mrb[0].mxu0
    %2503 = vdwg.mxu0
    %2504 = vmatprep.subr.bf16.mxu0 %v2124
    %2505 = vmatpush1.bf16.msra.mxu0 %v2123
    %2506 = vmatprep.subr.bf16.mxu0 %v2130
    %2507 = vmatpush1.bf16.msra.mxu0 %v2129
    %2508 = vmatprep.subr.bf16.mxu0 %v2136
    %2509 = vmatpush1.bf16.msra.mxu0 %v2135
    %2510 = vmatprep.subr.bf16.mxu0 %v2142
    %2511 = vmatpush1.bf16.msra.mxu0 %v2141
    %2512 = vmatprep.subr.bf16.mxu0 %v2148
    %2513 = vmatpush1.bf16.msra.mxu0 %v2147
    %2514 = vmatprep.subr.bf16.mxu0 %v2154
    %2515 = vmatpush1.bf16.msra.mxu0 %v2153
    %2516 = vmatprep.subr.bf16.mxu0 %v2160
    %2517 = vmatpush1.bf16.msra.mxu0 %v2159
    %2518 = vmatprep.subr.bf16.mxu0 %v2166
    %2519 = vmatpush1.bf16.msra.mxu0 %v2165
    %2520 = vmatprep.subr.bf16.mxu0 %v2172
    %2521 = vmatpush1.bf16.msra.mxu0 %v2171
    %2522 = vmatprep.subr.bf16.mxu0 %v2178
    %2523 = vmatpush1.bf16.msra.mxu0 %v2177
    %2524 = vmatprep.subr.bf16.mxu0 %v2184
    %2525 = vmatpush1.bf16.msra.mxu0 %v2183
    %2526 = vmatprep.subr.bf16.mxu0 %v2190
    %2527 = vmatpush1.bf16.msra.mxu0 %v2189
    %2528 = vmatprep.subr.bf16.mxu0 %v2196
    %2529 = vmatpush1.bf16.msra.mxu0 %v2195
    %2530 = vmatprep.subr.bf16.mxu0 %v2202
    %2531 = vmatpush1.bf16.msra.mxu0 %v2201
    %2532 = vmatprep.subr.bf16.mxu0 %v2208
    %2533 = vmatpush1.bf16.msra.mxu0 %v2207
    %2534 = vmatprep.subr.bf16.mxu0 %v2214
    %2535 = vmatpush1.bf16.msra.mxu0 %v2213
    %2536 = vmatprep.mubr.bf16.mxu0 %v1832
    %2537 = vmatmul.mubr.bf16.gmra.mrb[0].mxu0 %v1831
    %v2538 = vpop.f32.mrb[0].mxu0
    %v2539 = vadd.f32 %v2498, %v2538
    %v2540 = vpop.f32.mrb[0].mxu0
    %v2541 = vadd.f32 %v2500, %v2540
    %v2542 = vpop.f32.mrb[0].mxu0
    %v2543 = vpop.f32.mrb[0].mxu0
    %2544 = vdwg.mxu0
    %2545 = vmatprep.subr.bf16.mxu0 %v1838
    %2546 = vmatpush1.bf16.msra.mxu0 %v1837
    %2547 = vmatprep.subr.bf16.mxu0 %v1844
    %2548 = vmatpush1.bf16.msra.mxu0 %v1843
    %2549 = vmatprep.subr.bf16.mxu0 %v1850
    %2550 = vmatpush1.bf16.msra.mxu0 %v1849
    %2551 = vmatprep.subr.bf16.mxu0 %v1856
    %2552 = vmatpush1.bf16.msra.mxu0 %v1855
    %2553 = vmatprep.subr.bf16.mxu0 %v1862
    %2554 = vmatpush1.bf16.msra.mxu0 %v1861
    %2555 = vmatprep.subr.bf16.mxu0 %v1868
    %2556 = vmatpush1.bf16.msra.mxu0 %v1867
    %2557 = vmatprep.subr.bf16.mxu0 %v1874
    %2558 = vmatpush1.bf16.msra.mxu0 %v1873
    %2559 = vmatprep.subr.bf16.mxu0 %v1880
    %2560 = vmatpush1.bf16.msra.mxu0 %v1879
    %2561 = vmatprep.subr.bf16.mxu0 %v1886
    %2562 = vmatpush1.bf16.msra.mxu0 %v1885
    %2563 = vmatprep.subr.bf16.mxu0 %v1892
    %2564 = vmatpush1.bf16.msra.mxu0 %v1891
    %2565 = vmatprep.subr.bf16.mxu0 %v1898
    %2566 = vmatpush1.bf16.msra.mxu0 %v1897
    %2567 = vmatprep.subr.bf16.mxu0 %v1904
    %2568 = vmatpush1.bf16.msra.mxu0 %v1903
    %2569 = vmatprep.subr.bf16.mxu0 %v1910
    %2570 = vmatpush1.bf16.msra.mxu0 %v1909
    %2571 = vmatprep.subr.bf16.mxu0 %v1916
    %2572 = vmatpush1.bf16.msra.mxu0 %v1915
    %2573 = vmatprep.subr.bf16.mxu0 %v1922
    %2574 = vmatpush1.bf16.msra.mxu0 %v1921
    %2575 = vmatprep.subr.bf16.mxu0 %v1928
    %2576 = vmatpush1.bf16.msra.mxu0 %v1927
    %2577 = vmatprep.mubr.bf16.mxu0 %v1826
    %2578 = vmatmul.mubr.bf16.gmra.mrb[0].mxu0 %v1825
    %v2579 = vpop.f32.mrb[0].mxu0
    %v2580 = vadd.f32 0.0, %v2579
    %v2581 = vpop.f32.mrb[0].mxu0
    %v2582 = vadd.f32 0.0, %v2581
    %v2583 = vpop.f32.mrb[0].mxu0
    %v2584 = vpop.f32.mrb[0].mxu0
    %2585 = vdwg.mxu0
    %2586 = vmatprep.subr.bf16.mxu0 %v1934
    %2587 = vmatpush1.bf16.msra.mxu0 %v1933
    %2588 = vmatprep.subr.bf16.mxu0 %v1940
    %2589 = vmatpush1.bf16.msra.mxu0 %v1939
    %2590 = vmatprep.subr.bf16.mxu0 %v1946
    %2591 = vmatpush1.bf16.msra.mxu0 %v1945
    %2592 = vmatprep.subr.bf16.mxu0 %v1952
    %2593 = vmatpush1.bf16.msra.mxu0 %v1951
    %2594 = vmatprep.subr.bf16.mxu0 %v1958
    %2595 = vmatpush1.bf16.msra.mxu0 %v1957
    %2596 = vmatprep.subr.bf16.mxu0 %v1964
    %2597 = vmatpush1.bf16.msra.mxu0 %v1963
    %2598 = vmatprep.subr.bf16.mxu0 %v1970
    %2599 = vmatpush1.bf16.msra.mxu0 %v1969
    %2600 = vmatprep.subr.bf16.mxu0 %v1976
    %2601 = vmatpush1.bf16.msra.mxu0 %v1975
    %2602 = vmatprep.subr.bf16.mxu0 %v1982
    %2603 = vmatpush1.bf16.msra.mxu0 %v1981
    %2604 = vmatprep.subr.bf16.mxu0 %v1988
    %2605 = vmatpush1.bf16.msra.mxu0 %v1987
    %2606 = vmatprep.subr.bf16.mxu0 %v1994
    %2607 = vmatpush1.bf16.msra.mxu0 %v1993
    %2608 = vmatprep.subr.bf16.mxu0 %v2000
    %2609 = vmatpush1.bf16.msra.mxu0 %v1999
    %2610 = vmatprep.subr.bf16.mxu0 %v2006
    %2611 = vmatpush1.bf16.msra.mxu0 %v2005
    %2612 = vmatprep.subr.bf16.mxu0 %v2012
    %2613 = vmatpush1.bf16.msra.mxu0 %v2011
    %2614 = vmatprep.subr.bf16.mxu0 %v2018
    %2615 = vmatpush1.bf16.msra.mxu0 %v2017
    %2616 = vmatprep.subr.bf16.mxu0 %v2024
    %2617 = vmatpush1.bf16.msra.mxu0 %v2023
    %2618 = vmatprep.mubr.bf16.mxu0 %v1828
    %2619 = vmatmul.mubr.bf16.gmra.mrb[0].mxu0 %v1827
    %v2620 = vpop.f32.mrb[0].mxu0
    %v2621 = vadd.f32 %v2580, %v2620
    %v2622 = vpop.f32.mrb[0].mxu0
    %v2623 = vadd.f32 %v2582, %v2622
    %v2624 = vpop.f32.mrb[0].mxu0
    %v2625 = vpop.f32.mrb[0].mxu0
    %2626 = vdwg.mxu0
    %2627 = vmatprep.subr.bf16.mxu0 %v2030
    %2628 = vmatpush1.bf16.msra.mxu0 %v2029
    %2629 = vmatprep.subr.bf16.mxu0 %v2036
    %2630 = vmatpush1.bf16.msra.mxu0 %v2035
    %2631 = vmatprep.subr.bf16.mxu0 %v2042
    %2632 = vmatpush1.bf16.msra.mxu0 %v2041
    %2633 = vmatprep.subr.bf16.mxu0 %v2048
    %2634 = vmatpush1.bf16.msra.mxu0 %v2047
    %2635 = vmatprep.subr.bf16.mxu0 %v2054
    %2636 = vmatpush1.bf16.msra.mxu0 %v2053
    %2637 = vmatprep.subr.bf16.mxu0 %v2060
    %2638 = vmatpush1.bf16.msra.mxu0 %v2059
    %2639 = vmatprep.subr.bf16.mxu0 %v2066
    %2640 = vmatpush1.bf16.msra.mxu0 %v2065
    %2641 = vmatprep.subr.bf16.mxu0 %v2072
    %2642 = vmatpush1.bf16.msra.mxu0 %v2071
    %2643 = vmatprep.subr.bf16.mxu0 %v2078
    %2644 = vmatpush1.bf16.msra.mxu0 %v2077
    %2645 = vmatprep.subr.bf16.mxu0 %v2084
    %2646 = vmatpush1.bf16.msra.mxu0 %v2083
    %2647 = vmatprep.subr.bf16.mxu0 %v2090
    %2648 = vmatpush1.bf16.msra.mxu0 %v2089
    %2649 = vmatprep.subr.bf16.mxu0 %v2096
    %2650 = vmatpush1.bf16.msra.mxu0 %v2095
    %2651 = vmatprep.subr.bf16.mxu0 %v2102
    %2652 = vmatpush1.bf16.msra.mxu0 %v2101
    %2653 = vmatprep.subr.bf16.mxu0 %v2108
    %2654 = vmatpush1.bf16.msra.mxu0 %v2107
    %2655 = vmatprep.subr.bf16.mxu0 %v2114
    %2656 = vmatpush1.bf16.msra.mxu0 %v2113
    %2657 = vmatprep.subr.bf16.mxu0 %v2120
    %2658 = vmatpush1.bf16.msra.mxu0 %v2119
    %2659 = vmatprep.mubr.bf16.mxu0 %v1830
    %2660 = vmatmul.mubr.bf16.gmra.mrb[0].mxu0 %v1829
    %v2661 = vpop.f32.mrb[0].mxu0
    %v2662 = vadd.f32 %v2621, %v2661
    %v2663 = vpop.f32.mrb[0].mxu0
    %v2664 = vadd.f32 %v2623, %v2663
    %v2665 = vpop.f32.mrb[0].mxu0
    %v2666 = vpop.f32.mrb[0].mxu0
    %2667 = vdwg.mxu0
    %2668 = vmatprep.subr.bf16.mxu0 %v2126
    %2669 = vmatpush1.bf16.msra.mxu0 %v2125
    %2670 = vmatprep.subr.bf16.mxu0 %v2132
    %2671 = vmatpush1.bf16.msra.mxu0 %v2131
    %2672 = vmatprep.subr.bf16.mxu0 %v2138
    %2673 = vmatpush1.bf16.msra.mxu0 %v2137
    %2674 = vmatprep.subr.bf16.mxu0 %v2144
    %2675 = vmatpush1.bf16.msra.mxu0 %v2143
    %2676 = vmatprep.subr.bf16.mxu0 %v2150
    %2677 = vmatpush1.bf16.msra.mxu0 %v2149
    %2678 = vmatprep.subr.bf16.mxu0 %v2156
    %2679 = vmatpush1.bf16.msra.mxu0 %v2155
    %2680 = vmatprep.subr.bf16.mxu0 %v2162
    %2681 = vmatpush1.bf16.msra.mxu0 %v2161
    %2682 = vmatprep.subr.bf16.mxu0 %v2168
    %2683 = vmatpush1.bf16.msra.mxu0 %v2167
    %2684 = vmatprep.subr.bf16.mxu0 %v2174
    %2685 = vmatpush1.bf16.msra.mxu0 %v2173
    %2686 = vmatprep.subr.bf16.mxu0 %v2180
    %2687 = vmatpush1.bf16.msra.mxu0 %v2179
    %2688 = vmatprep.subr.bf16.mxu0 %v2186
    %2689 = vmatpush1.bf16.msra.mxu0 %v2185
    %2690 = vmatprep.subr.bf16.mxu0 %v2192
    %2691 = vmatpush1.bf16.msra.mxu0 %v2191
    %2692 = vmatprep.subr.bf16.mxu0 %v2198
    %2693 = vmatpush1.bf16.msra.mxu0 %v2197
    %2694 = vmatprep.subr.bf16.mxu0 %v2204
    %2695 = vmatpush1.bf16.msra.mxu0 %v2203
    %2696 = vmatprep.subr.bf16.mxu0 %v2210
    %2697 = vmatpush1.bf16.msra.mxu0 %v2209
    %2698 = vmatprep.subr.bf16.mxu0 %v2216
    %2699 = vmatpush1.bf16.msra.mxu0 %v2215
    %2700 = vmatprep.mubr.bf16.mxu0 %v1832
    %2701 = vmatmul.mubr.bf16.gmra.mrb[0].mxu0 %v1831
    %v2702 = vpop.f32.mrb[0].mxu0
    %v2703 = vadd.f32 %v2662, %v2702
    %v2704 = vpop.f32.mrb[0].mxu0
    %v2705 = vadd.f32 %v2664, %v2704
    %v2706 = vpop.f32.mrb[0].mxu0
    %v2707 = vpop.f32.mrb[0].mxu0
    %2708 = vdwg.mxu0
    %v2709 = vrot.slane %v2375, 4
    %v2710 = vadd.f32 %v2375, %v2709
    %v2711 = vrot.slane %v2710, 2
    %v2712 = vadd.f32 %v2710, %v2711
    %v2713 = vrot.slane %v2712, 1
    %v2714 = vadd.f32 %v2712, %v2713
    %v2715 = vrot.slane %v2377, 4
    %v2716 = vadd.f32 %v2377, %v2715
    %v2717 = vrot.slane %v2716, 2
    %v2718 = vadd.f32 %v2716, %v2717
    %v2719 = vrot.slane %v2718, 1
    %v2720 = vadd.f32 %v2718, %v2719
    %v2721 = vrot.slane %v2539, 4
    %v2722 = vadd.f32 %v2539, %v2721
    %v2723 = vrot.slane %v2722, 2
    %v2724 = vadd.f32 %v2722, %v2723
    %v2725 = vrot.slane %v2724, 1
    %v2726 = vadd.f32 %v2724, %v2725
    %v2727 = vrot.slane %v2541, 4
    %v2728 = vadd.f32 %v2541, %v2727
    %v2729 = vrot.slane %v2728, 2
    %v2730 = vadd.f32 %v2728, %v2729
    %v2731 = vrot.slane %v2730, 1
    %v2732 = vadd.f32 %v2730, %v2731
    %v2733 = vrot.slane %v2703, 4
    %v2734 = vadd.f32 %v2703, %v2733
    %v2735 = vrot.slane %v2734, 2
    %v2736 = vadd.f32 %v2734, %v2735
    %v2737 = vrot.slane %v2736, 1
    %v2738 = vadd.f32 %v2736, %v2737
    %v2739 = vrot.slane %v2705, 4
    %v2740 = vadd.f32 %v2705, %v2739
    %v2741 = vrot.slane %v2740, 2
    %v2742 = vadd.f32 %v2740, %v2741
    %v2743 = vrot.slane %v2742, 1
    %v2744 = vadd.f32 %v2742, %v2743
    %v2745 = vrcp.pop 8.0
    %v2746 = vmul.f32 %v2714, %v2745
    %v2747 = vmul.f32 %v2720, %v2745
    %v2748 = vmul.f32 %v2726, %v2745
    %v2749 = vmul.f32 %v2732, %v2745
    %v2750 = vmul.f32 %v2738, %v2745
    %v2751 = vmul.f32 %v2744, %v2745
    %v2752 = vmul.f32 %v2375, %v2375
    %v2753 = vmul.f32 %v2377, %v2377
    %v2754 = vmul.f32 %v2539, %v2539
    %v2755 = vmul.f32 %v2541, %v2541
    %v2756 = vmul.f32 %v2703, %v2703
    %v2757 = vmul.f32 %v2705, %v2705
    %v2758 = vrot.slane %v2752, 4
    %v2759 = vadd.f32 %v2752, %v2758
    %v2760 = vrot.slane %v2759, 2
    %v2761 = vadd.f32 %v2759, %v2760
    %v2762 = vrot.slane %v2761, 1
    %v2763 = vadd.f32 %v2761, %v2762
    %v2764 = vrot.slane %v2753, 4
    %v2765 = vadd.f32 %v2753, %v2764
    %v2766 = vrot.slane %v2765, 2
    %v2767 = vadd.f32 %v2765, %v2766
    %v2768 = vrot.slane %v2767, 1
    %v2769 = vadd.f32 %v2767, %v2768
    %v2770 = vrot.slane %v2754, 4
    %v2771 = vadd.f32 %v2754, %v2770
    %v2772 = vrot.slane %v2771, 2
    %v2773 = vadd.f32 %v2771, %v2772
    %v2774 = vrot.slane %v2773, 1
    %v2775 = vadd.f32 %v2773, %v2774
    %v2776 = vrot.slane %v2755, 4
    %v2777 = vadd.f32 %v2755, %v2776
    %v2778 = vrot.slane %v2777, 2
    %v2779 = vadd.f32 %v2777, %v2778
    %v2780 = vrot.slane %v2779, 1
    %v2781 = vadd.f32 %v2779, %v2780
    %v2782 = vrot.slane %v2756, 4
    %v2783 = vadd.f32 %v2756, %v2782
    %v2784 = vrot.slane %v2783, 2
    %v2785 = vadd.f32 %v2783, %v2784
    %v2786 = vrot.slane %v2785, 1
    %v2787 = vadd.f32 %v2785, %v2786
    %v2788 = vrot.slane %v2757, 4
    %v2789 = vadd.f32 %v2757, %v2788
    %v2790 = vrot.slane %v2789, 2
    %v2791 = vadd.f32 %v2789, %v2790
    %v2792 = vrot.slane %v2791, 1
    %v2793 = vadd.f32 %v2791, %v2792
    %v2794 = vmul.f32 %v2763, %v2745
    %v2795 = vmul.f32 %v2769, %v2745
    %v2796 = vmul.f32 %v2775, %v2745
    %v2797 = vmul.f32 %v2781, %v2745
    %v2798 = vmul.f32 %v2787, %v2745
    %v2799 = vmul.f32 %v2793, %v2745
    %v2800 = vmul.f32 %v2746, %v2746
    %v2801 = vmul.f32 %v2747, %v2747
    %v2802 = vmul.f32 %v2748, %v2748
    %v2803 = vmul.f32 %v2749, %v2749
    %v2804 = vmul.f32 %v2750, %v2750
    %v2805 = vmul.f32 %v2751, %v2751
    %v2806 = vsub.f32 %v2794, %v2800
    %v2807 = vsub.f32 %v2795, %v2801
    %v2808 = vsub.f32 %v2796, %v2802
    %v2809 = vsub.f32 %v2797, %v2803
    %v2810 = vsub.f32 %v2798, %v2804
    %v2811 = vsub.f32 %v2799, %v2805
    %v2812 = vmax.f32 %v2806, 0.0
    %v2813 = vmax.f32 %v2807, 0.0
    %v2814 = vmax.f32 %v2808, 0.0
    %v2815 = vmax.f32 %v2809, 0.0
    %v2816 = vmax.f32 %v2810, 0.0
    %v2817 = vmax.f32 %v2811, 0.0
    %v2818 = vsub.f32 %v2375, %v2746
    %v2819 = vsub.f32 %v2377, %v2747
    %v2820 = vsub.f32 %v2539, %v2748
    %v2821 = vsub.f32 %v2541, %v2749
    %v2822 = vsub.f32 %v2703, %v2750
    %v2823 = vsub.f32 %v2705, %v2751
    %v2824 = vld [vmem:[%s4] sm:$0x3f]
    %v2826 = vlaneseq
    %v2827 = vshrl.u32 %v2826, 7
    %v2828 = vsub.s32 0, %v2827
    %v2829 = vrot.slane %v2824, %v2828
    %v2830 = vlaneseq
    %v2831 = vshrl.u32 %v2830, 7
    %v2832 = vsub.s32 1, %v2831
    %v2833 = vrot.slane %v2824, %v2832
    %v2834 = vlaneseq
    %v2835 = vshrl.u32 %v2834, 7
    %v2836 = vsub.s32 2, %v2835
    %v2837 = vrot.slane %v2824, %v2836
    %v2838 = vlaneseq
    %v2839 = vshrl.u32 %v2838, 7
    %v2840 = vsub.s32 3, %v2839
    %v2841 = vrot.slane %v2824, %v2840
    %v2842 = vlaneseq
    %v2843 = vshrl.u32 %v2842, 7
    %v2844 = vsub.s32 4, %v2843
    %v2845 = vrot.slane %v2824, %v2844
    %v2846 = vlaneseq
    %v2847 = vshrl.u32 %v2846, 7
    %v2848 = vsub.s32 5, %v2847
    %v2849 = vrot.slane %v2824, %v2848
    %v2856 = vadd.f32 %v2812, %v2829
    %v2857 = vadd.f32 %v2813, %v2833
    %v2858 = vadd.f32 %v2814, %v2837
    %v2859 = vadd.f32 %v2815, %v2841
    %v2860 = vadd.f32 %v2816, %v2845
    %v2861 = vadd.f32 %v2817, %v2849
    %v2862 = vrsqrt.pop %v2856
    %v2863 = vrsqrt.pop %v2857
    %v2864 = vrsqrt.pop %v2858
    %v2865 = vrsqrt.pop %v2859
    %v2866 = vrsqrt.pop %v2860
    %v2867 = vrsqrt.pop %v2861
    %v2868 = vlaneseq
    %v2869 = vshrl.u32 %v2868, 7
    %v2870 = vsub.s32 0, %v2869
    %v2871 = vrot.slane %v2862, %v2870
    %v2872 = vlaneseq
    %v2873 = vshrl.u32 %v2872, 7
    %v2874 = vsub.s32 0, %v2873
    %v2875 = vrot.slane %v2863, %v2874
    %v2876 = vlaneseq
    %v2877 = vshrl.u32 %v2876, 7
    %v2878 = vsub.s32 0, %v2877
    %v2879 = vrot.slane %v2864, %v2878
    %v2880 = vlaneseq
    %v2881 = vshrl.u32 %v2880, 7
    %v2882 = vsub.s32 0, %v2881
    %v2883 = vrot.slane %v2865, %v2882
    %v2884 = vlaneseq
    %v2885 = vshrl.u32 %v2884, 7
    %v2886 = vsub.s32 0, %v2885
    %v2887 = vrot.slane %v2866, %v2886
    %v2888 = vlaneseq
    %v2889 = vshrl.u32 %v2888, 7
    %v2890 = vsub.s32 0, %v2889
    %v2891 = vrot.slane %v2867, %v2890
    %v2892 = vmul.f32 %v2818, %v2871
    %v2893 = vmul.f32 %v2819, %v2875
    %v2894 = vmul.f32 %v2820, %v2879
    %v2895 = vmul.f32 %v2821, %v2883
    %v2896 = vmul.f32 %v2822, %v2887
    %v2897 = vmul.f32 %v2823, %v2891
    %v2898 = vld [vmem:[%s2] sm:$0x3f]
    %v2900 = vlaneseq
    %v2901 = vshrl.u32 %v2900, 7
    %v2902 = vsub.s32 0, %v2901
    %v2903 = vrot.slane %v2898, %v2902
    %v2904 = vlaneseq
    %v2905 = vshrl.u32 %v2904, 7
    %v2906 = vsub.s32 1, %v2905
    %v2907 = vrot.slane %v2898, %v2906
    %v2908 = vlaneseq
    %v2909 = vshrl.u32 %v2908, 7
    %v2910 = vsub.s32 2, %v2909
    %v2911 = vrot.slane %v2898, %v2910
    %v2912 = vlaneseq
    %v2913 = vshrl.u32 %v2912, 7
    %v2914 = vsub.s32 3, %v2913
    %v2915 = vrot.slane %v2898, %v2914
    %v2916 = vlaneseq
    %v2917 = vshrl.u32 %v2916, 7
    %v2918 = vsub.s32 4, %v2917
    %v2919 = vrot.slane %v2898, %v2918
    %v2920 = vlaneseq
    %v2921 = vshrl.u32 %v2920, 7
    %v2922 = vsub.s32 5, %v2921
    %v2923 = vrot.slane %v2898, %v2922
    %v2930 = vmul.f32 %v2892, %v2903
    %v2931 = vmul.f32 %v2893, %v2907
    %v2932 = vmul.f32 %v2894, %v2911
    %v2933 = vmul.f32 %v2895, %v2915
    %v2934 = vmul.f32 %v2896, %v2919
    %v2935 = vmul.f32 %v2897, %v2923
    %v2936 = vld [vmem:[#allocation10] sm:$0x3f]
    %v2938 = vlaneseq
    %v2939 = vshrl.u32 %v2938, 7
    %v2940 = vsub.s32 0, %v2939
    %v2941 = vrot.slane %v2936, %v2940
    %v2942 = vlaneseq
    %v2943 = vshrl.u32 %v2942, 7
    %v2944 = vsub.s32 1, %v2943
    %v2945 = vrot.slane %v2936, %v2944
    %v2946 = vlaneseq
    %v2947 = vshrl.u32 %v2946, 7
    %v2948 = vsub.s32 2, %v2947
    %v2949 = vrot.slane %v2936, %v2948
    %v2950 = vlaneseq
    %v2951 = vshrl.u32 %v2950, 7
    %v2952 = vsub.s32 3, %v2951
    %v2953 = vrot.slane %v2936, %v2952
    %v2954 = vlaneseq
    %v2955 = vshrl.u32 %v2954, 7
    %v2956 = vsub.s32 4, %v2955
    %v2957 = vrot.slane %v2936, %v2956
    %v2958 = vlaneseq
    %v2959 = vshrl.u32 %v2958, 7
    %v2960 = vsub.s32 5, %v2959
    %v2961 = vrot.slane %v2936, %v2960
    %v2968 = vadd.f32 %v2930, %v2941
    %v2969 = vadd.f32 %v2931, %v2945
    %v2970 = vadd.f32 %v2932, %v2949
    %v2971 = vadd.f32 %v2933, %v2953
    %v2972 = vadd.f32 %v2934, %v2957
    %v2973 = vadd.f32 %v2935, %v2961
    %v2974 = vtanh.pop %v2968
    %v2975 = vtanh.pop %v2969
    %v2976 = vtanh.pop %v2970
    %v2977 = vtanh.pop %v2971
    %v2978 = vtanh.pop %v2972
    %v2979 = vtanh.pop %v2973
    %v2980 = vpack.c.bf16 %v2974, %v2974
    %v2981 = vpack.c.bf16 %v2975, %v2975
    %v2982 = vpack.c.bf16 %v2976, %v2976
    %v2983 = vpack.c.bf16 %v2977, %v2977
    %v2984 = vpack.c.bf16 %v2978, %v2978
    %v2985 = vpack.c.bf16 %v2979, %v2979
    %v2986 = vld [vmem:[#allocation3] sm:$0xff]
    %v2987 = vld [vmem:[#allocation3 + $0x8] sm:$0xff]
    %v2988 = vld [vmem:[#allocation3 + $0x10] sm:$0xff]
    %v2989 = vld [vmem:[#allocation3 + $0x18] sm:$0xff]
    %v2990 = vld [vmem:[#allocation3 + $0x20] sm:$0xff]
    %v2991 = vld [vmem:[#allocation3 + $0x28] sm:$0xff]
    %v2992 = vld [vmem:[#allocation3 + $0x30] sm:$0xff]
    %v2993 = vld [vmem:[#allocation3 + $0x38] sm:$0xff]
    %v2994 = vld [vmem:[#allocation3 + $0x40] sm:$0xff]
    %v2995 = vld [vmem:[#allocation3 + $0x48] sm:$0xff]
    %v2996 = vld [vmem:[#allocation3 + $0x50] sm:$0xff]
    %v2997 = vld [vmem:[#allocation3 + $0x58] sm:$0xff]
    %v2998 = vld [vmem:[#allocation3 + $0x60] sm:$0xff]
    %v2999 = vld [vmem:[#allocation3 + $0x68] sm:$0xff]
    %v3000 = vld [vmem:[#allocation3 + $0x70] sm:$0xff]
    %v3001 = vld [vmem:[#allocation3 + $0x78] sm:$0xff]
    %v3002 = vld [vmem:[#allocation3 + $0x80] sm:$0xff]
    %v3003 = vld [vmem:[#allocation3 + $0x88] sm:$0xff]
    %v3004 = vld [vmem:[#allocation3 + $0x90] sm:$0xff]
    %v3005 = vld [vmem:[#allocation3 + $0x98] sm:$0xff]
    %v3006 = vld [vmem:[#allocation3 + $0xa0] sm:$0xff]
    %v3007 = vld [vmem:[#allocation3 + $0xa8] sm:$0xff]
    %v3008 = vld [vmem:[#allocation3 + $0xb0] sm:$0xff]
    %v3009 = vld [vmem:[#allocation3 + $0xb8] sm:$0xff]
    %v3010 = vld [vmem:[#allocation3 + $0xc0] sm:$0xff]
    %v3011 = vld [vmem:[#allocation3 + $0xc8] sm:$0xff]
    %v3012 = vld [vmem:[#allocation3 + $0xd0] sm:$0xff]
    %v3013 = vld [vmem:[#allocation3 + $0xd8] sm:$0xff]
    %v3014 = vld [vmem:[#allocation3 + $0xe0] sm:$0xff]
    %v3015 = vld [vmem:[#allocation3 + $0xe8] sm:$0xff]
    %v3016 = vld [vmem:[#allocation3 + $0xf0] sm:$0xff]
    %v3017 = vld [vmem:[#allocation3 + $0xf8] sm:$0xff]
    %v3018 = vld [vmem:[#allocation3 + $0x100] sm:$0xff]
    %v3019 = vld [vmem:[#allocation3 + $0x108] sm:$0xff]
    %v3020 = vld [vmem:[#allocation3 + $0x110] sm:$0xff]
    %v3021 = vld [vmem:[#allocation3 + $0x118] sm:$0xff]
    %v3022 = vld [vmem:[#allocation3 + $0x120] sm:$0xff]
    %v3023 = vld [vmem:[#allocation3 + $0x128] sm:$0xff]
    %v3024 = vld [vmem:[#allocation3 + $0x130] sm:$0xff]
    %v3025 = vld [vmem:[#allocation3 + $0x138] sm:$0xff]
    %v3026 = vld [vmem:[#allocation3 + $0x140] sm:$0xff]
    %v3027 = vld [vmem:[#allocation3 + $0x148] sm:$0xff]
    %v3028 = vld [vmem:[#allocation3 + $0x150] sm:$0xff]
    %v3029 = vld [vmem:[#allocation3 + $0x158] sm:$0xff]
    %v3030 = vld [vmem:[#allocation3 + $0x160] sm:$0xff]
    %v3031 = vld [vmem:[#allocation3 + $0x168] sm:$0xff]
    %v3032 = vld [vmem:[#allocation3 + $0x170] sm:$0xff]
    %v3033 = vld [vmem:[#allocation3 + $0x178] sm:$0xff]
    %v3034 = vld [vmem:[#allocation3 + $0x180] sm:$0xff]
    %v3035 = vld [vmem:[#allocation3 + $0x188] sm:$0xff]
    %v3036 = vld [vmem:[#allocation3 + $0x190] sm:$0xff]
    %v3037 = vld [vmem:[#allocation3 + $0x198] sm:$0xff]
    %v3038 = vld [vmem:[#allocation3 + $0x1a0] sm:$0xff]
    %v3039 = vld [vmem:[#allocation3 + $0x1a8] sm:$0xff]
    %v3040 = vld [vmem:[#allocation3 + $0x1b0] sm:$0xff]
    %v3041 = vld [vmem:[#allocation3 + $0x1b8] sm:$0xff]
    %v3042 = vld [vmem:[#allocation3 + $0x1c0] sm:$0xff]
    %v3043 = vld [vmem:[#allocation3 + $0x1c8] sm:$0xff]
    %v3044 = vld [vmem:[#allocation3 + $0x1d0] sm:$0xff]
    %v3045 = vld [vmem:[#allocation3 + $0x1d8] sm:$0xff]
    %v3046 = vld [vmem:[#allocation3 + $0x1e0] sm:$0xff]
    %v3047 = vld [vmem:[#allocation3 + $0x1e8] sm:$0xff]
    %v3048 = vld [vmem:[#allocation3 + $0x1f0] sm:$0xff]
    %v3049 = vld [vmem:[#allocation3 + $0x1f8] sm:$0xff]
    %v3050 = vld [vmem:[#allocation3 + $0x200] sm:$0xff]
    %v3051 = vld [vmem:[#allocation3 + $0x208] sm:$0xff]
    %v3052 = vld [vmem:[#allocation3 + $0x210] sm:$0xff]
    %v3053 = vld [vmem:[#allocation3 + $0x218] sm:$0xff]
    %v3054 = vld [vmem:[#allocation3 + $0x220] sm:$0xff]
    %v3055 = vld [vmem:[#allocation3 + $0x228] sm:$0xff]
    %v3056 = vld [vmem:[#allocation3 + $0x230] sm:$0xff]
    %v3057 = vld [vmem:[#allocation3 + $0x238] sm:$0xff]
    %v3058 = vld [vmem:[#allocation3 + $0x240] sm:$0xff]
    %v3059 = vld [vmem:[#allocation3 + $0x248] sm:$0xff]
    %v3060 = vld [vmem:[#allocation3 + $0x250] sm:$0xff]
    %v3061 = vld [vmem:[#allocation3 + $0x258] sm:$0xff]
    %v3062 = vld [vmem:[#allocation3 + $0x260] sm:$0xff]
    %v3063 = vld [vmem:[#allocation3 + $0x268] sm:$0xff]
    %v3064 = vld [vmem:[#allocation3 + $0x270] sm:$0xff]
    %v3065 = vld [vmem:[#allocation3 + $0x278] sm:$0xff]
    %v3066 = vld [vmem:[#allocation3 + $0x280] sm:$0xff]
    %v3067 = vld [vmem:[#allocation3 + $0x288] sm:$0xff]
    %v3068 = vld [vmem:[#allocation3 + $0x290] sm:$0xff]
    %v3069 = vld [vmem:[#allocation3 + $0x298] sm:$0xff]
    %v3070 = vld [vmem:[#allocation3 + $0x2a0] sm:$0xff]
    %v3071 = vld [vmem:[#allocation3 + $0x2a8] sm:$0xff]
    %v3072 = vld [vmem:[#allocation3 + $0x2b0] sm:$0xff]
    %v3073 = vld [vmem:[#allocation3 + $0x2b8] sm:$0xff]
    %v3074 = vld [vmem:[#allocation3 + $0x2c0] sm:$0xff]
    %v3075 = vld [vmem:[#allocation3 + $0x2c8] sm:$0xff]
    %v3076 = vld [vmem:[#allocation3 + $0x2d0] sm:$0xff]
    %v3077 = vld [vmem:[#allocation3 + $0x2d8] sm:$0xff]
    %v3078 = vld [vmem:[#allocation3 + $0x2e0] sm:$0xff]
    %v3079 = vld [vmem:[#allocation3 + $0x2e8] sm:$0xff]
    %v3080 = vld [vmem:[#allocation3 + $0x2f0] sm:$0xff]
    %v3081 = vld [vmem:[#allocation3 + $0x2f8] sm:$0xff]
    %v3082 = vld [vmem:[#allocation3 + $0x300] sm:$0xff]
    %v3083 = vld [vmem:[#allocation3 + $0x308] sm:$0xff]
    %v3084 = vld [vmem:[#allocation3 + $0x310] sm:$0xff]
    %v3085 = vld [vmem:[#allocation3 + $0x318] sm:$0xff]
    %v3086 = vld [vmem:[#allocation3 + $0x320] sm:$0xff]
    %v3087 = vld [vmem:[#allocation3 + $0x328] sm:$0xff]
    %v3088 = vld [vmem:[#allocation3 + $0x330] sm:$0xff]
    %v3089 = vld [vmem:[#allocation3 + $0x338] sm:$0xff]
    %v3090 = vld [vmem:[#allocation3 + $0x340] sm:$0xff]
    %v3091 = vld [vmem:[#allocation3 + $0x348] sm:$0xff]
    %v3092 = vld [vmem:[#allocation3 + $0x350] sm:$0xff]
    %v3093 = vld [vmem:[#allocation3 + $0x358] sm:$0xff]
    %v3094 = vld [vmem:[#allocation3 + $0x360] sm:$0xff]
    %v3095 = vld [vmem:[#allocation3 + $0x368] sm:$0xff]
    %v3096 = vld [vmem:[#allocation3 + $0x370] sm:$0xff]
    %v3097 = vld [vmem:[#allocation3 + $0x378] sm:$0xff]
    %v3098 = vld [vmem:[#allocation3 + $0x380] sm:$0xff]
    %v3099 = vld [vmem:[#allocation3 + $0x388] sm:$0xff]
    %v3100 = vld [vmem:[#allocation3 + $0x390] sm:$0xff]
    %v3101 = vld [vmem:[#allocation3 + $0x398] sm:$0xff]
    %v3102 = vld [vmem:[#allocation3 + $0x3a0] sm:$0xff]
    %v3103 = vld [vmem:[#allocation3 + $0x3a8] sm:$0xff]
    %v3104 = vld [vmem:[#allocation3 + $0x3b0] sm:$0xff]
    %v3105 = vld [vmem:[#allocation3 + $0x3b8] sm:$0xff]
    %v3106 = vld [vmem:[#allocation3 + $0x3c0] sm:$0xff]
    %v3107 = vld [vmem:[#allocation3 + $0x3c8] sm:$0xff]
    %v3108 = vld [vmem:[#allocation3 + $0x3d0] sm:$0xff]
    %v3109 = vld [vmem:[#allocation3 + $0x3d8] sm:$0xff]
    %v3110 = vld [vmem:[#allocation3 + $0x3e0] sm:$0xff]
    %v3111 = vld [vmem:[#allocation3 + $0x3e8] sm:$0xff]
    %v3112 = vld [vmem:[#allocation3 + $0x3f0] sm:$0xff]
    %v3113 = vld [vmem:[#allocation3 + $0x3f8] sm:$0xff]
    %v3114 = vld [vmem:[#allocation3 + $0x400] sm:$0xff]
    %v3115 = vld [vmem:[#allocation3 + $0x408] sm:$0xff]
    %v3116 = vld [vmem:[#allocation3 + $0x410] sm:$0xff]
    %v3117 = vld [vmem:[#allocation3 + $0x418] sm:$0xff]
    %v3118 = vld [vmem:[#allocation3 + $0x420] sm:$0xff]
    %v3119 = vld [vmem:[#allocation3 + $0x428] sm:$0xff]
    %v3120 = vld [vmem:[#allocation3 + $0x430] sm:$0xff]
    %v3121 = vld [vmem:[#allocation3 + $0x438] sm:$0xff]
    %v3122 = vld [vmem:[#allocation3 + $0x440] sm:$0xff]
    %v3123 = vld [vmem:[#allocation3 + $0x448] sm:$0xff]
    %v3124 = vld [vmem:[#allocation3 + $0x450] sm:$0xff]
    %v3125 = vld [vmem:[#allocation3 + $0x458] sm:$0xff]
    %v3126 = vld [vmem:[#allocation3 + $0x460] sm:$0xff]
    %v3127 = vld [vmem:[#allocation3 + $0x468] sm:$0xff]
    %v3128 = vld [vmem:[#allocation3 + $0x470] sm:$0xff]
    %v3129 = vld [vmem:[#allocation3 + $0x478] sm:$0xff]
    %v3130 = vld [vmem:[#allocation3 + $0x480] sm:$0xff]
    %v3131 = vld [vmem:[#allocation3 + $0x488] sm:$0xff]
    %v3132 = vld [vmem:[#allocation3 + $0x490] sm:$0xff]
    %v3133 = vld [vmem:[#allocation3 + $0x498] sm:$0xff]
    %v3134 = vld [vmem:[#allocation3 + $0x4a0] sm:$0xff]
    %v3135 = vld [vmem:[#allocation3 + $0x4a8] sm:$0xff]
    %v3136 = vld [vmem:[#allocation3 + $0x4b0] sm:$0xff]
    %v3137 = vld [vmem:[#allocation3 + $0x4b8] sm:$0xff]
    %v3138 = vld [vmem:[#allocation3 + $0x4c0] sm:$0xff]
    %v3139 = vld [vmem:[#allocation3 + $0x4c8] sm:$0xff]
    %v3140 = vld [vmem:[#allocation3 + $0x4d0] sm:$0xff]
    %v3141 = vld [vmem:[#allocation3 + $0x4d8] sm:$0xff]
    %v3142 = vld [vmem:[#allocation3 + $0x4e0] sm:$0xff]
    %v3143 = vld [vmem:[#allocation3 + $0x4e8] sm:$0xff]
    %v3144 = vld [vmem:[#allocation3 + $0x4f0] sm:$0xff]
    %v3145 = vld [vmem:[#allocation3 + $0x4f8] sm:$0xff]
    %v3146 = vld [vmem:[#allocation3 + $0x500] sm:$0xff]
    %v3147 = vld [vmem:[#allocation3 + $0x508] sm:$0xff]
    %v3148 = vld [vmem:[#allocation3 + $0x510] sm:$0xff]
    %v3149 = vld [vmem:[#allocation3 + $0x518] sm:$0xff]
    %v3150 = vld [vmem:[#allocation3 + $0x520] sm:$0xff]
    %v3151 = vld [vmem:[#allocation3 + $0x528] sm:$0xff]
    %v3152 = vld [vmem:[#allocation3 + $0x530] sm:$0xff]
    %v3153 = vld [vmem:[#allocation3 + $0x538] sm:$0xff]
    %v3154 = vld [vmem:[#allocation3 + $0x540] sm:$0xff]
    %v3155 = vld [vmem:[#allocation3 + $0x548] sm:$0xff]
    %v3156 = vld [vmem:[#allocation3 + $0x550] sm:$0xff]
    %v3157 = vld [vmem:[#allocation3 + $0x558] sm:$0xff]
    %v3158 = vld [vmem:[#allocation3 + $0x560] sm:$0xff]
    %v3159 = vld [vmem:[#allocation3 + $0x568] sm:$0xff]
    %v3160 = vld [vmem:[#allocation3 + $0x570] sm:$0xff]
    %v3161 = vld [vmem:[#allocation3 + $0x578] sm:$0xff]
    %v3162 = vld [vmem:[#allocation3 + $0x580] sm:$0xff]
    %v3163 = vld [vmem:[#allocation3 + $0x588] sm:$0xff]
    %v3164 = vld [vmem:[#allocation3 + $0x590] sm:$0xff]
    %v3165 = vld [vmem:[#allocation3 + $0x598] sm:$0xff]
    %v3166 = vld [vmem:[#allocation3 + $0x5a0] sm:$0xff]
    %v3167 = vld [vmem:[#allocation3 + $0x5a8] sm:$0xff]
    %v3168 = vld [vmem:[#allocation3 + $0x5b0] sm:$0xff]
    %v3169 = vld [vmem:[#allocation3 + $0x5b8] sm:$0xff]
    %v3170 = vld [vmem:[#allocation3 + $0x5c0] sm:$0xff]
    %v3171 = vld [vmem:[#allocation3 + $0x5c8] sm:$0xff]
    %v3172 = vld [vmem:[#allocation3 + $0x5d0] sm:$0xff]
    %v3173 = vld [vmem:[#allocation3 + $0x5d8] sm:$0xff]
    %v3174 = vld [vmem:[#allocation3 + $0x5e0] sm:$0xff]
    %v3175 = vld [vmem:[#allocation3 + $0x5e8] sm:$0xff]
    %v3176 = vld [vmem:[#allocation3 + $0x5f0] sm:$0xff]
    %v3177 = vld [vmem:[#allocation3 + $0x5f8] sm:$0xff]
    %3178 = vmatprep.subr.bf16.mxu0 %v2987
    %3179 = vmatpush1.bf16.msra.mxu0 %v2986
    %3180 = vmatprep.subr.bf16.mxu0 %v2991
    %3181 = vmatpush1.bf16.msra.mxu0 %v2990
    %3182 = vmatprep.subr.bf16.mxu0 %v2995
    %3183 = vmatpush1.bf16.msra.mxu0 %v2994
    %3184 = vmatprep.subr.bf16.mxu0 %v2999
    %3185 = vmatpush1.bf16.msra.mxu0 %v2998
    %3186 = vmatprep.subr.bf16.mxu0 %v3003
    %3187 = vmatpush1.bf16.msra.mxu0 %v3002
    %3188 = vmatprep.subr.bf16.mxu0 %v3007
    %3189 = vmatpush1.bf16.msra.mxu0 %v3006
    %3190 = vmatprep.subr.bf16.mxu0 %v3011
    %3191 = vmatpush1.bf16.msra.mxu0 %v3010
    %3192 = vmatprep.subr.bf16.mxu0 %v3015
    %3193 = vmatpush1.bf16.msra.mxu0 %v3014
    %3194 = vmatprep.subr.bf16.mxu0 %v3019
    %3195 = vmatpush1.bf16.msra.mxu0 %v3018
    %3196 = vmatprep.subr.bf16.mxu0 %v3023
    %3197 = vmatpush1.bf16.msra.mxu0 %v3022
    %3198 = vmatprep.subr.bf16.mxu0 %v3027
    %3199 = vmatpush1.bf16.msra.mxu0 %v3026
    %3200 = vmatprep.subr.bf16.mxu0 %v3031
    %3201 = vmatpush1.bf16.msra.mxu0 %v3030
    %3202 = vmatprep.subr.bf16.mxu0 %v3035
    %3203 = vmatpush1.bf16.msra.mxu0 %v3034
    %3204 = vmatprep.subr.bf16.mxu0 %v3039
    %3205 = vmatpush1.bf16.msra.mxu0 %v3038
    %3206 = vmatprep.subr.bf16.mxu0 %v3043
    %3207 = vmatpush1.bf16.msra.mxu0 %v3042
    %3208 = vmatprep.subr.bf16.mxu0 %v3047
    %3209 = vmatpush1.bf16.msra.mxu0 %v3046
    %3210 = vmatprep.mubr.bf16.mxu0 %v2981
    %3211 = vmatmul.mubr.bf16.gmra.mrb[0].mxu0 %v2980
    %v3212 = vpop.f32.mrb[0].mxu0
    %v3213 = vadd.f32 0.0, %v3212
    %v3214 = vpop.f32.mrb[0].mxu0
    %v3215 = vadd.f32 0.0, %v3214
    %v3216 = vpop.f32.mrb[0].mxu0
    %v3217 = vpop.f32.mrb[0].mxu0
    %3218 = vdwg.mxu0
    %3219 = vmatprep.subr.bf16.mxu0 %v3051
    %3220 = vmatpush1.bf16.msra.mxu0 %v3050
    %3221 = vmatprep.subr.bf16.mxu0 %v3055
    %3222 = vmatpush1.bf16.msra.mxu0 %v3054
    %3223 = vmatprep.subr.bf16.mxu0 %v3059
    %3224 = vmatpush1.bf16.msra.mxu0 %v3058
    %3225 = vmatprep.subr.bf16.mxu0 %v3063
    %3226 = vmatpush1.bf16.msra.mxu0 %v3062
    %3227 = vmatprep.subr.bf16.mxu0 %v3067
    %3228 = vmatpush1.bf16.msra.mxu0 %v3066
    %3229 = vmatprep.subr.bf16.mxu0 %v3071
    %3230 = vmatpush1.bf16.msra.mxu0 %v3070
    %3231 = vmatprep.subr.bf16.mxu0 %v3075
    %3232 = vmatpush1.bf16.msra.mxu0 %v3074
    %3233 = vmatprep.subr.bf16.mxu0 %v3079
    %3234 = vmatpush1.bf16.msra.mxu0 %v3078
    %3235 = vmatprep.subr.bf16.mxu0 %v3083
    %3236 = vmatpush1.bf16.msra.mxu0 %v3082
    %3237 = vmatprep.subr.bf16.mxu0 %v3087
    %3238 = vmatpush1.bf16.msra.mxu0 %v3086
    %3239 = vmatprep.subr.bf16.mxu0 %v3091
    %3240 = vmatpush1.bf16.msra.mxu0 %v3090
    %3241 = vmatprep.subr.bf16.mxu0 %v3095
    %3242 = vmatpush1.bf16.msra.mxu0 %v3094
    %3243 = vmatprep.subr.bf16.mxu0 %v3099
    %3244 = vmatpush1.bf16.msra.mxu0 %v3098
    %3245 = vmatprep.subr.bf16.mxu0 %v3103
    %3246 = vmatpush1.bf16.msra.mxu0 %v3102
    %3247 = vmatprep.subr.bf16.mxu0 %v3107
    %3248 = vmatpush1.bf16.msra.mxu0 %v3106
    %3249 = vmatprep.subr.bf16.mxu0 %v3111
    %3250 = vmatpush1.bf16.msra.mxu0 %v3110
    %3251 = vmatprep.mubr.bf16.mxu0 %v2983
    %3252 = vmatmul.mubr.bf16.gmra.mrb[0].mxu0 %v2982
    %v3253 = vpop.f32.mrb[0].mxu0
    %v3254 = vadd.f32 %v3213, %v3253
    %v3255 = vpop.f32.mrb[0].mxu0
    %v3256 = vadd.f32 %v3215, %v3255
    %v3257 = vpop.f32.mrb[0].mxu0
    %v3258 = vpop.f32.mrb[0].mxu0
    %3259 = vdwg.mxu0
    %3260 = vmatprep.subr.bf16.mxu0 %v3115
    %3261 = vmatpush1.bf16.msra.mxu0 %v3114
    %3262 = vmatprep.subr.bf16.mxu0 %v3119
    %3263 = vmatpush1.bf16.msra.mxu0 %v3118
    %3264 = vmatprep.subr.bf16.mxu0 %v3123
    %3265 = vmatpush1.bf16.msra.mxu0 %v3122
    %3266 = vmatprep.subr.bf16.mxu0 %v3127
    %3267 = vmatpush1.bf16.msra.mxu0 %v3126
    %3268 = vmatprep.subr.bf16.mxu0 %v3131
    %3269 = vmatpush1.bf16.msra.mxu0 %v3130
    %3270 = vmatprep.subr.bf16.mxu0 %v3135
    %3271 = vmatpush1.bf16.msra.mxu0 %v3134
    %3272 = vmatprep.subr.bf16.mxu0 %v3139
    %3273 = vmatpush1.bf16.msra.mxu0 %v3138
    %3274 = vmatprep.subr.bf16.mxu0 %v3143
    %3275 = vmatpush1.bf16.msra.mxu0 %v3142
    %3276 = vmatprep.subr.bf16.mxu0 %v3147
    %3277 = vmatpush1.bf16.msra.mxu0 %v3146
    %3278 = vmatprep.subr.bf16.mxu0 %v3151
    %3279 = vmatpush1.bf16.msra.mxu0 %v3150
    %3280 = vmatprep.subr.bf16.mxu0 %v3155
    %3281 = vmatpush1.bf16.msra.mxu0 %v3154
    %3282 = vmatprep.subr.bf16.mxu0 %v3159
    %3283 = vmatpush1.bf16.msra.mxu0 %v3158
    %3284 = vmatprep.subr.bf16.mxu0 %v3163
    %3285 = vmatpush1.bf16.msra.mxu0 %v3162
    %3286 = vmatprep.subr.bf16.mxu0 %v3167
    %3287 = vmatpush1.bf16.msra.mxu0 %v3166
    %3288 = vmatprep.subr.bf16.mxu0 %v3171
    %3289 = vmatpush1.bf16.msra.mxu0 %v3170
    %3290 = vmatprep.subr.bf16.mxu0 %v3175
    %3291 = vmatpush1.bf16.msra.mxu0 %v3174
    %3292 = vmatprep.mubr.bf16.mxu0 %v2985
    %3293 = vmatmul.mubr.bf16.gmra.mrb[0].mxu0 %v2984
    %v3294 = vpop.f32.mrb[0].mxu0
    %v3295 = vadd.f32 %v3254, %v3294
    %v3296 = vpop.f32.mrb[0].mxu0
    %v3297 = vadd.f32 %v3256, %v3296
    %v3298 = vpop.f32.mrb[0].mxu0
    %v3299 = vpop.f32.mrb[0].mxu0
    %3300 = vdwg.mxu0
    %3301 = vmatprep.subr.bf16.mxu0 %v2989
    %3302 = vmatpush1.bf16.msra.mxu0 %v2988
    %3303 = vmatprep.subr.bf16.mxu0 %v2993
    %3304 = vmatpush1.bf16.msra.mxu0 %v2992
    %3305 = vmatprep.subr.bf16.mxu0 %v2997
    %3306 = vmatpush1.bf16.msra.mxu0 %v2996
    %3307 = vmatprep.subr.bf16.mxu0 %v3001
    %3308 = vmatpush1.bf16.msra.mxu0 %v3000
    %3309 = vmatprep.subr.bf16.mxu0 %v3005
    %3310 = vmatpush1.bf16.msra.mxu0 %v3004
    %3311 = vmatprep.subr.bf16.mxu0 %v3009
    %3312 = vmatpush1.bf16.msra.mxu0 %v3008
    %3313 = vmatprep.subr.bf16.mxu0 %v3013
    %3314 = vmatpush1.bf16.msra.mxu0 %v3012
    %3315 = vmatprep.subr.bf16.mxu0 %v3017
    %3316 = vmatpush1.bf16.msra.mxu0 %v3016
    %3317 = vmatprep.subr.bf16.mxu0 %v3021
    %3318 = vmatpush1.bf16.msra.mxu0 %v3020
    %3319 = vmatprep.subr.bf16.mxu0 %v3025
    %3320 = vmatpush1.bf16.msra.mxu0 %v3024
    %3321 = vmatprep.subr.bf16.mxu0 %v3029
    %3322 = vmatpush1.bf16.msra.mxu0 %v3028
    %3323 = vmatprep.subr.bf16.mxu0 %v3033
    %3324 = vmatpush1.bf16.msra.mxu0 %v3032
    %3325 = vmatprep.subr.bf16.mxu0 %v3037
    %3326 = vmatpush1.bf16.msra.mxu0 %v3036
    %3327 = vmatprep.subr.bf16.mxu0 %v3041
    %3328 = vmatpush1.bf16.msra.mxu0 %v3040
    %3329 = vmatprep.subr.bf16.mxu0 %v3045
    %3330 = vmatpush1.bf16.msra.mxu0 %v3044
    %3331 = vmatprep.subr.bf16.mxu0 %v3049
    %3332 = vmatpush1.bf16.msra.mxu0 %v3048
    %3333 = vmatprep.mubr.bf16.mxu0 %v2981
    %3334 = vmatmul.mubr.bf16.gmra.mrb[0].mxu0 %v2980
    %v3335 = vpop.f32.mrb[0].mxu0
    %v3336 = vadd.f32 0.0, %v3335
    %v3337 = vpop.f32.mrb[0].mxu0
    %v3338 = vadd.f32 0.0, %v3337
    %v3339 = vpop.f32.mrb[0].mxu0
    %v3340 = vpop.f32.mrb[0].mxu0
    %3341 = vdwg.mxu0
    %3342 = vmatprep.subr.bf16.mxu0 %v3053
    %3343 = vmatpush1.bf16.msra.mxu0 %v3052
    %3344 = vmatprep.subr.bf16.mxu0 %v3057
    %3345 = vmatpush1.bf16.msra.mxu0 %v3056
    %3346 = vmatprep.subr.bf16.mxu0 %v3061
    %3347 = vmatpush1.bf16.msra.mxu0 %v3060
    %3348 = vmatprep.subr.bf16.mxu0 %v3065
    %3349 = vmatpush1.bf16.msra.mxu0 %v3064
    %3350 = vmatprep.subr.bf16.mxu0 %v3069
    %3351 = vmatpush1.bf16.msra.mxu0 %v3068
    %3352 = vmatprep.subr.bf16.mxu0 %v3073
    %3353 = vmatpush1.bf16.msra.mxu0 %v3072
    %3354 = vmatprep.subr.bf16.mxu0 %v3077
    %3355 = vmatpush1.bf16.msra.mxu0 %v3076
    %3356 = vmatprep.subr.bf16.mxu0 %v3081
    %3357 = vmatpush1.bf16.msra.mxu0 %v3080
    %3358 = vmatprep.subr.bf16.mxu0 %v3085
    %3359 = vmatpush1.bf16.msra.mxu0 %v3084
    %3360 = vmatprep.subr.bf16.mxu0 %v3089
    %3361 = vmatpush1.bf16.msra.mxu0 %v3088
    %3362 = vmatprep.subr.bf16.mxu0 %v3093
    %3363 = vmatpush1.bf16.msra.mxu0 %v3092
    %3364 = vmatprep.subr.bf16.mxu0 %v3097
    %3365 = vmatpush1.bf16.msra.mxu0 %v3096
    %3366 = vmatprep.subr.bf16.mxu0 %v3101
    %3367 = vmatpush1.bf16.msra.mxu0 %v3100
    %3368 = vmatprep.subr.bf16.mxu0 %v3105
    %3369 = vmatpush1.bf16.msra.mxu0 %v3104
    %3370 = vmatprep.subr.bf16.mxu0 %v3109
    %3371 = vmatpush1.bf16.msra.mxu0 %v3108
    %3372 = vmatprep.subr.bf16.mxu0 %v3113
    %3373 = vmatpush1.bf16.msra.mxu0 %v3112
    %3374 = vmatprep.mubr.bf16.mxu0 %v2983
    %3375 = vmatmul.mubr.bf16.gmra.mrb[0].mxu0 %v2982
    %v3376 = vpop.f32.mrb[0].mxu0
    %v3377 = vadd.f32 %v3336, %v3376
    %v3378 = vpop.f32.mrb[0].mxu0
    %v3379 = vadd.f32 %v3338, %v3378
    %v3380 = vpop.f32.mrb[0].mxu0
    %v3381 = vpop.f32.mrb[0].mxu0
    %3382 = vdwg.mxu0
    %3383 = vmatprep.subr.bf16.mxu0 %v3117
    %3384 = vmatpush1.bf16.msra.mxu0 %v3116
    %3385 = vmatprep.subr.bf16.mxu0 %v3121
    %3386 = vmatpush1.bf16.msra.mxu0 %v3120
    %3387 = vmatprep.subr.bf16.mxu0 %v3125
    %3388 = vmatpush1.bf16.msra.mxu0 %v3124
    %3389 = vmatprep.subr.bf16.mxu0 %v3129
    %3390 = vmatpush1.bf16.msra.mxu0 %v3128
    %3391 = vmatprep.subr.bf16.mxu0 %v3133
    %3392 = vmatpush1.bf16.msra.mxu0 %v3132
    %3393 = vmatprep.subr.bf16.mxu0 %v3137
    %3394 = vmatpush1.bf16.msra.mxu0 %v3136
    %3395 = vmatprep.subr.bf16.mxu0 %v3141
    %3396 = vmatpush1.bf16.msra.mxu0 %v3140
    %3397 = vmatprep.subr.bf16.mxu0 %v3145
    %3398 = vmatpush1.bf16.msra.mxu0 %v3144
    %3399 = vmatprep.subr.bf16.mxu0 %v3149
    %3400 = vmatpush1.bf16.msra.mxu0 %v3148
    %3401 = vmatprep.subr.bf16.mxu0 %v3153
    %3402 = vmatpush1.bf16.msra.mxu0 %v3152
    %3403 = vmatprep.subr.bf16.mxu0 %v3157
    %3404 = vmatpush1.bf16.msra.mxu0 %v3156
    %3405 = vmatprep.subr.bf16.mxu0 %v3161
    %3406 = vmatpush1.bf16.msra.mxu0 %v3160
    %3407 = vmatprep.subr.bf16.mxu0 %v3165
    %3408 = vmatpush1.bf16.msra.mxu0 %v3164
    %3409 = vmatprep.subr.bf16.mxu0 %v3169
    %3410 = vmatpush1.bf16.msra.mxu0 %v3168
    %3411 = vmatprep.subr.bf16.mxu0 %v3173
    %3412 = vmatpush1.bf16.msra.mxu0 %v3172
    %3413 = vmatprep.subr.bf16.mxu0 %v3177
    %3414 = vmatpush1.bf16.msra.mxu0 %v3176
    %3415 = vmatprep.mubr.bf16.mxu0 %v2985
    %3416 = vmatmul.mubr.bf16.gmra.mrb[0].mxu0 %v2984
    %v3417 = vpop.f32.mrb[0].mxu0
    %v3418 = vadd.f32 %v3377, %v3417
    %v3419 = vpop.f32.mrb[0].mxu0
    %v3420 = vadd.f32 %v3379, %v3419
    %v3421 = vpop.f32.mrb[0].mxu0
    %v3422 = vpop.f32.mrb[0].mxu0
    %3423 = vdwg.mxu0
    %v3424 = vrot.slane %v3295, 4
    %v3425 = vadd.f32 %v3295, %v3424
    %v3426 = vrot.slane %v3425, 2
    %v3427 = vadd.f32 %v3425, %v3426
    %v3428 = vrot.slane %v3427, 1
    %v3429 = vadd.f32 %v3427, %v3428
    %v3430 = vrot.slane %v3297, 4
    %v3431 = vadd.f32 %v3297, %v3430
    %v3432 = vrot.slane %v3431, 2
    %v3433 = vadd.f32 %v3431, %v3432
    %v3434 = vrot.slane %v3433, 1
    %v3435 = vadd.f32 %v3433, %v3434
    %v3436 = vrot.slane %v3418, 4
    %v3437 = vadd.f32 %v3418, %v3436
    %v3438 = vrot.slane %v3437, 2
    %v3439 = vadd.f32 %v3437, %v3438
    %v3440 = vrot.slane %v3439, 1
    %v3441 = vadd.f32 %v3439, %v3440
    %v3442 = vrot.slane %v3420, 4
    %v3443 = vadd.f32 %v3420, %v3442
    %v3444 = vrot.slane %v3443, 2
    %v3445 = vadd.f32 %v3443, %v3444
    %v3446 = vrot.slane %v3445, 1
    %v3447 = vadd.f32 %v3445, %v3446
    %v3448 = vmul.f32 %v3429, %v2745
    %v3449 = vmul.f32 %v3435, %v2745
    %v3450 = vmul.f32 %v3441, %v2745
    %v3451 = vmul.f32 %v3447, %v2745
    %v3452 = vmul.f32 %v3295, %v3295
    %v3453 = vmul.f32 %v3297, %v3297
    %v3454 = vmul.f32 %v3418, %v3418
    %v3455 = vmul.f32 %v3420, %v3420
    %v3456 = vrot.slane %v3452, 4
    %v3457 = vadd.f32 %v3452, %v3456
    %v3458 = vrot.slane %v3457, 2
    %v3459 = vadd.f32 %v3457, %v3458
    %v3460 = vrot.slane %v3459, 1
    %v3461 = vadd.f32 %v3459, %v3460
    %v3462 = vrot.slane %v3453, 4
    %v3463 = vadd.f32 %v3453, %v3462
    %v3464 = vrot.slane %v3463, 2
    %v3465 = vadd.f32 %v3463, %v3464
    %v3466 = vrot.slane %v3465, 1
    %v3467 = vadd.f32 %v3465, %v3466
    %v3468 = vrot.slane %v3454, 4
    %v3469 = vadd.f32 %v3454, %v3468
    %v3470 = vrot.slane %v3469, 2
    %v3471 = vadd.f32 %v3469, %v3470
    %v3472 = vrot.slane %v3471, 1
    %v3473 = vadd.f32 %v3471, %v3472
    %v3474 = vrot.slane %v3455, 4
    %v3475 = vadd.f32 %v3455, %v3474
    %v3476 = vrot.slane %v3475, 2
    %v3477 = vadd.f32 %v3475, %v3476
    %v3478 = vrot.slane %v3477, 1
    %v3479 = vadd.f32 %v3477, %v3478
    %v3480 = vmul.f32 %v3461, %v2745
    %v3481 = vmul.f32 %v3467, %v2745
    %v3482 = vmul.f32 %v3473, %v2745
    %v3483 = vmul.f32 %v3479, %v2745
    %v3484 = vmul.f32 %v3448, %v3448
    %v3485 = vmul.f32 %v3449, %v3449
    %v3486 = vmul.f32 %v3450, %v3450
    %v3487 = vmul.f32 %v3451, %v3451
    %v3488 = vsub.f32 %v3480, %v3484
    %v3489 = vsub.f32 %v3481, %v3485
    %v3490 = vsub.f32 %v3482, %v3486
    %v3491 = vsub.f32 %v3483, %v3487
    %v3492 = vmax.f32 %v3488, 0.0
    %v3493 = vmax.f32 %v3489, 0.0
    %v3494 = vmax.f32 %v3490, 0.0
    %v3495 = vmax.f32 %v3491, 0.0
    %v3496 = vsub.f32 %v3295, %v3448
    %v3497 = vsub.f32 %v3297, %v3449
    %v3498 = vsub.f32 %v3418, %v3450
    %v3499 = vsub.f32 %v3420, %v3451
    %v3500 = vld [vmem:[%s8] sm:$0xf]
    %v3502 = vlaneseq
    %v3503 = vshrl.u32 %v3502, 7
    %v3504 = vsub.s32 0, %v3503
    %v3505 = vrot.slane %v3500, %v3504
    %v3506 = vlaneseq
    %v3507 = vshrl.u32 %v3506, 7
    %v3508 = vsub.s32 1, %v3507
    %v3509 = vrot.slane %v3500, %v3508
    %v3510 = vlaneseq
    %v3511 = vshrl.u32 %v3510, 7
    %v3512 = vsub.s32 2, %v3511
    %v3513 = vrot.slane %v3500, %v3512
    %v3514 = vlaneseq
    %v3515 = vshrl.u32 %v3514, 7
    %v3516 = vsub.s32 3, %v3515
    %v3517 = vrot.slane %v3500, %v3516
    %v3522 = vadd.f32 %v3492, %v3505
    %v3523 = vadd.f32 %v3493, %v3509
    %v3524 = vadd.f32 %v3494, %v3513
    %v3525 = vadd.f32 %v3495, %v3517
    %v3526 = vrsqrt.pop %v3522
    %v3527 = vrsqrt.pop %v3523
    %v3528 = vrsqrt.pop %v3524
    %v3529 = vrsqrt.pop %v3525
    %v3530 = vlaneseq
    %v3531 = vshrl.u32 %v3530, 7
    %v3532 = vsub.s32 0, %v3531
    %v3533 = vrot.slane %v3526, %v3532
    %v3534 = vlaneseq
    %v3535 = vshrl.u32 %v3534, 7
    %v3536 = vsub.s32 0, %v3535
    %v3537 = vrot.slane %v3527, %v3536
    %v3538 = vlaneseq
    %v3539 = vshrl.u32 %v3538, 7
    %v3540 = vsub.s32 0, %v3539
    %v3541 = vrot.slane %v3528, %v3540
    %v3542 = vlaneseq
    %v3543 = vshrl.u32 %v3542, 7
    %v3544 = vsub.s32 0, %v3543
    %v3545 = vrot.slane %v3529, %v3544
    %v3546 = vmul.f32 %v3496, %v3533
    %v3547 = vmul.f32 %v3497, %v3537
    %v3548 = vmul.f32 %v3498, %v3541
    %v3549 = vmul.f32 %v3499, %v3545
    %v3550 = vld [vmem:[%s6] sm:$0xf]
    %v3552 = vlaneseq
    %v3553 = vshrl.u32 %v3552, 7
    %v3554 = vsub.s32 0, %v3553
    %v3555 = vrot.slane %v3550, %v3554
    %v3556 = vlaneseq
    %v3557 = vshrl.u32 %v3556, 7
    %v3558 = vsub.s32 1, %v3557
    %v3559 = vrot.slane %v3550, %v3558
    %v3560 = vlaneseq
    %v3561 = vshrl.u32 %v3560, 7
    %v3562 = vsub.s32 2, %v3561
    %v3563 = vrot.slane %v3550, %v3562
    %v3564 = vlaneseq
    %v3565 = vshrl.u32 %v3564, 7
    %v3566 = vsub.s32 3, %v3565
    %v3567 = vrot.slane %v3550, %v3566
    %v3572 = vmul.f32 %v3546, %v3555
    %v3573 = vmul.f32 %v3547, %v3559
    %v3574 = vmul.f32 %v3548, %v3563
    %v3575 = vmul.f32 %v3549, %v3567
    %v3576 = vld [vmem:[#allocation13] sm:$0xf]
    %v3578 = vlaneseq
    %v3579 = vshrl.u32 %v3578, 7
    %v3580 = vsub.s32 0, %v3579
    %v3581 = vrot.slane %v3576, %v3580
    %v3582 = vlaneseq
    %v3583 = vshrl.u32 %v3582, 7
    %v3584 = vsub.s32 1, %v3583
    %v3585 = vrot.slane %v3576, %v3584
    %v3586 = vlaneseq
    %v3587 = vshrl.u32 %v3586, 7
    %v3588 = vsub.s32 2, %v3587
    %v3589 = vrot.slane %v3576, %v3588
    %v3590 = vlaneseq
    %v3591 = vshrl.u32 %v3590, 7
    %v3592 = vsub.s32 3, %v3591
    %v3593 = vrot.slane %v3576, %v3592
    %v3598 = vadd.f32 %v3572, %v3581
    %v3599 = vadd.f32 %v3573, %v3585
    %v3600 = vadd.f32 %v3574, %v3589
    %v3601 = vadd.f32 %v3575, %v3593
    %v3602 = vtanh.pop %v3598
    %v3603 = vtanh.pop %v3599
    %v3604 = vtanh.pop %v3600
    %v3605 = vtanh.pop %v3601
    %v3606 = vpack.c.bf16 %v3602, %v3602
    %v3607 = vpack.c.bf16 %v3603, %v3603
    %v3608 = vpack.c.bf16 %v3604, %v3604
    %v3609 = vpack.c.bf16 %v3605, %v3605
    %v3610 = vld [vmem:[#allocation4] sm:$0xff]
    %v3611 = vld [vmem:[#allocation4 + $0x8] sm:$0xff]
    %v3612 = vld [vmem:[#allocation4 + $0x10] sm:$0xff]
    %v3613 = vld [vmem:[#allocation4 + $0x18] sm:$0xff]
    %v3614 = vld [vmem:[#allocation4 + $0x20] sm:$0xff]
    %v3615 = vld [vmem:[#allocation4 + $0x28] sm:$0xff]
    %v3616 = vld [vmem:[#allocation4 + $0x30] sm:$0xff]
    %v3617 = vld [vmem:[#allocation4 + $0x38] sm:$0xff]
    %v3618 = vld [vmem:[#allocation4 + $0x40] sm:$0xff]
    %v3619 = vld [vmem:[#allocation4 + $0x48] sm:$0xff]
    %v3620 = vld [vmem:[#allocation4 + $0x50] sm:$0xff]
    %v3621 = vld [vmem:[#allocation4 + $0x58] sm:$0xff]
    %v3622 = vld [vmem:[#allocation4 + $0x60] sm:$0xff]
    %v3623 = vld [vmem:[#allocation4 + $0x68] sm:$0xff]
    %v3624 = vld [vmem:[#allocation4 + $0x70] sm:$0xff]
    %v3625 = vld [vmem:[#allocation4 + $0x78] sm:$0xff]
    %v3626 = vld [vmem:[#allocation4 + $0x80] sm:$0xff]
    %v3627 = vld [vmem:[#allocation4 + $0x88] sm:$0xff]
    %v3628 = vld [vmem:[#allocation4 + $0x90] sm:$0xff]
    %v3629 = vld [vmem:[#allocation4 + $0x98] sm:$0xff]
    %v3630 = vld [vmem:[#allocation4 + $0xa0] sm:$0xff]
    %v3631 = vld [vmem:[#allocation4 + $0xa8] sm:$0xff]
    %v3632 = vld [vmem:[#allocation4 + $0xb0] sm:$0xff]
    %v3633 = vld [vmem:[#allocation4 + $0xb8] sm:$0xff]
    %v3634 = vld [vmem:[#allocation4 + $0xc0] sm:$0xff]
    %v3635 = vld [vmem:[#allocation4 + $0xc8] sm:$0xff]
    %v3636 = vld [vmem:[#allocation4 + $0xd0] sm:$0xff]
    %v3637 = vld [vmem:[#allocation4 + $0xd8] sm:$0xff]
    %v3638 = vld [vmem:[#allocation4 + $0xe0] sm:$0xff]
    %v3639 = vld [vmem:[#allocation4 + $0xe8] sm:$0xff]
    %v3640 = vld [vmem:[#allocation4 + $0xf0] sm:$0xff]
    %v3641 = vld [vmem:[#allocation4 + $0xf8] sm:$0xff]
    %v3642 = vld [vmem:[#allocation4 + $0x100] sm:$0xff]
    %v3643 = vld [vmem:[#allocation4 + $0x108] sm:$0xff]
    %v3644 = vld [vmem:[#allocation4 + $0x110] sm:$0xff]
    %v3645 = vld [vmem:[#allocation4 + $0x118] sm:$0xff]
    %v3646 = vld [vmem:[#allocation4 + $0x120] sm:$0xff]
    %v3647 = vld [vmem:[#allocation4 + $0x128] sm:$0xff]
    %v3648 = vld [vmem:[#allocation4 + $0x130] sm:$0xff]
    %v3649 = vld [vmem:[#allocation4 + $0x138] sm:$0xff]
    %v3650 = vld [vmem:[#allocation4 + $0x140] sm:$0xff]
    %v3651 = vld [vmem:[#allocation4 + $0x148] sm:$0xff]
    %v3652 = vld [vmem:[#allocation4 + $0x150] sm:$0xff]
    %v3653 = vld [vmem:[#allocation4 + $0x158] sm:$0xff]
    %v3654 = vld [vmem:[#allocation4 + $0x160] sm:$0xff]
    %v3655 = vld [vmem:[#allocation4 + $0x168] sm:$0xff]
    %v3656 = vld [vmem:[#allocation4 + $0x170] sm:$0xff]
    %v3657 = vld [vmem:[#allocation4 + $0x178] sm:$0xff]
    %v3658 = vld [vmem:[#allocation4 + $0x180] sm:$0xff]
    %v3659 = vld [vmem:[#allocation4 + $0x188] sm:$0xff]
    %v3660 = vld [vmem:[#allocation4 + $0x190] sm:$0xff]
    %v3661 = vld [vmem:[#allocation4 + $0x198] sm:$0xff]
    %v3662 = vld [vmem:[#allocation4 + $0x1a0] sm:$0xff]
    %v3663 = vld [vmem:[#allocation4 + $0x1a8] sm:$0xff]
    %v3664 = vld [vmem:[#allocation4 + $0x1b0] sm:$0xff]
    %v3665 = vld [vmem:[#allocation4 + $0x1b8] sm:$0xff]
    %v3666 = vld [vmem:[#allocation4 + $0x1c0] sm:$0xff]
    %v3667 = vld [vmem:[#allocation4 + $0x1c8] sm:$0xff]
    %v3668 = vld [vmem:[#allocation4 + $0x1d0] sm:$0xff]
    %v3669 = vld [vmem:[#allocation4 + $0x1d8] sm:$0xff]
    %v3670 = vld [vmem:[#allocation4 + $0x1e0] sm:$0xff]
    %v3671 = vld [vmem:[#allocation4 + $0x1e8] sm:$0xff]
    %v3672 = vld [vmem:[#allocation4 + $0x1f0] sm:$0xff]
    %v3673 = vld [vmem:[#allocation4 + $0x1f8] sm:$0xff]
    %v3674 = vld [vmem:[#allocation4 + $0x200] sm:$0xff]
    %v3675 = vld [vmem:[#allocation4 + $0x208] sm:$0xff]
    %v3676 = vld [vmem:[#allocation4 + $0x210] sm:$0xff]
    %v3677 = vld [vmem:[#allocation4 + $0x218] sm:$0xff]
    %v3678 = vld [vmem:[#allocation4 + $0x220] sm:$0xff]
    %v3679 = vld [vmem:[#allocation4 + $0x228] sm:$0xff]
    %v3680 = vld [vmem:[#allocation4 + $0x230] sm:$0xff]
    %v3681 = vld [vmem:[#allocation4 + $0x238] sm:$0xff]
    %v3682 = vld [vmem:[#allocation4 + $0x240] sm:$0xff]
    %v3683 = vld [vmem:[#allocation4 + $0x248] sm:$0xff]
    %v3684 = vld [vmem:[#allocation4 + $0x250] sm:$0xff]
    %v3685 = vld [vmem:[#allocation4 + $0x258] sm:$0xff]
    %v3686 = vld [vmem:[#allocation4 + $0x260] sm:$0xff]
    %v3687 = vld [vmem:[#allocation4 + $0x268] sm:$0xff]
    %v3688 = vld [vmem:[#allocation4 + $0x270] sm:$0xff]
    %v3689 = vld [vmem:[#allocation4 + $0x278] sm:$0xff]
    %v3690 = vld [vmem:[#allocation4 + $0x280] sm:$0xff]
    %v3691 = vld [vmem:[#allocation4 + $0x288] sm:$0xff]
    %v3692 = vld [vmem:[#allocation4 + $0x290] sm:$0xff]
    %v3693 = vld [vmem:[#allocation4 + $0x298] sm:$0xff]
    %v3694 = vld [vmem:[#allocation4 + $0x2a0] sm:$0xff]
    %v3695 = vld [vmem:[#allocation4 + $0x2a8] sm:$0xff]
    %v3696 = vld [vmem:[#allocation4 + $0x2b0] sm:$0xff]
    %v3697 = vld [vmem:[#allocation4 + $0x2b8] sm:$0xff]
    %v3698 = vld [vmem:[#allocation4 + $0x2c0] sm:$0xff]
    %v3699 = vld [vmem:[#allocation4 + $0x2c8] sm:$0xff]
    %v3700 = vld [vmem:[#allocation4 + $0x2d0] sm:$0xff]
    %v3701 = vld [vmem:[#allocation4 + $0x2d8] sm:$0xff]
    %v3702 = vld [vmem:[#allocation4 + $0x2e0] sm:$0xff]
    %v3703 = vld [vmem:[#allocation4 + $0x2e8] sm:$0xff]
    %v3704 = vld [vmem:[#allocation4 + $0x2f0] sm:$0xff]
    %v3705 = vld [vmem:[#allocation4 + $0x2f8] sm:$0xff]
    %3706 = vmatprep.subr.bf16.mxu0 %v3611
    %3707 = vmatpush1.bf16.msra.mxu0 %v3610
    %3708 = vmatprep.subr.bf16.mxu0 %v3614
    %3709 = vmatpush1.bf16.msra.mxu0 %v3613
    %3710 = vmatprep.subr.bf16.mxu0 %v3617
    %3711 = vmatpush1.bf16.msra.mxu0 %v3616
    %3712 = vmatprep.subr.bf16.mxu0 %v3620
    %3713 = vmatpush1.bf16.msra.mxu0 %v3619
    %3714 = vmatprep.subr.bf16.mxu0 %v3623
    %3715 = vmatpush1.bf16.msra.mxu0 %v3622
    %3716 = vmatprep.subr.bf16.mxu0 %v3626
    %3717 = vmatpush1.bf16.msra.mxu0 %v3625
    %3718 = vmatprep.subr.bf16.mxu0 %v3629
    %3719 = vmatpush1.bf16.msra.mxu0 %v3628
    %3720 = vmatprep.subr.bf16.mxu0 %v3632
    %3721 = vmatpush1.bf16.msra.mxu0 %v3631
    %3722 = vmatprep.subr.bf16.mxu0 %v3635
    %3723 = vmatpush1.bf16.msra.mxu0 %v3634
    %3724 = vmatprep.subr.bf16.mxu0 %v3638
    %3725 = vmatpush1.bf16.msra.mxu0 %v3637
    %3726 = vmatprep.subr.bf16.mxu0 %v3641
    %3727 = vmatpush1.bf16.msra.mxu0 %v3640
    %3728 = vmatprep.subr.bf16.mxu0 %v3644
    %3729 = vmatpush1.bf16.msra.mxu0 %v3643
    %3730 = vmatprep.subr.bf16.mxu0 %v3647
    %3731 = vmatpush1.bf16.msra.mxu0 %v3646
    %3732 = vmatprep.subr.bf16.mxu0 %v3650
    %3733 = vmatpush1.bf16.msra.mxu0 %v3649
    %3734 = vmatprep.subr.bf16.mxu0 %v3653
    %3735 = vmatpush1.bf16.msra.mxu0 %v3652
    %3736 = vmatprep.subr.bf16.mxu0 %v3656
    %3737 = vmatpush1.bf16.msra.mxu0 %v3655
    %3738 = vmatprep.mubr.bf16.mxu0 %v3607
    %3739 = vmatmul.mubr.bf16.gmra.mrb[0].mxu0 %v3606
    %v3740 = vpop.f32.mrb[0].mxu0
    %v3741 = vadd.f32 0.0, %v3740
    %v3742 = vpop.f32.mrb[0].mxu0
    %v3743 = vadd.f32 0.0, %v3742
    %v3744 = vpop.f32.mrb[0].mxu0
    %v3745 = vpop.f32.mrb[0].mxu0
    %3746 = vdwg.mxu0
    %3747 = vmatprep.subr.bf16.mxu0 %v3659
    %3748 = vmatpush1.bf16.msra.mxu0 %v3658
    %3749 = vmatprep.subr.bf16.mxu0 %v3662
    %3750 = vmatpush1.bf16.msra.mxu0 %v3661
    %3751 = vmatprep.subr.bf16.mxu0 %v3665
    %3752 = vmatpush1.bf16.msra.mxu0 %v3664
    %3753 = vmatprep.subr.bf16.mxu0 %v3668
    %3754 = vmatpush1.bf16.msra.mxu0 %v3667
    %3755 = vmatprep.subr.bf16.mxu0 %v3671
    %3756 = vmatpush1.bf16.msra.mxu0 %v3670
    %3757 = vmatprep.subr.bf16.mxu0 %v3674
    %3758 = vmatpush1.bf16.msra.mxu0 %v3673
    %3759 = vmatprep.subr.bf16.mxu0 %v3677
    %3760 = vmatpush1.bf16.msra.mxu0 %v3676
    %3761 = vmatprep.subr.bf16.mxu0 %v3680
    %3762 = vmatpush1.bf16.msra.mxu0 %v3679
    %3763 = vmatprep.subr.bf16.mxu0 %v3683
    %3764 = vmatpush1.bf16.msra.mxu0 %v3682
    %3765 = vmatprep.subr.bf16.mxu0 %v3686
    %3766 = vmatpush1.bf16.msra.mxu0 %v3685
    %3767 = vmatprep.subr.bf16.mxu0 %v3689
    %3768 = vmatpush1.bf16.msra.mxu0 %v3688
    %3769 = vmatprep.subr.bf16.mxu0 %v3692
    %3770 = vmatpush1.bf16.msra.mxu0 %v3691
    %3771 = vmatprep.subr.bf16.mxu0 %v3695
    %3772 = vmatpush1.bf16.msra.mxu0 %v3694
    %3773 = vmatprep.subr.bf16.mxu0 %v3698
    %3774 = vmatpush1.bf16.msra.mxu0 %v3697
    %3775 = vmatprep.subr.bf16.mxu0 %v3701
    %3776 = vmatpush1.bf16.msra.mxu0 %v3700
    %3777 = vmatprep.subr.bf16.mxu0 %v3704
    %3778 = vmatpush1.bf16.msra.mxu0 %v3703
    %3779 = vmatprep.mubr.bf16.mxu0 %v3609
    %3780 = vmatmul.mubr.bf16.gmra.mrb[0].mxu0 %v3608
    %v3781 = vpop.f32.mrb[0].mxu0
    %v3782 = vadd.f32 %v3741, %v3781
    %v3783 = vpop.f32.mrb[0].mxu0
    %v3784 = vadd.f32 %v3743, %v3783
    %v3785 = vpop.f32.mrb[0].mxu0
    %v3786 = vpop.f32.mrb[0].mxu0
    %3787 = vdwg.mxu0
    %3788 = vmatprep.subr.bf16.mxu0 0
    %3789 = vmatpush1.bf16.msra.mxu0 %v3612
    %3790 = vmatprep.subr.bf16.mxu0 0
    %3791 = vmatpush1.bf16.msra.mxu0 %v3615
    %3792 = vmatprep.subr.bf16.mxu0 0
    %3793 = vmatpush1.bf16.msra.mxu0 %v3618
    %3794 = vmatprep.subr.bf16.mxu0 0
    %3795 = vmatpush1.bf16.msra.mxu0 %v3621
    %3796 = vmatprep.subr.bf16.mxu0 0
    %3797 = vmatpush1.bf16.msra.mxu0 %v3624
    %3798 = vmatprep.subr.bf16.mxu0 0
    %3799 = vmatpush1.bf16.msra.mxu0 %v3627
    %3800 = vmatprep.subr.bf16.mxu0 0
    %3801 = vmatpush1.bf16.msra.mxu0 %v3630
    %3802 = vmatprep.subr.bf16.mxu0 0
    %3803 = vmatpush1.bf16.msra.mxu0 %v3633
    %3804 = vmatprep.subr.bf16.mxu0 0
    %3805 = vmatpush1.bf16.msra.mxu0 %v3636
    %3806 = vmatprep.subr.bf16.mxu0 0
    %3807 = vmatpush1.bf16.msra.mxu0 %v3639
    %3808 = vmatprep.subr.bf16.mxu0 0
    %3809 = vmatpush1.bf16.msra.mxu0 %v3642
    %3810 = vmatprep.subr.bf16.mxu0 0
    %3811 = vmatpush1.bf16.msra.mxu0 %v3645
    %3812 = vmatprep.subr.bf16.mxu0 0
    %3813 = vmatpush1.bf16.msra.mxu0 %v3648
    %3814 = vmatprep.subr.bf16.mxu0 0
    %3815 = vmatpush1.bf16.msra.mxu0 %v3651
    %3816 = vmatprep.subr.bf16.mxu0 0
    %3817 = vmatpush1.bf16.msra.mxu0 %v3654
    %3818 = vmatprep.subr.bf16.mxu0 0
    %3819 = vmatpush1.bf16.msra.mxu0 %v3657
    %3820 = vmatprep.mubr.bf16.mxu0 %v3607
    %3821 = vmatmul.mubr.bf16.gmra.mrb[0].mxu0 %v3606
    %v3822 = vpop.f32.mrb[0].mxu0
    %v3823 = vadd.f32 0.0, %v3822
    %v3824 = vpop.f32.mrb[0].mxu0
    %v3825 = vpop.f32.mrb[0].mxu0
    %v3826 = vpop.f32.mrb[0].mxu0
    %3827 = vdwg.mxu0
    %3828 = vmatprep.subr.bf16.mxu0 0
    %3829 = vmatpush1.bf16.msra.mxu0 %v3660
    %3830 = vmatprep.subr.bf16.mxu0 0
    %3831 = vmatpush1.bf16.msra.mxu0 %v3663
    %3832 = vmatprep.subr.bf16.mxu0 0
    %3833 = vmatpush1.bf16.msra.mxu0 %v3666
    %3834 = vmatprep.subr.bf16.mxu0 0
    %3835 = vmatpush1.bf16.msra.mxu0 %v3669
    %3836 = vmatprep.subr.bf16.mxu0 0
    %3837 = vmatpush1.bf16.msra.mxu0 %v3672
    %3838 = vmatprep.subr.bf16.mxu0 0
    %3839 = vmatpush1.bf16.msra.mxu0 %v3675
    %3840 = vmatprep.subr.bf16.mxu0 0
    %3841 = vmatpush1.bf16.msra.mxu0 %v3678
    %3842 = vmatprep.subr.bf16.mxu0 0
    %3843 = vmatpush1.bf16.msra.mxu0 %v3681
    %3844 = vmatprep.subr.bf16.mxu0 0
    %3845 = vmatpush1.bf16.msra.mxu0 %v3684
    %3846 = vmatprep.subr.bf16.mxu0 0
    %3847 = vmatpush1.bf16.msra.mxu0 %v3687
    %3848 = vmatprep.subr.bf16.mxu0 0
    %3849 = vmatpush1.bf16.msra.mxu0 %v3690
    %3850 = vmatprep.subr.bf16.mxu0 0
    %3851 = vmatpush1.bf16.msra.mxu0 %v3693
    %3852 = vmatprep.subr.bf16.mxu0 0
    %3853 = vmatpush1.bf16.msra.mxu0 %v3696
    %3854 = vmatprep.subr.bf16.mxu0 0
    %3855 = vmatpush1.bf16.msra.mxu0 %v3699
    %3856 = vmatprep.subr.bf16.mxu0 0
    %3857 = vmatpush1.bf16.msra.mxu0 %v3702
    %3858 = vmatprep.subr.bf16.mxu0 0
    %3859 = vmatpush1.bf16.msra.mxu0 %v3705
    %3860 = vmatprep.mubr.bf16.mxu0 %v3609
    %3861 = vmatmul.mubr.bf16.gmra.mrb[0].mxu0 %v3608
    %v3862 = vpop.f32.mrb[0].mxu0
    %v3863 = vadd.f32 %v3823, %v3862
    %v3864 = vpop.f32.mrb[0].mxu0
    %v3865 = vpop.f32.mrb[0].mxu0
    %v3866 = vpop.f32.mrb[0].mxu0
    %3867 = vdwg.mxu0
    %v3868 = vrot.slane %v3782, 4
    %v3869 = vadd.f32 %v3782, %v3868
    %v3870 = vrot.slane %v3869, 2
    %v3871 = vadd.f32 %v3869, %v3870
    %v3872 = vrot.slane %v3871, 1
    %v3873 = vadd.f32 %v3871, %v3872
    %v3874 = vrot.slane %v3784, 4
    %v3875 = vadd.f32 %v3784, %v3874
    %v3876 = vrot.slane %v3875, 2
    %v3877 = vadd.f32 %v3875, %v3876
    %v3878 = vrot.slane %v3877, 1
    %v3879 = vadd.f32 %v3877, %v3878
    %v3880 = vrot.slane %v3863, 4
    %v3881 = vadd.f32 %v3863, %v3880
    %v3882 = vrot.slane %v3881, 2
    %v3883 = vadd.f32 %v3881, %v3882
    %v3884 = vrot.slane %v3883, 1
    %v3885 = vadd.f32 %v3883, %v3884
    %v3886 = vmul.f32 %v3873, %v2745
    %v3887 = vmul.f32 %v3879, %v2745
    %v3888 = vmul.f32 %v3885, %v2745
    %v3889 = vmul.f32 %v3782, %v3782
    %v3890 = vmul.f32 %v3784, %v3784
    %v3891 = vmul.f32 %v3863, %v3863
    %v3892 = vrot.slane %v3889, 4
    %v3893 = vadd.f32 %v3889, %v3892
    %v3894 = vrot.slane %v3893, 2
    %v3895 = vadd.f32 %v3893, %v3894
    %v3896 = vrot.slane %v3895, 1
    %v3897 = vadd.f32 %v3895, %v3896
    %v3898 = vrot.slane %v3890, 4
    %v3899 = vadd.f32 %v3890, %v3898
    %v3900 = vrot.slane %v3899, 2
    %v3901 = vadd.f32 %v3899, %v3900
    %v3902 = vrot.slane %v3901, 1
    %v3903 = vadd.f32 %v3901, %v3902
    %v3904 = vrot.slane %v3891, 4
    %v3905 = vadd.f32 %v3891, %v3904
    %v3906 = vrot.slane %v3905, 2
    %v3907 = vadd.f32 %v3905, %v3906
    %v3908 = vrot.slane %v3907, 1
    %v3909 = vadd.f32 %v3907, %v3908
    %v3910 = vmul.f32 %v3897, %v2745
    %v3911 = vmul.f32 %v3903, %v2745
    %v3912 = vmul.f32 %v3909, %v2745
    %v3913 = vmul.f32 %v3886, %v3886
    %v3914 = vmul.f32 %v3887, %v3887
    %v3915 = vmul.f32 %v3888, %v3888
    %v3916 = vsub.f32 %v3910, %v3913
    %v3917 = vsub.f32 %v3911, %v3914
    %v3918 = vsub.f32 %v3912, %v3915
    %v3919 = vmax.f32 %v3916, 0.0
    %v3920 = vmax.f32 %v3917, 0.0
    %v3921 = vmax.f32 %v3918, 0.0
    %v3922 = vsub.f32 %v3782, %v3886
    %v3923 = vsub.f32 %v3784, %v3887
    %v3924 = vsub.f32 %v3863, %v3888
    %v3925 = vld [vmem:[%s12] sm:$0x7]
    %v3927 = vlaneseq
    %v3928 = vshrl.u32 %v3927, 7
    %v3929 = vsub.s32 0, %v3928
    %v3930 = vrot.slane %v3925, %v3929
    %v3931 = vlaneseq
    %v3932 = vshrl.u32 %v3931, 7
    %v3933 = vsub.s32 1, %v3932
    %v3934 = vrot.slane %v3925, %v3933
    %v3935 = vlaneseq
    %v3936 = vshrl.u32 %v3935, 7
    %v3937 = vsub.s32 2, %v3936
    %v3938 = vrot.slane %v3925, %v3937
    %v3942 = vadd.f32 %v3919, %v3930
    %v3943 = vadd.f32 %v3920, %v3934
    %v3944 = vadd.f32 %v3921, %v3938
    %v3945 = vrsqrt.pop %v3942
    %v3946 = vrsqrt.pop %v3943
    %v3947 = vrsqrt.pop %v3944
    %v3948 = vlaneseq
    %v3949 = vshrl.u32 %v3948, 7
    %v3950 = vsub.s32 0, %v3949
    %v3951 = vrot.slane %v3945, %v3950
    %v3952 = vlaneseq
    %v3953 = vshrl.u32 %v3952, 7
    %v3954 = vsub.s32 0, %v3953
    %v3955 = vrot.slane %v3946, %v3954
    %v3956 = vlaneseq
    %v3957 = vshrl.u32 %v3956, 7
    %v3958 = vsub.s32 0, %v3957
    %v3959 = vrot.slane %v3947, %v3958
    %v3960 = vmul.f32 %v3922, %v3951
    %v3961 = vmul.f32 %v3923, %v3955
    %v3962 = vmul.f32 %v3924, %v3959
    %v3963 = vld [vmem:[%s10] sm:$0x7]
    %v3965 = vlaneseq
    %v3966 = vshrl.u32 %v3965, 7
    %v3967 = vsub.s32 0, %v3966
    %v3968 = vrot.slane %v3963, %v3967
    %v3969 = vlaneseq
    %v3970 = vshrl.u32 %v3969, 7
    %v3971 = vsub.s32 1, %v3970
    %v3972 = vrot.slane %v3963, %v3971
    %v3973 = vlaneseq
    %v3974 = vshrl.u32 %v3973, 7
    %v3975 = vsub.s32 2, %v3974
    %v3976 = vrot.slane %v3963, %v3975
    %v3980 = vmul.f32 %v3960, %v3968
    %v3981 = vmul.f32 %v3961, %v3972
    %v3982 = vmul.f32 %v3962, %v3976
    %v3983 = vld [vmem:[#allocation16] sm:$0x7]
    %v3985 = vlaneseq
    %v3986 = vshrl.u32 %v3985, 7
    %v3987 = vsub.s32 0, %v3986
    %v3988 = vrot.slane %v3983, %v3987
    %v3989 = vlaneseq
    %v3990 = vshrl.u32 %v3989, 7
    %v3991 = vsub.s32 1, %v3990
    %v3992 = vrot.slane %v3983, %v3991
    %v3993 = vlaneseq
    %v3994 = vshrl.u32 %v3993, 7
    %v3995 = vsub.s32 2, %v3994
    %v3996 = vrot.slane %v3983, %v3995
    %v4000 = vadd.f32 %v3980, %v3988
    %v4001 = vadd.f32 %v3981, %v3992
    %v4002 = vadd.f32 %v3982, %v3996
    %v4003 = vtanh.pop %v4000
    %v4004 = vtanh.pop %v4001
    %v4005 = vtanh.pop %v4002
    %4006 = vst [vmem:[#allocation17] sm:$0xff] %v4003
    %4007 = vst [vmem:[#allocation17 + $0x8] sm:$0xff] %v4004
    %4008 = vst [vmem:[#allocation17 + $0x10] sm:$0xff] %v4005
    // Predicated region
    $region86: #{f2s_forward.1} parent=1 // pred_check
      _
    $region87: #{f2s_forward.1} parent=1 // pred_check_branch
      %4010 = sbr.rel (0) target = $region89
    $region88: #{f2s_forward.1} parent=1 // pred_region
      %s4012 = ssub.s32 384, 384
      %4013 = vsyncadd [#allocation7], %s4012
      %s4015 = sshll.u32 [#allocation17], 4
      %s4016 = int_to_ptr.vmem [resolvable:$true] %s4015
      %4018 = dma.vmem_to_hbm [thread:$0]  %s4016, 384, %s13, [#allocation7]
    $region89: #{f2s_forward.1} parent=1 // pred_fallthru
      _
    // Predicated region
    $region90: #{f2s_forward.1} parent=1 // pred_check
      _
    $region91: #{f2s_forward.1} parent=1 // pred_check_branch
      %4020 = sbr.rel (0) target = $region93
    $region92: #{f2s_forward.1} parent=1 // pred_region
      %4021 = dma.done [#allocation7], 384
    $region93: #{f2s_forward.1} parent=1 // pred_fallthru
      _
    %4022 = vsyncpa [#allocation6], 1
    %4023 = vsyncpa [#allocation9], 1
    %4024 = vsyncpa [#allocation12], 1
    %4025 = vsyncpa [#allocation15], 1
    %4026 = vsyncpa [#allocation7], 1

</llo_original>
